<compile_context>
chip_gen: v7x
topology: tpu7x:2x2x1
jax: 0.10.0
libtpu: 0.0.40
codegen_flags: <defaults>
</compile_context>

<pallas_src>
import functools
import math

import jax
import jax.numpy as jnp
from jax.experimental import pallas as pl
from jax.experimental.pallas import tpu as pltpu


# -----------------------------------------------------------------------------
# helpers
# -----------------------------------------------------------------------------
def _round_up(x, m):
    return ((x + m - 1) // m) * m


def _pick_tm(M):
    if M >= 1024:
        return 512
    if M >= 512:
        return 256
    return _round_up(M, 8)


def _pick_div(n, cands):
    for c in cands:
        if n % c == 0:
            return c
    return 128  # n is a multiple of 128 by construction


# -----------------------------------------------------------------------------
# Pallas kernel 1: fused (optional LayerNorm) + matmul + bias + act + residual
# -----------------------------------------------------------------------------
def _make_mm_kernel(*, act, has_ln, has_res, k_valid, eps=1e-5):
    def kernel(*refs):
        x_ref, w_ref, b_ref = refs[0], refs[1], refs[2]
        idx = 3
        if has_ln:
            g_ref, beta_ref = refs[idx], refs[idx + 1]
            idx += 2
        if has_res:
            r_ref = refs[idx]
            idx += 1
        o_ref, acc_ref = refs[idx], refs[idx + 1]

        @pl.when(pl.program_id(2) == 0)
        def _init():
            acc_ref[...] = jnp.zeros_like(acc_ref)

        x = x_ref[...]
        if has_ln:
            # LayerNorm over the (single) K block, masked to the un-padded width.
            xf = x.astype(jnp.float32)
            col = jax.lax.broadcasted_iota(jnp.int32, xf.shape, 1)
            valid = col < k_valid
            inv_n = 1.0 / float(k_valid)
            mu = jnp.sum(jnp.where(valid, xf, 0.0), axis=-1, keepdims=True) * inv_n
            diff = jnp.where(valid, xf - mu, 0.0)
            var = jnp.sum(diff * diff, axis=-1, keepdims=True) * inv_n
            xn = diff * jax.lax.rsqrt(var + eps)
            x = (xn * g_ref[...] + beta_ref[...]).astype(jnp.bfloat16)

        acc_ref[...] += jnp.dot(x, w_ref[...], preferred_element_type=jnp.float32)

        @pl.when(pl.program_id(2) == pl.num_programs(2) - 1)
        def _fin():
            y = acc_ref[...] + b_ref[...]
            if act == "silu":
                y = y * jax.nn.sigmoid(y)
            elif act == "relu":
                y = jnp.maximum(y, 0.0)
            if has_res:
                y = y + r_ref[...].astype(jnp.float32)
            o_ref[...] = y.astype(o_ref.dtype)

    return kernel


def fused_matmul(x, w, b, *, act="none", ln=None, ln_valid=None,
                 residual=None, out_dtype=jnp.bfloat16):
    """y = act(LN_opt(x) @ w + b) + residual_opt.

    x: (M, K) bf16 (K pre-padded to 128);  w: (K, N) bf16;  b: (1, N) f32;
    ln = (gamma, beta) each (1, K) f32, normalization over the first ln_valid
    columns;  residual: (M, N) bf16.
    """
    M, K = x.shape
    Kw, N = w.shape
    assert K == Kw and K % 128 == 0 and N % 128 == 0

    tm = _pick_tm(M)
    Mp = _round_up(M, tm)
    if ln is not None:
        tk = K                                   # LN prologue needs a single K step
    else:
        tk = K if K <= 1024 else _pick_div(K, (1024, 768, 512, 384, 256, 128))
    tn = N if N <= 512 else _pick_div(N, (512, 384, 256, 128))

    x = x.astype(jnp.bfloat16)
    if Mp > M:
        x = jnp.pad(x, ((0, Mp - M), (0, 0)))

    inputs = [x, w.astype(jnp.bfloat16), b.astype(jnp.float32)]
    in_specs = [
        pl.BlockSpec((tm, tk), lambda i, j, k: (i, k)),
        pl.BlockSpec((tk, tn), lambda i, j, k: (k, j)),
        pl.BlockSpec((1, tn), lambda i, j, k: (0, j)),
    ]
    if ln is not None:
        gamma, beta = ln
        inputs += [gamma.astype(jnp.float32), beta.astype(jnp.float32)]
        in_specs += [pl.BlockSpec((1, tk), lambda i, j, k: (0, k)),
                     pl.BlockSpec((1, tk), lambda i, j, k: (0, k))]
    if residual is not None:
        r = residual.astype(jnp.bfloat16)
        if Mp > M:
            r = jnp.pad(r, ((0, Mp - M), (0, 0)))
        assert r.shape == (Mp, N)
        inputs.append(r)
        in_specs.append(pl.BlockSpec((tm, tn), lambda i, j, k: (i, j)))

    kernel = _make_mm_kernel(act=act, has_ln=ln is not None,
                             has_res=residual is not None,
                             k_valid=ln_valid if ln_valid is not None else K)

    grid = (Mp // tm, N // tn, K // tk)
    out = pl.pallas_call(
        kernel,
        out_shape=jax.ShapeDtypeStruct((Mp, N), out_dtype),
        grid_spec=pltpu.PrefetchScalarGridSpec(
            num_scalar_prefetch=0,
            grid=grid,
            in_specs=in_specs,
            out_specs=pl.BlockSpec((tm, tn), lambda i, j, k: (i, j)),
            scratch_shapes=[pltpu.VMEM((tm, tn), jnp.float32)],
        ),
        compiler_params=pltpu.CompilerParams(
            dimension_semantics=("parallel", "parallel", "arbitrary")),
    )(*inputs)
    return out[:M] if Mp > M else out


# -----------------------------------------------------------------------------
# Pallas kernel 2: scaled-dot-product attention core (single grid step, batched)
# -----------------------------------------------------------------------------
def _attn_kernel(q_ref, k_ref, v_ref, o_ref, *, scale, n_valid):
    q = q_ref[...]                 # (B, n_p, d_p) f32
    k = k_ref[...]
    v = v_ref[...]
    s = jnp.einsum("bqd,bkd->bqk", q, k,
                   preferred_element_type=jnp.float32) * scale
    col = jax.lax.broadcasted_iota(jnp.int32, s.shape, 2)
    s = jnp.where(col < n_valid, s, -1e30)
    m = jnp.max(s, axis=-1, keepdims=True)
    e = jnp.exp(s - m)
    denom = jnp.sum(e, axis=-1, keepdims=True)
    p = e * pl.reciprocal(denom, approx=True)
    o_ref[...] = jnp.einsum("bqk,bkd->bqd", p, v,
                            preferred_element_type=jnp.float32).astype(o_ref.dtype)


def pallas_attention(q, k, v, scale):
    """q/k/v: (B, n, dh) f32 -> (B, n, dh) f32.  One grid step for all B."""
    B, n, dh = q.shape
    n_p = _round_up(max(n, 8), 8)
    d_p = _round_up(dh, 128)
    if (n_p, d_p) != (n, dh):
        pad = lambda t: jnp.pad(t, ((0, 0), (0, n_p - n), (0, d_p - dh)))
        q, k, v = pad(q), pad(k), pad(v)
    q = q.astype(jnp.float32); k = k.astype(jnp.float32); v = v.astype(jnp.float32)
    out = pl.pallas_call(
        functools.partial(_attn_kernel, scale=scale, n_valid=n),
        out_shape=jax.ShapeDtypeStruct((B, n_p, d_p), jnp.float32),
        grid=(1,),
        in_specs=[pl.BlockSpec((B, n_p, d_p), lambda i: (0, 0, 0))
                  for _ in range(3)],
        out_specs=pl.BlockSpec((B, n_p, d_p), lambda i: (0, 0, 0)),
    )(q, k, v)
    return out[:, :n, :dh]


# -----------------------------------------------------------------------------
# parameter initialization (deterministic, synthetic, pre-padded to 128)
# -----------------------------------------------------------------------------
def init_transformer_params(key, dim, depth, heads, dim_head, mlp_dim):
    inner = heads * dim_head
    dim_p = _round_up(dim, 128)
    inner_p = _round_up(inner, 128)
    mlp_p = _round_up(mlp_dim, 128)
    project_out = not (heads == 1 and dim_head == dim)

    def linear_w(k, din, dout, din_p, dout_p):
        w = jax.random.normal(k, (din, dout), jnp.float32) / math.sqrt(din)
        return jnp.pad(w, ((0, din_p - din), (0, dout_p - dout))).astype(jnp.bfloat16)

    def linear_b(k, dout, dout_p):
        b = 0.01 * jax.random.normal(k, (dout,), jnp.float32)
        return jnp.pad(b, (0, dout_p - dout)).reshape(1, dout_p)

    def ln_params(k, d, d_p):
        k1, k2 = jax.random.split(k)
        g = 1.0 + 0.05 * jax.random.normal(k1, (d,), jnp.float32)
        bt = 0.02 * jax.random.normal(k2, (d,), jnp.float32)
        return (jnp.pad(g, (0, d_p - d)).reshape(1, d_p),
                jnp.pad(bt, (0, d_p - d)).reshape(1, d_p))

    layers = []
    for _ in range(depth):
        key, *ks = jax.random.split(key, 12)
        qkv_w = jnp.concatenate(
            [linear_w(ks[i], dim, inner, dim_p, inner_p) for i in range(3)], axis=1)
        qkv_b = jnp.zeros((1, 3 * inner_p), jnp.float32)     # to_qkv has bias=False
        ln1_g, ln1_b = ln_params(ks[3], dim, dim_p)
        ln2_g, ln2_b = ln_params(ks[4], dim, dim_p)
        if project_out:
            out_w = linear_w(ks[5], inner, dim, inner_p, dim_p)
            out_b = linear_b(ks[6], dim, dim_p)
        else:
            out_w, out_b = None, None
        ff1_w = linear_w(ks[7], dim, mlp_dim, dim_p, mlp_p)
        ff1_b = linear_b(ks[8], mlp_dim, mlp_p)
        ff2_w = linear_w(ks[9], mlp_dim, dim, mlp_p, dim_p)
        ff2_b = linear_b(ks[10], dim, dim_p)
        layers.append(dict(qkv_w=qkv_w, qkv_b=qkv_b,
                           ln1_g=ln1_g, ln1_b=ln1_b, ln2_g=ln2_g, ln2_b=ln2_b,
                           out_w=out_w, out_b=out_b,
                           ff1_w=ff1_w, ff1_b=ff1_b, ff2_w=ff2_w, ff2_b=ff2_b))
    return dict(layers=layers, dim=dim, dim_p=dim_p, inner=inner,
                inner_p=inner_p, mlp_p=mlp_p, heads=heads, dim_head=dim_head)


# -----------------------------------------------------------------------------
# Transformer forward  (x: (b, p, n, dim) f32)
# -----------------------------------------------------------------------------
def transformer_forward(x, params):
    b, p, n, dim = x.shape
    heads, dim_head = params["heads"], params["dim_head"]
    inner, inner_p = params["inner"], params["inner_p"]
    dim_p = params["dim_p"]
    assert dim == params["dim"]
    M = b * p * n
    scale = dim_head ** (-0.5)

    xs = x.reshape(M, dim).astype(jnp.bfloat16)
    if dim_p > dim:
        xs = jnp.pad(xs, ((0, 0), (0, dim_p - dim)))        # padded cols stay zero

    for lp in params["layers"]:
        # --- attention branch:  LN fused into to_qkv prologue --------------
        qkv = fused_matmul(xs, lp["qkv_w"], lp["qkv_b"],
                           ln=(lp["ln1_g"], lp["ln1_b"]), ln_valid=dim)

        def split_heads(i):
            t = qkv[:, i * inner_p: i * inner_p + inner]     # (M, inner)
            t = t.reshape(b, p, n, heads, dim_head).transpose(0, 1, 3, 2, 4)
            return t.reshape(b * p * heads, n, dim_head).astype(jnp.float32)

        q, k, v = split_heads(0), split_heads(1), split_heads(2)
        att = pallas_attention(q, k, v, scale)               # (B, n, dh) f32
        att = att.reshape(b, p, heads, n, dim_head).transpose(0, 1, 3, 2, 4)
        att = att.reshape(M, inner)

        if lp["out_w"] is not None:
            att_in = att
            if inner_p > inner:
                att_in = jnp.pad(att_in, ((0, 0), (0, inner_p - inner)))
            att_in = att_in.astype(jnp.bfloat16)
            # residual add fused into the to_out epilogue
            xs = fused_matmul(att_in, lp["out_w"], lp["out_b"], residual=xs)
        else:                                                 # to_out = Identity
            att_p = att if dim_p == inner else jnp.pad(att, ((0, 0), (0, dim_p - inner)))
            xs = (att_p + xs.astype(jnp.float32)).astype(jnp.bfloat16)

        # --- feed-forward branch: LN fused into ff1, residual into ff2 -----
        h = fused_matmul(xs, lp["ff1_w"], lp["ff1_b"], act="silu",
                         ln=(lp["ln2_g"], lp["ln2_b"]), ln_valid=dim)
        xs = fused_matmul(h, lp["ff2_w"], lp["ff2_b"], residual=xs)

    out = xs[:, :dim].astype(jnp.float32).reshape(b, p, n, dim)
    return out


# -----------------------------------------------------------------------------
if __name__ == "__main__":
    DIM, DEPTH, HEADS, DIM_HEAD, MLP_DIM = 32, 2, 2, 16, 64
    B, P, N = 2, 4, 8

    key = jax.random.PRNGKey(0)
    params = init_transformer_params(jax.random.fold_in(key, 1),
                                     DIM, DEPTH, HEADS, DIM_HEAD, MLP_DIM)
    x = jax.random.normal(key, (B, P, N, DIM), jnp.float32)

    fwd = jax.jit(lambda inp: transformer_forward(inp, params))
    out = jax.block_until_ready(fwd(x))

    assert out.shape == (B, P, N, DIM), out.shape
    assert bool(jnp.isfinite(out).all())
    print("KERNEL_OK")
</pallas_src>

<mosaic_0001>
module attributes {stable_mosaic.version = 11 : i64} {
  func.func @kernel(%arg0: i32, %arg1: i32, %arg2: i32, %arg3: memref<64x128xbf16, #tpu.memory_space<vmem>>, %arg4: memref<128x384xbf16, #tpu.memory_space<vmem>>, %arg5: memref<1x384xf32, #tpu.memory_space<vmem>>, %arg6: memref<1x128xf32, #tpu.memory_space<vmem>>, %arg7: memref<1x128xf32, #tpu.memory_space<vmem>>, %arg8: memref<64x384xbf16, #tpu.memory_space<vmem>>, %arg9: memref<64x384xf32, #tpu.memory_space<vmem>>) attributes {dimension_semantics = [#tpu.dimension_semantics<parallel>, #tpu.dimension_semantics<parallel>, #tpu.dimension_semantics<arbitrary>], iteration_bounds = array<i64: 1, 1, 1>, scalar_prefetch = 0 : i64, scratch_operands = 1 : i64, tpu.core_type = #tpu.core_type<tc>, window_params = [{transform_indices = @transform_0, window_bounds = array<i64: 64, 128>}, {transform_indices = @transform_1, window_bounds = array<i64: 128, 384>}, {transform_indices = @transform_2, window_bounds = array<i64: 1, 384>}, {transform_indices = @transform_3, window_bounds = array<i64: 1, 128>}, {transform_indices = @transform_4, window_bounds = array<i64: 1, 128>}, {transform_indices = @transform_5, window_bounds = array<i64: 64, 384>}]} {
    %c0_i32 = arith.constant 0 : i32
    %0 = arith.cmpi eq, %arg2, %c0_i32 : i32
    %1 = arith.extui %0 : i1 to i32
    %c0_i32_0 = arith.constant 0 : i32
    %2 = arith.cmpi ne, %1, %c0_i32_0 : i32
    scf.if %2 {
      %cst_21 = arith.constant 0.000000e+00 : f32
      %43 = vector.broadcast %cst_21 : f32 to vector<64x384xf32>
      %c0_22 = arith.constant 0 : index
      %c0_23 = arith.constant 0 : index
      %44 = vector.load %arg9[%c0_22, %c0_23] : memref<64x384xf32, #tpu.memory_space<vmem>>, vector<64x384xf32>
      tpu.vector_store %arg9[%c0_22, %c0_23], %43 {strides = array<i32>} : memref<64x384xf32, #tpu.memory_space<vmem>>, vector<64x384xf32>,
    } else {
    }
    %c0 = arith.constant 0 : index
    %c0_1 = arith.constant 0 : index
    %3 = vector.load %arg3[%c0, %c0_1] : memref<64x128xbf16, #tpu.memory_space<vmem>>, vector<64x128xbf16>
    %4 = arith.extf %3 : vector<64x128xbf16> to vector<64x128xf32>
    %5 = tpu.iota {dimensions = array<i32: 1>} : vector<64x128xi32>
    %c32_i32 = arith.constant 32 : i32
    %6 = vector.broadcast %c32_i32 : i32 to vector<64x128xi32>
    %7 = arith.cmpi slt, %5, %6 : vector<64x128xi32>
    %cst = arith.constant 0.000000e+00 : f32
    %8 = vector.broadcast %cst : f32 to vector<64x128xf32>
    %9 = arith.select %7, %4, %8 : vector<64x128xi1>, vector<64x128xf32>
    %cst_2 = arith.constant dense<0.000000e+00> : vector<64xf32>
    %10 = vector.multi_reduction <add>, %9, %cst_2 [1] : vector<64x128xf32> to vector<64xf32>
    %11 = vector.shape_cast %10 : vector<64xf32> to vector<64x1xf32>
    %cst_3 = arith.constant 3.125000e-02 : f32
    %12 = vector.broadcast %cst_3 : f32 to vector<64x1xf32>
    %13 = arith.mulf %11, %12 : vector<64x1xf32>
    %14 = vector.broadcast %13 : vector<64x1xf32> to vector<64x128xf32>
    %15 = arith.subf %4, %14 : vector<64x128xf32>
    %cst_4 = arith.constant 0.000000e+00 : f32
    %16 = vector.broadcast %cst_4 : f32 to vector<64x128xf32>
    %17 = arith.select %7, %15, %16 : vector<64x128xi1>, vector<64x128xf32>
    %18 = arith.mulf %17, %17 : vector<64x128xf32>
    %cst_5 = arith.constant dense<0.000000e+00> : vector<64xf32>
    %19 = vector.multi_reduction <add>, %18, %cst_5 [1] : vector<64x128xf32> to vector<64xf32>
    %20 = vector.shape_cast %19 : vector<64xf32> to vector<64x1xf32>
    %cst_6 = arith.constant 3.125000e-02 : f32
    %21 = vector.broadcast %cst_6 : f32 to vector<64x1xf32>
    %22 = arith.mulf %20, %21 : vector<64x1xf32>
    %cst_7 = arith.constant 9.99999974E-6 : f32
    %23 = vector.broadcast %cst_7 : f32 to vector<64x1xf32>
    %24 = arith.addf %22, %23 : vector<64x1xf32>
    %25 = math.rsqrt %24 : vector<64x1xf32>
    %26 = vector.broadcast %25 : vector<64x1xf32> to vector<64x128xf32>
    %27 = arith.mulf %17, %26 : vector<64x128xf32>
    %c0_8 = arith.constant 0 : index
    %c0_9 = arith.constant 0 : index
    %28 = vector.load %arg6[%c0_8, %c0_9] : memref<1x128xf32, #tpu.memory_space<vmem>>, vector<1x128xf32>
    %29 = vector.broadcast %28 : vector<1x128xf32> to vector<64x128xf32>
    %30 = arith.mulf %27, %29 : vector<64x128xf32>
    %c0_10 = arith.constant 0 : index
    %c0_11 = arith.constant 0 : index
    %31 = vector.load %arg7[%c0_10, %c0_11] : memref<1x128xf32, #tpu.memory_space<vmem>>, vector<1x128xf32>
    %32 = vector.broadcast %31 : vector<1x128xf32> to vector<64x128xf32>
    %33 = arith.addf %30, %32 : vector<64x128xf32>
    %34 = arith.truncf %33 : vector<64x128xf32> to vector<64x128xbf16>
    %c0_12 = arith.constant 0 : index
    %c0_13 = arith.constant 0 : index
    %35 = vector.load %arg9[%c0_12, %c0_13] : memref<64x384xf32, #tpu.memory_space<vmem>>, vector<64x384xf32>
    %c0_14 = arith.constant 0 : index
    %c0_15 = arith.constant 0 : index
    %36 = vector.load %arg4[%c0_14, %c0_15] : memref<128x384xbf16, #tpu.memory_space<vmem>>, vector<128x384xbf16>
    %cst_16 = arith.constant dense<0.000000e+00> : vector<64x384xf32>
    %37 = tpu.matmul %34, %36, %cst_16 {dimension_numbers = #tpu.dot_dimension_numbers<[1], [0], [0], [1], [0, 0, 1, 1], [], []>} : vector<64x128xbf16>, vector<128x384xbf16>, vector<64x384xf32> -> vector<64x384xf32>
    %38 = arith.addf %35, %37 : vector<64x384xf32>
    %c0_17 = arith.constant 0 : index
    %c0_18 = arith.constant 0 : index
    %39 = vector.load %arg9[%c0_17, %c0_18] : memref<64x384xf32, #tpu.memory_space<vmem>>, vector<64x384xf32>
    tpu.vector_store %arg9[%c0_17, %c0_18], %38 {strides = array<i32>} : memref<64x384xf32, #tpu.memory_space<vmem>>, vector<64x384xf32>,
    %c0_i32_19 = arith.constant 0 : i32
    %40 = arith.cmpi eq, %arg2, %c0_i32_19 : i32
    %41 = arith.extui %40 : i1 to i32
    %c0_i32_20 = arith.constant 0 : i32
    %42 = arith.cmpi ne, %41, %c0_i32_20 : i32
    scf.if %42 {
      %c0_21 = arith.constant 0 : index
      %c0_22 = arith.constant 0 : index
      %43 = vector.load %arg9[%c0_21, %c0_22] : memref<64x384xf32, #tpu.memory_space<vmem>>, vector<64x384xf32>
      %c0_23 = arith.constant 0 : index
      %c0_24 = arith.constant 0 : index
      %44 = vector.load %arg5[%c0_23, %c0_24] : memref<1x384xf32, #tpu.memory_space<vmem>>, vector<1x384xf32>
      %45 = vector.broadcast %44 : vector<1x384xf32> to vector<64x384xf32>
      %46 = arith.addf %43, %45 : vector<64x384xf32>
      %47 = arith.truncf %46 : vector<64x384xf32> to vector<64x384xbf16>
      %c0_25 = arith.constant 0 : index
      %c0_26 = arith.constant 0 : index
      %48 = vector.load %arg8[%c0_25, %c0_26] : memref<64x384xbf16, #tpu.memory_space<vmem>>, vector<64x384xbf16>
      tpu.vector_store %arg8[%c0_25, %c0_26], %47 {strides = array<i32>} : memref<64x384xbf16, #tpu.memory_space<vmem>>, vector<64x384xbf16>,
    } else {
    }
    return
  }
  func.func @transform_0(%arg0: i32, %arg1: i32, %arg2: i32) -> (i32, i32) {
    %c0_i32 = arith.constant 0 : i32
    return %arg0, %arg2 : i32, i32
  }
  func.func @transform_1(%arg0: i32, %arg1: i32, %arg2: i32) -> (i32, i32) {
    %c0_i32 = arith.constant 0 : i32
    return %arg2, %arg1 : i32, i32
  }
  func.func @transform_2(%arg0: i32, %arg1: i32, %arg2: i32) -> (i32, i32) {
    %c0_i32 = arith.constant 0 : i32
    %c0_i32_0 = arith.constant 0 : i32
    return %c0_i32, %arg1 : i32, i32
  }
  func.func @transform_3(%arg0: i32, %arg1: i32, %arg2: i32) -> (i32, i32) {
    %c0_i32 = arith.constant 0 : i32
    %c0_i32_0 = arith.constant 0 : i32
    return %c0_i32, %arg2 : i32, i32
  }
  func.func @transform_4(%arg0: i32, %arg1: i32, %arg2: i32) -> (i32, i32) {
    %c0_i32 = arith.constant 0 : i32
    %c0_i32_0 = arith.constant 0 : i32
    return %c0_i32, %arg2 : i32, i32
  }
  func.func @transform_5(%arg0: i32, %arg1: i32, %arg2: i32) -> (i32, i32) {
    %c0_i32 = arith.constant 0 : i32
    return %arg0, %arg1 : i32, i32
  }
}

module attributes {stable_mosaic.version = 11 : i64} {
  func.func @kernel(%arg0: i32, %arg1: i32, %arg2: i32, %arg3: memref<64x128xbf16, #tpu.memory_space<vmem>>, %arg4: memref<128x128xbf16, #tpu.memory_space<vmem>>, %arg5: memref<1x128xf32, #tpu.memory_space<vmem>>, %arg6: memref<1x128xf32, #tpu.memory_space<vmem>>, %arg7: memref<1x128xf32, #tpu.memory_space<vmem>>, %arg8: memref<64x128xbf16, #tpu.memory_space<vmem>>, %arg9: memref<64x128xf32, #tpu.memory_space<vmem>>) attributes {dimension_semantics = [#tpu.dimension_semantics<parallel>, #tpu.dimension_semantics<parallel>, #tpu.dimension_semantics<arbitrary>], iteration_bounds = array<i64: 1, 1, 1>, scalar_prefetch = 0 : i64, scratch_operands = 1 : i64, tpu.core_type = #tpu.core_type<tc>, window_params = [{transform_indices = @transform_0, window_bounds = array<i64: 64, 128>}, {transform_indices = @transform_1, window_bounds = array<i64: 128, 128>}, {transform_indices = @transform_2, window_bounds = array<i64: 1, 128>}, {transform_indices = @transform_3, window_bounds = array<i64: 1, 128>}, {transform_indices = @transform_4, window_bounds = array<i64: 1, 128>}, {transform_indices = @transform_5, window_bounds = array<i64: 64, 128>}]} {
    %c0_i32 = arith.constant 0 : i32
    %0 = arith.cmpi eq, %arg2, %c0_i32 : i32
    %1 = arith.extui %0 : i1 to i32
    %c0_i32_0 = arith.constant 0 : i32
    %2 = arith.cmpi ne, %1, %c0_i32_0 : i32
    scf.if %2 {
      %cst_21 = arith.constant 0.000000e+00 : f32
      %43 = vector.broadcast %cst_21 : f32 to vector<64x128xf32>
      %c0_22 = arith.constant 0 : index
      %c0_23 = arith.constant 0 : index
      %44 = vector.load %arg9[%c0_22, %c0_23] : memref<64x128xf32, #tpu.memory_space<vmem>>, vector<64x128xf32>
      tpu.vector_store %arg9[%c0_22, %c0_23], %43 {strides = array<i32>} : memref<64x128xf32, #tpu.memory_space<vmem>>, vector<64x128xf32>,
    } else {
    }
    %c0 = arith.constant 0 : index
    %c0_1 = arith.constant 0 : index
    %3 = vector.load %arg3[%c0, %c0_1] : memref<64x128xbf16, #tpu.memory_space<vmem>>, vector<64x128xbf16>
    %4 = arith.extf %3 : vector<64x128xbf16> to vector<64x128xf32>
    %5 = tpu.iota {dimensions = array<i32: 1>} : vector<64x128xi32>
    %c32_i32 = arith.constant 32 : i32
    %6 = vector.broadcast %c32_i32 : i32 to vector<64x128xi32>
    %7 = arith.cmpi slt, %5, %6 : vector<64x128xi32>
    %cst = arith.constant 0.000000e+00 : f32
    %8 = vector.broadcast %cst : f32 to vector<64x128xf32>
    %9 = arith.select %7, %4, %8 : vector<64x128xi1>, vector<64x128xf32>
    %cst_2 = arith.constant dense<0.000000e+00> : vector<64xf32>
    %10 = vector.multi_reduction <add>, %9, %cst_2 [1] : vector<64x128xf32> to vector<64xf32>
    %11 = vector.shape_cast %10 : vector<64xf32> to vector<64x1xf32>
    %cst_3 = arith.constant 3.125000e-02 : f32
    %12 = vector.broadcast %cst_3 : f32 to vector<64x1xf32>
    %13 = arith.mulf %11, %12 : vector<64x1xf32>
    %14 = vector.broadcast %13 : vector<64x1xf32> to vector<64x128xf32>
    %15 = arith.subf %4, %14 : vector<64x128xf32>
    %cst_4 = arith.constant 0.000000e+00 : f32
    %16 = vector.broadcast %cst_4 : f32 to vector<64x128xf32>
    %17 = arith.select %7, %15, %16 : vector<64x128xi1>, vector<64x128xf32>
    %18 = arith.mulf %17, %17 : vector<64x128xf32>
    %cst_5 = arith.constant dense<0.000000e+00> : vector<64xf32>
    %19 = vector.multi_reduction <add>, %18, %cst_5 [1] : vector<64x128xf32> to vector<64xf32>
    %20 = vector.shape_cast %19 : vector<64xf32> to vector<64x1xf32>
    %cst_6 = arith.constant 3.125000e-02 : f32
    %21 = vector.broadcast %cst_6 : f32 to vector<64x1xf32>
    %22 = arith.mulf %20, %21 : vector<64x1xf32>
    %cst_7 = arith.constant 9.99999974E-6 : f32
    %23 = vector.broadcast %cst_7 : f32 to vector<64x1xf32>
    %24 = arith.addf %22, %23 : vector<64x1xf32>
    %25 = math.rsqrt %24 : vector<64x1xf32>
    %26 = vector.broadcast %25 : vector<64x1xf32> to vector<64x128xf32>
    %27 = arith.mulf %17, %26 : vector<64x128xf32>
    %c0_8 = arith.constant 0 : index
    %c0_9 = arith.constant 0 : index
    %28 = vector.load %arg6[%c0_8, %c0_9] : memref<1x128xf32, #tpu.memory_space<vmem>>, vector<1x128xf32>
    %29 = vector.broadcast %28 : vector<1x128xf32> to vector<64x128xf32>
    %30 = arith.mulf %27, %29 : vector<64x128xf32>
    %c0_10 = arith.constant 0 : index
    %c0_11 = arith.constant 0 : index
    %31 = vector.load %arg7[%c0_10, %c0_11] : memref<1x128xf32, #tpu.memory_space<vmem>>, vector<1x128xf32>
    %32 = vector.broadcast %31 : vector<1x128xf32> to vector<64x128xf32>
    %33 = arith.addf %30, %32 : vector<64x128xf32>
    %34 = arith.truncf %33 : vector<64x128xf32> to vector<64x128xbf16>
    %c0_12 = arith.constant 0 : index
    %c0_13 = arith.constant 0 : index
    %35 = vector.load %arg9[%c0_12, %c0_13] : memref<64x128xf32, #tpu.memory_space<vmem>>, vector<64x128xf32>
    %c0_14 = arith.constant 0 : index
    %c0_15 = arith.constant 0 : index
    %36 = vector.load %arg4[%c0_14, %c0_15] : memref<128x128xbf16, #tpu.memory_space<vmem>>, vector<128x128xbf16>
    %cst_16 = arith.constant dense<0.000000e+00> : vector<64x128xf32>
    %37 = tpu.matmul %34, %36, %cst_16 {dimension_numbers = #tpu.dot_dimension_numbers<[1], [0], [0], [1], [0, 0, 1, 1], [], []>} : vector<64x128xbf16>, vector<128x128xbf16>, vector<64x128xf32> -> vector<64x128xf32>
    %38 = arith.addf %35, %37 : vector<64x128xf32>
    %c0_17 = arith.constant 0 : index
    %c0_18 = arith.constant 0 : index
    %39 = vector.load %arg9[%c0_17, %c0_18] : memref<64x128xf32, #tpu.memory_space<vmem>>, vector<64x128xf32>
    tpu.vector_store %arg9[%c0_17, %c0_18], %38 {strides = array<i32>} : memref<64x128xf32, #tpu.memory_space<vmem>>, vector<64x128xf32>,
    %c0_i32_19 = arith.constant 0 : i32
    %40 = arith.cmpi eq, %arg2, %c0_i32_19 : i32
    %41 = arith.extui %40 : i1 to i32
    %c0_i32_20 = arith.constant 0 : i32
    %42 = arith.cmpi ne, %41, %c0_i32_20 : i32
    scf.if %42 {
      %c0_21 = arith.constant 0 : index
      %c0_22 = arith.constant 0 : index
      %43 = vector.load %arg9[%c0_21, %c0_22] : memref<64x128xf32, #tpu.memory_space<vmem>>, vector<64x128xf32>
      %c0_23 = arith.constant 0 : index
      %c0_24 = arith.constant 0 : index
      %44 = vector.load %arg5[%c0_23, %c0_24] : memref<1x128xf32, #tpu.memory_space<vmem>>, vector<1x128xf32>
      %45 = vector.broadcast %44 : vector<1x128xf32> to vector<64x128xf32>
      %46 = arith.addf %43, %45 : vector<64x128xf32>
      %47 = arith.negf %46 : vector<64x128xf32>
      %48 = math.exp %47 : vector<64x128xf32>
      %cst_25 = arith.constant 1.000000e+00 : f32
      %49 = vector.broadcast %cst_25 : f32 to vector<64x128xf32>
      %50 = arith.addf %49, %48 : vector<64x128xf32>
      %51 = arith.divf %49, %50 : vector<64x128xf32>
      %52 = arith.mulf %46, %51 : vector<64x128xf32>
      %53 = arith.truncf %52 : vector<64x128xf32> to vector<64x128xbf16>
      %c0_26 = arith.constant 0 : index
      %c0_27 = arith.constant 0 : index
      %54 = vector.load %arg8[%c0_26, %c0_27] : memref<64x128xbf16, #tpu.memory_space<vmem>>, vector<64x128xbf16>
      tpu.vector_store %arg8[%c0_26, %c0_27], %53 {strides = array<i32>} : memref<64x128xbf16, #tpu.memory_space<vmem>>, vector<64x128xbf16>,
    } else {
    }
    return
  }
  func.func @transform_0(%arg0: i32, %arg1: i32, %arg2: i32) -> (i32, i32) {
    %c0_i32 = arith.constant 0 : i32
    return %arg0, %arg2 : i32, i32
  }
  func.func @transform_1(%arg0: i32, %arg1: i32, %arg2: i32) -> (i32, i32) {
    %c0_i32 = arith.constant 0 : i32
    return %arg2, %arg1 : i32, i32
  }
  func.func @transform_2(%arg0: i32, %arg1: i32, %arg2: i32) -> (i32, i32) {
    %c0_i32 = arith.constant 0 : i32
    %c0_i32_0 = arith.constant 0 : i32
    return %c0_i32, %arg1 : i32, i32
  }
  func.func @transform_3(%arg0: i32, %arg1: i32, %arg2: i32) -> (i32, i32) {
    %c0_i32 = arith.constant 0 : i32
    %c0_i32_0 = arith.constant 0 : i32
    return %c0_i32, %arg2 : i32, i32
  }
  func.func @transform_4(%arg0: i32, %arg1: i32, %arg2: i32) -> (i32, i32) {
    %c0_i32 = arith.constant 0 : i32
    %c0_i32_0 = arith.constant 0 : i32
    return %c0_i32, %arg2 : i32, i32
  }
  func.func @transform_5(%arg0: i32, %arg1: i32, %arg2: i32) -> (i32, i32) {
    %c0_i32 = arith.constant 0 : i32
    return %arg0, %arg1 : i32, i32
  }
}

module attributes {stable_mosaic.version = 11 : i64} {
  func.func @_attn_kernel(%arg0: i32, %arg1: memref<16x8x128xf32, #tpu.memory_space<vmem>>, %arg2: memref<16x8x128xf32, #tpu.memory_space<vmem>>, %arg3: memref<16x8x128xf32, #tpu.memory_space<vmem>>, %arg4: memref<16x8x128xf32, #tpu.memory_space<vmem>>) attributes {dimension_semantics = [#tpu.dimension_semantics<arbitrary>], iteration_bounds = array<i64: 1>, scalar_prefetch = 0 : i64, scratch_operands = 0 : i64, tpu.core_type = #tpu.core_type<tc>, window_params = [{pipeline_mode = #tpu.pipeline_mode<synchronous>, transform_indices = @transform_0, window_bounds = array<i64: 16, 8, 128>}, {pipeline_mode = #tpu.pipeline_mode<synchronous>, transform_indices = @transform_1, window_bounds = array<i64: 16, 8, 128>}, {pipeline_mode = #tpu.pipeline_mode<synchronous>, transform_indices = @transform_2, window_bounds = array<i64: 16, 8, 128>}, {pipeline_mode = #tpu.pipeline_mode<synchronous>, transform_indices = @transform_3, window_bounds = array<i64: 16, 8, 128>}]} {
    %c0 = arith.constant 0 : index
    %c0_0 = arith.constant 0 : index
    %c0_1 = arith.constant 0 : index
    %0 = vector.load %arg1[%c0, %c0_0, %c0_1] : memref<16x8x128xf32, #tpu.memory_space<vmem>>, vector<16x8x128xf32>
    %c0_2 = arith.constant 0 : index
    %c0_3 = arith.constant 0 : index
    %c0_4 = arith.constant 0 : index
    %1 = vector.load %arg2[%c0_2, %c0_3, %c0_4] : memref<16x8x128xf32, #tpu.memory_space<vmem>>, vector<16x8x128xf32>
    %c0_5 = arith.constant 0 : index
    %c0_6 = arith.constant 0 : index
    %c0_7 = arith.constant 0 : index
    %2 = vector.load %arg3[%c0_5, %c0_6, %c0_7] : memref<16x8x128xf32, #tpu.memory_space<vmem>>, vector<16x8x128xf32>
    "tpu.trace_start"() <{level = 10 : i32, message = "bqd,bkd->bqk"}> : () -> ()
    %cst = arith.constant dense<0.000000e+00> : vector<16x8x8xf32>
    %3 = tpu.matmul %0, %1, %cst {dimension_numbers = #tpu.dot_dimension_numbers<[2], [2], [1], [1], [0, 0, 0, 1, 1, 1], [0], [0]>} : vector<16x8x128xf32>, vector<16x8x128xf32>, vector<16x8x8xf32> -> vector<16x8x8xf32>
    "tpu.trace_stop"() : () -> ()
    %cst_8 = arith.constant 2.500000e-01 : f32
    %4 = vector.broadcast %cst_8 : f32 to vector<16x8x8xf32>
    %5 = arith.mulf %3, %4 : vector<16x8x8xf32>
    %6 = tpu.iota {dimensions = array<i32: 2>} : vector<16x8x8xi32>
    %c8_i32 = arith.constant 8 : i32
    %7 = vector.broadcast %c8_i32 : i32 to vector<16x8x8xi32>
    %8 = arith.cmpi slt, %6, %7 : vector<16x8x8xi32>
    %cst_9 = arith.constant -1.000000e+30 : f32
    %9 = vector.broadcast %cst_9 : f32 to vector<16x8x8xf32>
    %10 = arith.select %8, %5, %9 : vector<16x8x8xi1>, vector<16x8x8xf32>
    %cst_10 = arith.constant dense<0xFF800000> : vector<16x8xf32>
    %11 = vector.multi_reduction <maximumf>, %10, %cst_10 [2] : vector<16x8x8xf32> to vector<16x8xf32>
    %12 = vector.shape_cast %11 : vector<16x8xf32> to vector<16x8x1xf32>
    %13 = vector.broadcast %12 : vector<16x8x1xf32> to vector<16x8x8xf32>
    %14 = arith.subf %10, %13 : vector<16x8x8xf32>
    %15 = math.exp %14 : vector<16x8x8xf32>
    %cst_11 = arith.constant dense<0.000000e+00> : vector<16x8xf32>
    %16 = vector.multi_reduction <add>, %15, %cst_11 [2] : vector<16x8x8xf32> to vector<16x8xf32>
    %17 = vector.shape_cast %16 : vector<16x8xf32> to vector<16x8x1xf32>
    %18 = tpu.reciprocal %17 {approx = true} : vector<16x8x1xf32> -> vector<16x8x1xf32>
    %19 = vector.broadcast %18 : vector<16x8x1xf32> to vector<16x8x8xf32>
    %20 = arith.mulf %15, %19 : vector<16x8x8xf32>
    "tpu.trace_start"() <{level = 10 : i32, message = "bqk,bkd->bqd"}> : () -> ()
    %cst_12 = arith.constant dense<0.000000e+00> : vector<16x8x128xf32>
    %21 = tpu.matmul %20, %2, %cst_12 {dimension_numbers = #tpu.dot_dimension_numbers<[2], [1], [1], [2], [0, 0, 0, 1, 1, 2], [0], [0]>} : vector<16x8x8xf32>, vector<16x8x128xf32>, vector<16x8x128xf32> -> vector<16x8x128xf32>
    "tpu.trace_stop"() : () -> ()
    %c0_13 = arith.constant 0 : index
    %c0_14 = arith.constant 0 : index
    %c0_15 = arith.constant 0 : index
    %22 = vector.load %arg4[%c0_13, %c0_14, %c0_15] : memref<16x8x128xf32, #tpu.memory_space<vmem>>, vector<16x8x128xf32>
    tpu.vector_store %arg4[%c0_13, %c0_14, %c0_15], %21 {strides = array<i32>} : memref<16x8x128xf32, #tpu.memory_space<vmem>>, vector<16x8x128xf32>,
    return
  }
  func.func @transform_0(%arg0: i32) -> (i32, i32, i32) {
    %c0_i32 = arith.constant 0 : i32
    %c0_i32_0 = arith.constant 0 : i32
    %c0_i32_1 = arith.constant 0 : i32
    %c0_i32_2 = arith.constant 0 : i32
    return %c0_i32, %c0_i32_0, %c0_i32_1 : i32, i32, i32
  }
  func.func @transform_1(%arg0: i32) -> (i32, i32, i32) {
    %c0_i32 = arith.constant 0 : i32
    %c0_i32_0 = arith.constant 0 : i32
    %c0_i32_1 = arith.constant 0 : i32
    %c0_i32_2 = arith.constant 0 : i32
    return %c0_i32, %c0_i32_0, %c0_i32_1 : i32, i32, i32
  }
  func.func @transform_2(%arg0: i32) -> (i32, i32, i32) {
    %c0_i32 = arith.constant 0 : i32
    %c0_i32_0 = arith.constant 0 : i32
    %c0_i32_1 = arith.constant 0 : i32
    %c0_i32_2 = arith.constant 0 : i32
    return %c0_i32, %c0_i32_0, %c0_i32_1 : i32, i32, i32
  }
  func.func @transform_3(%arg0: i32) -> (i32, i32, i32) {
    %c0_i32 = arith.constant 0 : i32
    %c0_i32_0 = arith.constant 0 : i32
    %c0_i32_1 = arith.constant 0 : i32
    %c0_i32_2 = arith.constant 0 : i32
    return %c0_i32, %c0_i32_0, %c0_i32_1 : i32, i32, i32
  }
}

module attributes {stable_mosaic.version = 11 : i64} {
  func.func @kernel(%arg0: i32, %arg1: i32, %arg2: i32, %arg3: memref<64x128xbf16, #tpu.memory_space<vmem>>, %arg4: memref<128x128xbf16, #tpu.memory_space<vmem>>, %arg5: memref<1x128xf32, #tpu.memory_space<vmem>>, %arg6: memref<64x128xbf16, #tpu.memory_space<vmem>>, %arg7: memref<64x128xbf16, #tpu.memory_space<vmem>>, %arg8: memref<64x128xf32, #tpu.memory_space<vmem>>) attributes {dimension_semantics = [#tpu.dimension_semantics<parallel>, #tpu.dimension_semantics<parallel>, #tpu.dimension_semantics<arbitrary>], iteration_bounds = array<i64: 1, 1, 1>, scalar_prefetch = 0 : i64, scratch_operands = 1 : i64, tpu.core_type = #tpu.core_type<tc>, window_params = [{transform_indices = @transform_0, window_bounds = array<i64: 64, 128>}, {transform_indices = @transform_1, window_bounds = array<i64: 128, 128>}, {transform_indices = @transform_2, window_bounds = array<i64: 1, 128>}, {transform_indices = @transform_3, window_bounds = array<i64: 64, 128>}, {transform_indices = @transform_4, window_bounds = array<i64: 64, 128>}]} {
    %c0_i32 = arith.constant 0 : i32
    %0 = arith.cmpi eq, %arg2, %c0_i32 : i32
    %1 = arith.extui %0 : i1 to i32
    %c0_i32_0 = arith.constant 0 : i32
    %2 = arith.cmpi ne, %1, %c0_i32_0 : i32
    scf.if %2 {
      %cst_10 = arith.constant 0.000000e+00 : f32
      %12 = vector.broadcast %cst_10 : f32 to vector<64x128xf32>
      %c0_11 = arith.constant 0 : index
      %c0_12 = arith.constant 0 : index
      %13 = vector.load %arg8[%c0_11, %c0_12] : memref<64x128xf32, #tpu.memory_space<vmem>>, vector<64x128xf32>
      tpu.vector_store %arg8[%c0_11, %c0_12], %12 {strides = array<i32>} : memref<64x128xf32, #tpu.memory_space<vmem>>, vector<64x128xf32>,
    } else {
    }
    %c0 = arith.constant 0 : index
    %c0_1 = arith.constant 0 : index
    %3 = vector.load %arg3[%c0, %c0_1] : memref<64x128xbf16, #tpu.memory_space<vmem>>, vector<64x128xbf16>
    %c0_2 = arith.constant 0 : index
    %c0_3 = arith.constant 0 : index
    %4 = vector.load %arg8[%c0_2, %c0_3] : memref<64x128xf32, #tpu.memory_space<vmem>>, vector<64x128xf32>
    %c0_4 = arith.constant 0 : index
    %c0_5 = arith.constant 0 : index
    %5 = vector.load %arg4[%c0_4, %c0_5] : memref<128x128xbf16, #tpu.memory_space<vmem>>, vector<128x128xbf16>
    %cst = arith.constant dense<0.000000e+00> : vector<64x128xf32>
    %6 = tpu.matmul %3, %5, %cst {dimension_numbers = #tpu.dot_dimension_numbers<[1], [0], [0], [1], [0, 0, 1, 1], [], []>} : vector<64x128xbf16>, vector<128x128xbf16>, vector<64x128xf32> -> vector<64x128xf32>
    %7 = arith.addf %4, %6 : vector<64x128xf32>
    %c0_6 = arith.constant 0 : index
    %c0_7 = arith.constant 0 : index
    %8 = vector.load %arg8[%c0_6, %c0_7] : memref<64x128xf32, #tpu.memory_space<vmem>>, vector<64x128xf32>
    tpu.vector_store %arg8[%c0_6, %c0_7], %7 {strides = array<i32>} : memref<64x128xf32, #tpu.memory_space<vmem>>, vector<64x128xf32>,
    %c0_i32_8 = arith.constant 0 : i32
    %9 = arith.cmpi eq, %arg2, %c0_i32_8 : i32
    %10 = arith.extui %9 : i1 to i32
    %c0_i32_9 = arith.constant 0 : i32
    %11 = arith.cmpi ne, %10, %c0_i32_9 : i32
    scf.if %11 {
      %c0_10 = arith.constant 0 : index
      %c0_11 = arith.constant 0 : index
      %12 = vector.load %arg8[%c0_10, %c0_11] : memref<64x128xf32, #tpu.memory_space<vmem>>, vector<64x128xf32>
      %c0_12 = arith.constant 0 : index
      %c0_13 = arith.constant 0 : index
      %13 = vector.load %arg5[%c0_12, %c0_13] : memref<1x128xf32, #tpu.memory_space<vmem>>, vector<1x128xf32>
      %14 = vector.broadcast %13 : vector<1x128xf32> to vector<64x128xf32>
      %15 = arith.addf %12, %14 : vector<64x128xf32>
      %c0_14 = arith.constant 0 : index
      %c0_15 = arith.constant 0 : index
      %16 = vector.load %arg6[%c0_14, %c0_15] : memref<64x128xbf16, #tpu.memory_space<vmem>>, vector<64x128xbf16>
      %17 = arith.extf %16 : vector<64x128xbf16> to vector<64x128xf32>
      %18 = arith.addf %15, %17 : vector<64x128xf32>
      %19 = arith.truncf %18 : vector<64x128xf32> to vector<64x128xbf16>
      %c0_16 = arith.constant 0 : index
      %c0_17 = arith.constant 0 : index
      %20 = vector.load %arg7[%c0_16, %c0_17] : memref<64x128xbf16, #tpu.memory_space<vmem>>, vector<64x128xbf16>
      tpu.vector_store %arg7[%c0_16, %c0_17], %19 {strides = array<i32>} : memref<64x128xbf16, #tpu.memory_space<vmem>>, vector<64x128xbf16>,
    } else {
    }
    return
  }
  func.func @transform_0(%arg0: i32, %arg1: i32, %arg2: i32) -> (i32, i32) {
    %c0_i32 = arith.constant 0 : i32
    return %arg0, %arg2 : i32, i32
  }
  func.func @transform_1(%arg0: i32, %arg1: i32, %arg2: i32) -> (i32, i32) {
    %c0_i32 = arith.constant 0 : i32
    return %arg2, %arg1 : i32, i32
  }
  func.func @transform_2(%arg0: i32, %arg1: i32, %arg2: i32) -> (i32, i32) {
    %c0_i32 = arith.constant 0 : i32
    %c0_i32_0 = arith.constant 0 : i32
    return %c0_i32, %arg1 : i32, i32
  }
  func.func @transform_3(%arg0: i32, %arg1: i32, %arg2: i32) -> (i32, i32) {
    %c0_i32 = arith.constant 0 : i32
    return %arg0, %arg1 : i32, i32
  }
  func.func @transform_4(%arg0: i32, %arg1: i32, %arg2: i32) -> (i32, i32) {
    %c0_i32 = arith.constant 0 : i32
    return %arg0, %arg1 : i32, i32
  }
}

</mosaic_0001>

<llo_original>
// kernel: _lambda_.13
$region0: #{_lambda_.13}
  #allocation0 [shape = 'u32[]', space=smem, size = 0x4, offset = 0x4, fixed_abs, tag = 'smem constant byte address 0x4 - core index']
  #allocation1 [shape = 'u32[144,128]{1,0:T(1,128)}', space=vmem, size = 0x12000, scoped, tag = 'internal scratch']
  #allocation2 [shape = 'f32[64,128]{1,0:T(8,128)}', space=vmem, size = 0x8000, scoped, tag = 'scratch operand']
  %s0 = inlined_call_operand.vmem [shape: bf16[64,128], index: 0, kind: input, shape index: {}]
  %s1 = inlined_call_operand.vmem [shape: bf16[128,128], index: 1, kind: input, shape index: {}]
  %s2 = inlined_call_operand.vmem [shape: f32[1,128], index: 2, kind: input, shape index: {}]
  %s3 = inlined_call_operand.vmem [shape: f32[1,128], index: 3, kind: input, shape index: {}]
  %s4 = inlined_call_operand.vmem [shape: f32[1,128], index: 4, kind: input, shape index: {}]
  %s5 = inlined_call_operand.vmem [shape: bf16[64,128], index: 5, kind: output, shape index: {}]
  %s6 = sld [smem:[#allocation0]]
  $region38: #{_lambda_.13} parent=0
    _
  %s8 = ssub.s32 1, %s6
  %s9 = scalar_select 0, %s8, %s6
  // Predicated region
  $region2: #{_lambda_.13} parent=0 // pred_check
    _
  $region3: #{_lambda_.13} parent=0 // pred_check_branch
    %11 = sbr.rel (0) target = $region5
  $region4: #{_lambda_.13} parent=0 // pred_region
    _
  $region5: #{_lambda_.13} parent=0 // pred_fallthru
    _
  // Predicated region
  $region6: #{_lambda_.13} parent=0 // pred_check
    _
  $region7: #{_lambda_.13} parent=0 // pred_check_branch
    %13 = sbr.rel (0) target = $region9
  $region8: #{_lambda_.13} parent=0 // pred_region
    _
  $region9: #{_lambda_.13} parent=0 // pred_fallthru
    _
  // Predicated region
  $region10: #{_lambda_.13} parent=0 // pred_check
    _
  $region11: #{_lambda_.13} parent=0 // pred_check_branch
    %15 = sbr.rel (0) target = $region13
  $region12: #{_lambda_.13} parent=0 // pred_region
    _
  $region13: #{_lambda_.13} parent=0 // pred_fallthru
    _
  // Predicated region
  $region14: #{_lambda_.13} parent=0 // pred_check
    _
  $region15: #{_lambda_.13} parent=0 // pred_check_branch
    %17 = sbr.rel (0) target = $region17
  $region16: #{_lambda_.13} parent=0 // pred_region
    _
  $region17: #{_lambda_.13} parent=0 // pred_fallthru
    _
  // Predicated region
  $region18: #{_lambda_.13} parent=0 // pred_check
    _
  $region19: #{_lambda_.13} parent=0 // pred_check_branch
    %19 = sbr.rel (0) target = $region21
  $region20: #{_lambda_.13} parent=0 // pred_region
    _
  $region21: #{_lambda_.13} parent=0 // pred_fallthru
    _
  %p21 = scmp.eq.s32.totalorder 0, 0
  // Predicated region
  $region22: #{_lambda_.13} parent=0 // pred_check
    %p22 = pneg %p21
  $region23: #{_lambda_.13} parent=0 // pred_check_branch
    %24 = sbr.rel (%p22) target = $region25
  $region24: #{_lambda_.13} parent=0 // pred_region
    %25 = vst [vmem:[#allocation2] sm:$0xff] 0.0
    %26 = vst [vmem:[#allocation2 + $0x8] sm:$0xff] 0.0
    %27 = vst [vmem:[#allocation2 + $0x10] sm:$0xff] 0.0
    %28 = vst [vmem:[#allocation2 + $0x18] sm:$0xff] 0.0
    %29 = vst [vmem:[#allocation2 + $0x20] sm:$0xff] 0.0
    %30 = vst [vmem:[#allocation2 + $0x28] sm:$0xff] 0.0
    %31 = vst [vmem:[#allocation2 + $0x30] sm:$0xff] 0.0
    %32 = vst [vmem:[#allocation2 + $0x38] sm:$0xff] 0.0
  $region25: #{_lambda_.13} parent=0 // pred_fallthru
    _
  %v33 = vld [vmem:[%s0] sm:$0xf]
  %v34 = vld [vmem:[%s0 + $0x4] sm:$0xf]
  %v35 = vld [vmem:[%s0 + $0x8] sm:$0xf]
  %v36 = vld [vmem:[%s0 + $0xc] sm:$0xf]
  %v37 = vld [vmem:[%s0 + $0x10] sm:$0xf]
  %v38 = vld [vmem:[%s0 + $0x14] sm:$0xf]
  %v39 = vld [vmem:[%s0 + $0x18] sm:$0xf]
  %v40 = vld [vmem:[%s0 + $0x1c] sm:$0xf]
  %v41 = vunpack.c.l.bf16 %v33
  %v42 = vunpack.c.l.bf16 %v34
  %v43 = vunpack.c.l.bf16 %v35
  %v44 = vunpack.c.l.bf16 %v36
  %v45 = vunpack.c.l.bf16 %v37
  %v46 = vunpack.c.l.bf16 %v38
  %v47 = vunpack.c.l.bf16 %v39
  %v48 = vunpack.c.l.bf16 %v40
  %v49 = vlaneseq
  %v50 = vand.u32 %v49, 127
  %vm51 = vcmp.lt.s32.totalorder %v50, 32
  %v52 = vsel %vm51, %v41, 0.0
  %v53 = vsel %vm51, %v42, 0.0
  %v54 = vsel %vm51, %v43, 0.0
  %v55 = vsel %vm51, %v44, 0.0
  %v56 = vsel %vm51, %v45, 0.0
  %v57 = vsel %vm51, %v46, 0.0
  %v58 = vsel %vm51, %v47, 0.0
  %v59 = vsel %vm51, %v48, 0.0
  %60 = vadd.xlane.f32.xlu0 %v52
  %v61 = vpop.xlane.xlu0 %60
  %62 = vadd.xlane.f32.xlu0 %v53
  %v63 = vpop.xlane.xlu0 %62
  %64 = vadd.xlane.f32.xlu0 %v54
  %v65 = vpop.xlane.xlu0 %64
  %66 = vadd.xlane.f32.xlu0 %v55
  %v67 = vpop.xlane.xlu0 %66
  %68 = vadd.xlane.f32.xlu0 %v56
  %v69 = vpop.xlane.xlu0 %68
  %70 = vadd.xlane.f32.xlu0 %v57
  %v71 = vpop.xlane.xlu0 %70
  %72 = vadd.xlane.f32.xlu0 %v58
  %v73 = vpop.xlane.xlu0 %72
  %74 = vadd.xlane.f32.xlu0 %v59
  %v75 = vpop.xlane.xlu0 %74
  %v76 = vmul.f32 %v61, 0.03125
  %v77 = vmul.f32 %v63, 0.03125
  %v78 = vmul.f32 %v65, 0.03125
  %v79 = vmul.f32 %v67, 0.03125
  %v80 = vmul.f32 %v69, 0.03125
  %v81 = vmul.f32 %v71, 0.03125
  %v82 = vmul.f32 %v73, 0.03125
  %v83 = vmul.f32 %v75, 0.03125
  %v84 = vsub.f32 %v41, %v76
  %v85 = vsub.f32 %v42, %v77
  %v86 = vsub.f32 %v43, %v78
  %v87 = vsub.f32 %v44, %v79
  %v88 = vsub.f32 %v45, %v80
  %v89 = vsub.f32 %v46, %v81
  %v90 = vsub.f32 %v47, %v82
  %v91 = vsub.f32 %v48, %v83
  %v92 = vsel %vm51, %v84, 0.0
  %v93 = vsel %vm51, %v85, 0.0
  %v94 = vsel %vm51, %v86, 0.0
  %v95 = vsel %vm51, %v87, 0.0
  %v96 = vsel %vm51, %v88, 0.0
  %v97 = vsel %vm51, %v89, 0.0
  %v98 = vsel %vm51, %v90, 0.0
  %v99 = vsel %vm51, %v91, 0.0
  %v100 = vmul.f32 %v92, %v92
  %v101 = vmul.f32 %v93, %v93
  %v102 = vmul.f32 %v94, %v94
  %v103 = vmul.f32 %v95, %v95
  %v104 = vmul.f32 %v96, %v96
  %v105 = vmul.f32 %v97, %v97
  %v106 = vmul.f32 %v98, %v98
  %v107 = vmul.f32 %v99, %v99
  %108 = vadd.xlane.f32.xlu0 %v100
  %v109 = vpop.xlane.xlu0 %108
  %110 = vadd.xlane.f32.xlu0 %v101
  %v111 = vpop.xlane.xlu0 %110
  %112 = vadd.xlane.f32.xlu0 %v102
  %v113 = vpop.xlane.xlu0 %112
  %114 = vadd.xlane.f32.xlu0 %v103
  %v115 = vpop.xlane.xlu0 %114
  %116 = vadd.xlane.f32.xlu0 %v104
  %v117 = vpop.xlane.xlu0 %116
  %118 = vadd.xlane.f32.xlu0 %v105
  %v119 = vpop.xlane.xlu0 %118
  %120 = vadd.xlane.f32.xlu0 %v106
  %v121 = vpop.xlane.xlu0 %120
  %122 = vadd.xlane.f32.xlu0 %v107
  %v123 = vpop.xlane.xlu0 %122
  %v124 = vmul.f32 %v109, 0.03125
  %v125 = vmul.f32 %v111, 0.03125
  %v126 = vmul.f32 %v113, 0.03125
  %v127 = vmul.f32 %v115, 0.03125
  %v128 = vmul.f32 %v117, 0.03125
  %v129 = vmul.f32 %v119, 0.03125
  %v130 = vmul.f32 %v121, 0.03125
  %v131 = vmul.f32 %v123, 0.03125
  %v132 = vadd.f32 %v124, 1e-05
  %v133 = vadd.f32 %v125, 1e-05
  %v134 = vadd.f32 %v126, 1e-05
  %v135 = vadd.f32 %v127, 1e-05
  %v136 = vadd.f32 %v128, 1e-05
  %v137 = vadd.f32 %v129, 1e-05
  %v138 = vadd.f32 %v130, 1e-05
  %v139 = vadd.f32 %v131, 1e-05
  %v140 = vrsqrt.pop %v132
  %v141 = vrsqrt.pop %v133
  %v142 = vrsqrt.pop %v134
  %v143 = vrsqrt.pop %v135
  %v144 = vrsqrt.pop %v136
  %v145 = vrsqrt.pop %v137
  %v146 = vrsqrt.pop %v138
  %v147 = vrsqrt.pop %v139
  %v148 = vmul.f32 %v92, %v140
  %v149 = vmul.f32 %v93, %v141
  %v150 = vmul.f32 %v94, %v142
  %v151 = vmul.f32 %v95, %v143
  %v152 = vmul.f32 %v96, %v144
  %v153 = vmul.f32 %v97, %v145
  %v154 = vmul.f32 %v98, %v146
  %v155 = vmul.f32 %v99, %v147
  %v156 = vld [vmem:[%s3] sm:$0x1]
  %v158 = vlaneseq
  %v159 = vshrl.u32 %v158, 7
  %v160 = vsub.s32 0, %v159
  %v161 = vrot.slane %v156, %v160
  %v163 = vmul.f32 %v148, %v161
  %v164 = vmul.f32 %v149, %v161
  %v165 = vmul.f32 %v150, %v161
  %v166 = vmul.f32 %v151, %v161
  %v167 = vmul.f32 %v152, %v161
  %v168 = vmul.f32 %v153, %v161
  %v169 = vmul.f32 %v154, %v161
  %v170 = vmul.f32 %v155, %v161
  %v171 = vld [vmem:[%s4] sm:$0x1]
  %v173 = vlaneseq
  %v174 = vshrl.u32 %v173, 7
  %v175 = vsub.s32 0, %v174
  %v176 = vrot.slane %v171, %v175
  %v178 = vadd.f32 %v163, %v176
  %v179 = vadd.f32 %v164, %v176
  %v180 = vadd.f32 %v165, %v176
  %v181 = vadd.f32 %v166, %v176
  %v182 = vadd.f32 %v167, %v176
  %v183 = vadd.f32 %v168, %v176
  %v184 = vadd.f32 %v169, %v176
  %v185 = vadd.f32 %v170, %v176
  %v186 = vpack.c.bf16 %v179, %v178
  %v187 = vpack.c.bf16 %v181, %v180
  %v188 = vpack.c.bf16 %v183, %v182
  %v189 = vpack.c.bf16 %v185, %v184
  %v190 = vld [vmem:[#allocation2] sm:$0xff]
  %v191 = vld [vmem:[#allocation2 + $0x8] sm:$0xff]
  %v192 = vld [vmem:[#allocation2 + $0x10] sm:$0xff]
  %v193 = vld [vmem:[#allocation2 + $0x18] sm:$0xff]
  %v194 = vld [vmem:[#allocation2 + $0x20] sm:$0xff]
  %v195 = vld [vmem:[#allocation2 + $0x28] sm:$0xff]
  %v196 = vld [vmem:[#allocation2 + $0x30] sm:$0xff]
  %v197 = vld [vmem:[#allocation2 + $0x38] sm:$0xff]
  %v198 = vld [vmem:[%s1] sm:$0xf]
  %v199 = vld [vmem:[%s1 + $0x4] sm:$0xf]
  %v200 = vld [vmem:[%s1 + $0x8] sm:$0xf]
  %v201 = vld [vmem:[%s1 + $0xc] sm:$0xf]
  %v202 = vld [vmem:[%s1 + $0x10] sm:$0xf]
  %v203 = vld [vmem:[%s1 + $0x14] sm:$0xf]
  %v204 = vld [vmem:[%s1 + $0x18] sm:$0xf]
  %v205 = vld [vmem:[%s1 + $0x1c] sm:$0xf]
  %v206 = vld [vmem:[%s1 + $0x20] sm:$0xf]
  %v207 = vld [vmem:[%s1 + $0x24] sm:$0xf]
  %v208 = vld [vmem:[%s1 + $0x28] sm:$0xf]
  %v209 = vld [vmem:[%s1 + $0x2c] sm:$0xf]
  %v210 = vld [vmem:[%s1 + $0x30] sm:$0xf]
  %v211 = vld [vmem:[%s1 + $0x34] sm:$0xf]
  %v212 = vld [vmem:[%s1 + $0x38] sm:$0xf]
  %v213 = vld [vmem:[%s1 + $0x3c] sm:$0xf]
  %v230 = vunpack.c.l.b16 %v198
  %v231 = vunpack.c.l.b16 %v199
  %v232 = vunpack.c.l.b16 %v200
  %v233 = vunpack.c.l.b16 %v201
  %v234 = vunpack.c.l.b16 %v202
  %v235 = vunpack.c.l.b16 %v203
  %v236 = vunpack.c.l.b16 %v204
  %v237 = vunpack.c.l.b16 %v205
  %v238 = vunpack.c.l.b16 %v206
  %v239 = vunpack.c.l.b16 %v207
  %v240 = vunpack.c.l.b16 %v208
  %v241 = vunpack.c.l.b16 %v209
  %v242 = vunpack.c.l.b16 %v210
  %v243 = vunpack.c.l.b16 %v211
  %v244 = vunpack.c.l.b16 %v212
  %v245 = vunpack.c.l.b16 %v213
  %v246 = vpack.c.b16 %v231, %v230
  %v247 = vpack.c.b16 %v233, %v232
  %v248 = vpack.c.b16 %v235, %v234
  %v249 = vpack.c.b16 %v237, %v236
  %v250 = vpack.c.b16 %v239, %v238
  %v251 = vpack.c.b16 %v241, %v240
  %v252 = vpack.c.b16 %v243, %v242
  %v253 = vpack.c.b16 %v245, %v244
  %262 = vmatprep.subr.bf16.mxu0 0
  %263 = vmatpush1.bf16.msra.mxu0 %v246
  %264 = vmatprep.subr.bf16.mxu0 0
  %265 = vmatpush1.bf16.msra.mxu0 %v247
  %266 = vmatprep.subr.bf16.mxu0 0
  %267 = vmatpush1.bf16.msra.mxu0 %v248
  %268 = vmatprep.subr.bf16.mxu0 0
  %269 = vmatpush1.bf16.msra.mxu0 %v249
  %270 = vmatprep.subr.bf16.mxu0 0
  %271 = vmatpush1.bf16.msra.mxu0 %v250
  %272 = vmatprep.subr.bf16.mxu0 0
  %273 = vmatpush1.bf16.msra.mxu0 %v251
  %274 = vmatprep.subr.bf16.mxu0 0
  %275 = vmatpush1.bf16.msra.mxu0 %v252
  %276 = vmatprep.subr.bf16.mxu0 0
  %277 = vmatpush1.bf16.msra.mxu0 %v253
  %278 = vmatprep.subr.bf16.mxu0 0
  %279 = vmatpush1.bf16.msra.mxu0 0
  %280 = vmatprep.subr.bf16.mxu0 0
  %281 = vmatpush1.bf16.msra.mxu0 0
  %282 = vmatprep.subr.bf16.mxu0 0
  %283 = vmatpush1.bf16.msra.mxu0 0
  %284 = vmatprep.subr.bf16.mxu0 0
  %285 = vmatpush1.bf16.msra.mxu0 0
  %286 = vmatprep.subr.bf16.mxu0 0
  %287 = vmatpush1.bf16.msra.mxu0 0
  %288 = vmatprep.subr.bf16.mxu0 0
  %289 = vmatpush1.bf16.msra.mxu0 0
  %290 = vmatprep.subr.bf16.mxu0 0
  %291 = vmatpush1.bf16.msra.mxu0 0
  %292 = vmatprep.subr.bf16.mxu0 0
  %293 = vmatpush1.bf16.msra.mxu0 0
  %294 = vmatprep.mubr.bf16.mxu0 0
  %295 = vmatmul.mubr.bf16.gmra.mrb[0].mxu0 %v186
  %v296 = vpop.f32.mrb[0].mxu0
  %v297 = vadd.f32 0.0, %v296
  %v298 = vpop.f32.mrb[0].mxu0
  %v299 = vpop.f32.mrb[0].mxu0
  %v300 = vadd.f32 0.0, %v299
  %v301 = vpop.f32.mrb[0].mxu0
  %302 = vmatprep.mubr.bf16.mxu0 0
  %303 = vmatmul.mubr.bf16.gmra.mrb[0].mxu0 %v187
  %v304 = vpop.f32.mrb[0].mxu0
  %v305 = vadd.f32 0.0, %v304
  %v306 = vpop.f32.mrb[0].mxu0
  %v307 = vpop.f32.mrb[0].mxu0
  %v308 = vadd.f32 0.0, %v307
  %v309 = vpop.f32.mrb[0].mxu0
  %310 = vmatprep.mubr.bf16.mxu0 0
  %311 = vmatmul.mubr.bf16.gmra.mrb[0].mxu0 %v188
  %v312 = vpop.f32.mrb[0].mxu0
  %v313 = vadd.f32 0.0, %v312
  %v314 = vpop.f32.mrb[0].mxu0
  %v315 = vpop.f32.mrb[0].mxu0
  %v316 = vadd.f32 0.0, %v315
  %v317 = vpop.f32.mrb[0].mxu0
  %318 = vmatprep.mubr.bf16.mxu0 0
  %319 = vmatmul.mubr.bf16.gmra.mrb[0].mxu0 %v189
  %v320 = vpop.f32.mrb[0].mxu0
  %v321 = vadd.f32 0.0, %v320
  %v322 = vpop.f32.mrb[0].mxu0
  %v323 = vpop.f32.mrb[0].mxu0
  %v324 = vadd.f32 0.0, %v323
  %v325 = vpop.f32.mrb[0].mxu0
  %326 = vdwg.mxu0
  %v327 = vadd.f32 %v190, %v297
  %v328 = vadd.f32 %v191, %v300
  %v329 = vadd.f32 %v192, %v305
  %v330 = vadd.f32 %v193, %v308
  %v331 = vadd.f32 %v194, %v313
  %v332 = vadd.f32 %v195, %v316
  %v333 = vadd.f32 %v196, %v321
  %v334 = vadd.f32 %v197, %v324
  %335 = vst [vmem:[#allocation2] sm:$0xff] %v327
  %336 = vst [vmem:[#allocation2 + $0x8] sm:$0xff] %v328
  %337 = vst [vmem:[#allocation2 + $0x10] sm:$0xff] %v329
  %338 = vst [vmem:[#allocation2 + $0x18] sm:$0xff] %v330
  %339 = vst [vmem:[#allocation2 + $0x20] sm:$0xff] %v331
  %340 = vst [vmem:[#allocation2 + $0x28] sm:$0xff] %v332
  %341 = vst [vmem:[#allocation2 + $0x30] sm:$0xff] %v333
  %342 = vst [vmem:[#allocation2 + $0x38] sm:$0xff] %v334
  // Predicated region
  $region26: #{_lambda_.13} parent=0 // pred_check
    %p343 = pneg %p21
  $region27: #{_lambda_.13} parent=0 // pred_check_branch
    %345 = sbr.rel (%p343) target = $region29
  $region28: #{_lambda_.13} parent=0 // pred_region
    %v346 = vld [vmem:[#allocation2] sm:$0xff]
    %v347 = vld [vmem:[#allocation2 + $0x8] sm:$0xff]
    %v348 = vld [vmem:[#allocation2 + $0x10] sm:$0xff]
    %v349 = vld [vmem:[#allocation2 + $0x18] sm:$0xff]
    %v350 = vld [vmem:[#allocation2 + $0x20] sm:$0xff]
    %v351 = vld [vmem:[#allocation2 + $0x28] sm:$0xff]
    %v352 = vld [vmem:[#allocation2 + $0x30] sm:$0xff]
    %v353 = vld [vmem:[#allocation2 + $0x38] sm:$0xff]
    %v354 = vld [vmem:[%s2] sm:$0x1]
    %v356 = vlaneseq
    %v357 = vshrl.u32 %v356, 7
    %v358 = vsub.s32 0, %v357
    %v359 = vrot.slane %v354, %v358
    %v361 = vadd.f32 %v346, %v359
    %v362 = vadd.f32 %v347, %v359
    %v363 = vadd.f32 %v348, %v359
    %v364 = vadd.f32 %v349, %v359
    %v365 = vadd.f32 %v350, %v359
    %v366 = vadd.f32 %v351, %v359
    %v367 = vadd.f32 %v352, %v359
    %v368 = vadd.f32 %v353, %v359
    %v369 = vxor.u32 %v361, 2147483648
    %v370 = vxor.u32 %v362, 2147483648
    %v371 = vxor.u32 %v363, 2147483648
    %v372 = vxor.u32 %v364, 2147483648
    %v373 = vxor.u32 %v365, 2147483648
    %v374 = vxor.u32 %v366, 2147483648
    %v375 = vxor.u32 %v367, 2147483648
    %v376 = vxor.u32 %v368, 2147483648
    %v377 = vmul.f32 %v369, 1.442695
    %v378 = vpow.pop %v377
    %v379 = vmul.f32 %v370, 1.442695
    %v380 = vpow.pop %v379
    %v381 = vmul.f32 %v371, 1.442695
    %v382 = vpow.pop %v381
    %v383 = vmul.f32 %v372, 1.442695
    %v384 = vpow.pop %v383
    %v385 = vmul.f32 %v373, 1.442695
    %v386 = vpow.pop %v385
    %v387 = vmul.f32 %v374, 1.442695
    %v388 = vpow.pop %v387
    %v389 = vmul.f32 %v375, 1.442695
    %v390 = vpow.pop %v389
    %v391 = vmul.f32 %v376, 1.442695
    %v392 = vpow.pop %v391
    %v393 = vadd.f32 %v378, 1.0
    %v394 = vadd.f32 %v380, 1.0
    %v395 = vadd.f32 %v382, 1.0
    %v396 = vadd.f32 %v384, 1.0
    %v397 = vadd.f32 %v386, 1.0
    %v398 = vadd.f32 %v388, 1.0
    %v399 = vadd.f32 %v390, 1.0
    %v400 = vadd.f32 %v392, 1.0
    %v401 = vrcp.pop %v393
    %v402 = vmul.f32 1.0, %v401
    %v403 = vrcp.pop %v394
    %v404 = vmul.f32 1.0, %v403
    %v405 = vrcp.pop %v395
    %v406 = vmul.f32 1.0, %v405
    %v407 = vrcp.pop %v396
    %v408 = vmul.f32 1.0, %v407
    %v409 = vrcp.pop %v397
    %v410 = vmul.f32 1.0, %v409
    %v411 = vrcp.pop %v398
    %v412 = vmul.f32 1.0, %v411
    %v413 = vrcp.pop %v399
    %v414 = vmul.f32 1.0, %v413
    %v415 = vrcp.pop %v400
    %v416 = vmul.f32 1.0, %v415
    %v417 = vmul.f32 %v361, %v402
    %v418 = vmul.f32 %v362, %v404
    %v419 = vmul.f32 %v363, %v406
    %v420 = vmul.f32 %v364, %v408
    %v421 = vmul.f32 %v365, %v410
    %v422 = vmul.f32 %v366, %v412
    %v423 = vmul.f32 %v367, %v414
    %v424 = vmul.f32 %v368, %v416
    %v425 = vpack.c.bf16 %v418, %v417
    %v426 = vpack.c.bf16 %v420, %v419
    %v427 = vpack.c.bf16 %v422, %v421
    %v428 = vpack.c.bf16 %v424, %v423
    %v433 = vunpack.c.l.b16 %v425
    %v434 = vunpack.c.h.b16 %v425
    %v435 = vunpack.c.l.b16 %v426
    %v436 = vunpack.c.h.b16 %v426
    %v437 = vunpack.c.l.b16 %v427
    %v438 = vunpack.c.h.b16 %v427
    %v439 = vunpack.c.l.b16 %v428
    %v440 = vunpack.c.h.b16 %v428
    %v441 = vpack.c.b16 %v433, %v433
    %v442 = vpack.c.b16 %v434, %v434
    %v443 = vpack.c.b16 %v435, %v435
    %v444 = vpack.c.b16 %v436, %v436
    %v445 = vpack.c.b16 %v437, %v437
    %v446 = vpack.c.b16 %v438, %v438
    %v447 = vpack.c.b16 %v439, %v439
    %v448 = vpack.c.b16 %v440, %v440
    %457 = vst [vmem:[%s5] sm:$0xf] %v441
    %458 = vst [vmem:[%s5 + $0x4] sm:$0xf] %v442
    %459 = vst [vmem:[%s5 + $0x8] sm:$0xf] %v443
    %460 = vst [vmem:[%s5 + $0xc] sm:$0xf] %v444
    %461 = vst [vmem:[%s5 + $0x10] sm:$0xf] %v445
    %462 = vst [vmem:[%s5 + $0x14] sm:$0xf] %v446
    %463 = vst [vmem:[%s5 + $0x18] sm:$0xf] %v447
    %464 = vst [vmem:[%s5 + $0x1c] sm:$0xf] %v448
  $region29: #{_lambda_.13} parent=0 // pred_fallthru
    _
  // Predicated region
  $region30: #{_lambda_.13} parent=0 // pred_check
    _
  $region31: #{_lambda_.13} parent=0 // pred_check_branch
    %466 = sbr.rel (0) target = $region33
  $region32: #{_lambda_.13} parent=0 // pred_region
    _
  $region33: #{_lambda_.13} parent=0 // pred_fallthru
    _
  // Predicated region
  $region34: #{_lambda_.13} parent=0 // pred_check
    _
  $region35: #{_lambda_.13} parent=0 // pred_check_branch
    %468 = sbr.rel (0) target = $region37
  $region36: #{_lambda_.13} parent=0 // pred_region
    _
  $region37: #{_lambda_.13} parent=0 // pred_fallthru
    _

// kernel: _lambda_.12
$region0: #{_lambda_.12}
  #allocation0 [shape = 'u32[]', space=smem, size = 0x4, offset = 0x4, fixed_abs, tag = 'smem constant byte address 0x4 - core index']
  #allocation1 [shape = 'u32[144,128]{1,0:T(1,128)}', space=vmem, size = 0x12000, scoped, tag = 'internal scratch']
  #allocation2 [shape = 'f32[64,128]{1,0:T(8,128)}', space=vmem, size = 0x8000, scoped, tag = 'scratch operand']
  %s0 = inlined_call_operand.vmem [shape: bf16[64,128], index: 0, kind: input, shape index: {}]
  %s1 = inlined_call_operand.vmem [shape: bf16[128,128], index: 1, kind: input, shape index: {}]
  %s2 = inlined_call_operand.vmem [shape: f32[1,128], index: 2, kind: input, shape index: {}]
  %s3 = inlined_call_operand.vmem [shape: bf16[64,128], index: 3, kind: input, shape index: {}]
  %s4 = inlined_call_operand.vmem [shape: bf16[64,128], index: 4, kind: output, shape index: {}]
  %s5 = sld [smem:[#allocation0]]
  $region34: #{_lambda_.12} parent=0
    _
  %s7 = ssub.s32 1, %s5
  %s8 = scalar_select 0, %s7, %s5
  // Predicated region
  $region2: #{_lambda_.12} parent=0 // pred_check
    _
  $region3: #{_lambda_.12} parent=0 // pred_check_branch
    %10 = sbr.rel (0) target = $region5
  $region4: #{_lambda_.12} parent=0 // pred_region
    _
  $region5: #{_lambda_.12} parent=0 // pred_fallthru
    _
  // Predicated region
  $region6: #{_lambda_.12} parent=0 // pred_check
    _
  $region7: #{_lambda_.12} parent=0 // pred_check_branch
    %12 = sbr.rel (0) target = $region9
  $region8: #{_lambda_.12} parent=0 // pred_region
    _
  $region9: #{_lambda_.12} parent=0 // pred_fallthru
    _
  // Predicated region
  $region10: #{_lambda_.12} parent=0 // pred_check
    _
  $region11: #{_lambda_.12} parent=0 // pred_check_branch
    %14 = sbr.rel (0) target = $region13
  $region12: #{_lambda_.12} parent=0 // pred_region
    _
  $region13: #{_lambda_.12} parent=0 // pred_fallthru
    _
  // Predicated region
  $region14: #{_lambda_.12} parent=0 // pred_check
    _
  $region15: #{_lambda_.12} parent=0 // pred_check_branch
    %16 = sbr.rel (0) target = $region17
  $region16: #{_lambda_.12} parent=0 // pred_region
    _
  $region17: #{_lambda_.12} parent=0 // pred_fallthru
    _
  %p18 = scmp.eq.s32.totalorder 0, 0
  // Predicated region
  $region18: #{_lambda_.12} parent=0 // pred_check
    %p19 = pneg %p18
  $region19: #{_lambda_.12} parent=0 // pred_check_branch
    %21 = sbr.rel (%p19) target = $region21
  $region20: #{_lambda_.12} parent=0 // pred_region
    %22 = vst [vmem:[#allocation2] sm:$0xff] 0.0
    %23 = vst [vmem:[#allocation2 + $0x8] sm:$0xff] 0.0
    %24 = vst [vmem:[#allocation2 + $0x10] sm:$0xff] 0.0
    %25 = vst [vmem:[#allocation2 + $0x18] sm:$0xff] 0.0
    %26 = vst [vmem:[#allocation2 + $0x20] sm:$0xff] 0.0
    %27 = vst [vmem:[#allocation2 + $0x28] sm:$0xff] 0.0
    %28 = vst [vmem:[#allocation2 + $0x30] sm:$0xff] 0.0
    %29 = vst [vmem:[#allocation2 + $0x38] sm:$0xff] 0.0
  $region21: #{_lambda_.12} parent=0 // pred_fallthru
    _
  %v30 = vld [vmem:[%s0] sm:$0xf]
  %v31 = vld [vmem:[%s0 + $0x4] sm:$0xf]
  %v32 = vld [vmem:[%s0 + $0x8] sm:$0xf]
  %v33 = vld [vmem:[%s0 + $0xc] sm:$0xf]
  %v34 = vld [vmem:[%s0 + $0x10] sm:$0xf]
  %v35 = vld [vmem:[%s0 + $0x14] sm:$0xf]
  %v36 = vld [vmem:[%s0 + $0x18] sm:$0xf]
  %v37 = vld [vmem:[%s0 + $0x1c] sm:$0xf]
  %v38 = vld [vmem:[#allocation2] sm:$0xff]
  %v39 = vld [vmem:[#allocation2 + $0x8] sm:$0xff]
  %v40 = vld [vmem:[#allocation2 + $0x10] sm:$0xff]
  %v41 = vld [vmem:[#allocation2 + $0x18] sm:$0xff]
  %v42 = vld [vmem:[#allocation2 + $0x20] sm:$0xff]
  %v43 = vld [vmem:[#allocation2 + $0x28] sm:$0xff]
  %v44 = vld [vmem:[#allocation2 + $0x30] sm:$0xff]
  %v45 = vld [vmem:[#allocation2 + $0x38] sm:$0xff]
  %v46 = vld [vmem:[%s1] sm:$0xf]
  %v47 = vld [vmem:[%s1 + $0x4] sm:$0xf]
  %v48 = vld [vmem:[%s1 + $0x8] sm:$0xf]
  %v49 = vld [vmem:[%s1 + $0xc] sm:$0xf]
  %v50 = vld [vmem:[%s1 + $0x10] sm:$0xf]
  %v51 = vld [vmem:[%s1 + $0x14] sm:$0xf]
  %v52 = vld [vmem:[%s1 + $0x18] sm:$0xf]
  %v53 = vld [vmem:[%s1 + $0x1c] sm:$0xf]
  %v54 = vld [vmem:[%s1 + $0x20] sm:$0xf]
  %v55 = vld [vmem:[%s1 + $0x24] sm:$0xf]
  %v56 = vld [vmem:[%s1 + $0x28] sm:$0xf]
  %v57 = vld [vmem:[%s1 + $0x2c] sm:$0xf]
  %v58 = vld [vmem:[%s1 + $0x30] sm:$0xf]
  %v59 = vld [vmem:[%s1 + $0x34] sm:$0xf]
  %v60 = vld [vmem:[%s1 + $0x38] sm:$0xf]
  %v61 = vld [vmem:[%s1 + $0x3c] sm:$0xf]
  %v70 = vunpack.c.l.b16 %v30
  %v71 = vunpack.c.l.b16 %v31
  %v72 = vunpack.c.l.b16 %v32
  %v73 = vunpack.c.l.b16 %v33
  %v74 = vunpack.c.l.b16 %v34
  %v75 = vunpack.c.l.b16 %v35
  %v76 = vunpack.c.l.b16 %v36
  %v77 = vunpack.c.l.b16 %v37
  %v78 = vpack.c.b16 %v71, %v70
  %v79 = vpack.c.b16 %v73, %v72
  %v80 = vpack.c.b16 %v75, %v74
  %v81 = vpack.c.b16 %v77, %v76
  %v102 = vunpack.c.l.b16 %v46
  %v103 = vunpack.c.l.b16 %v47
  %v104 = vunpack.c.l.b16 %v48
  %v105 = vunpack.c.l.b16 %v49
  %v106 = vunpack.c.l.b16 %v50
  %v107 = vunpack.c.l.b16 %v51
  %v108 = vunpack.c.l.b16 %v52
  %v109 = vunpack.c.l.b16 %v53
  %v110 = vunpack.c.l.b16 %v54
  %v111 = vunpack.c.l.b16 %v55
  %v112 = vunpack.c.l.b16 %v56
  %v113 = vunpack.c.l.b16 %v57
  %v114 = vunpack.c.l.b16 %v58
  %v115 = vunpack.c.l.b16 %v59
  %v116 = vunpack.c.l.b16 %v60
  %v117 = vunpack.c.l.b16 %v61
  %v118 = vpack.c.b16 %v103, %v102
  %v119 = vpack.c.b16 %v105, %v104
  %v120 = vpack.c.b16 %v107, %v106
  %v121 = vpack.c.b16 %v109, %v108
  %v122 = vpack.c.b16 %v111, %v110
  %v123 = vpack.c.b16 %v113, %v112
  %v124 = vpack.c.b16 %v115, %v114
  %v125 = vpack.c.b16 %v117, %v116
  %134 = vmatprep.subr.bf16.mxu0 0
  %135 = vmatpush1.bf16.msra.mxu0 %v118
  %136 = vmatprep.subr.bf16.mxu0 0
  %137 = vmatpush1.bf16.msra.mxu0 %v119
  %138 = vmatprep.subr.bf16.mxu0 0
  %139 = vmatpush1.bf16.msra.mxu0 %v120
  %140 = vmatprep.subr.bf16.mxu0 0
  %141 = vmatpush1.bf16.msra.mxu0 %v121
  %142 = vmatprep.subr.bf16.mxu0 0
  %143 = vmatpush1.bf16.msra.mxu0 %v122
  %144 = vmatprep.subr.bf16.mxu0 0
  %145 = vmatpush1.bf16.msra.mxu0 %v123
  %146 = vmatprep.subr.bf16.mxu0 0
  %147 = vmatpush1.bf16.msra.mxu0 %v124
  %148 = vmatprep.subr.bf16.mxu0 0
  %149 = vmatpush1.bf16.msra.mxu0 %v125
  %150 = vmatprep.subr.bf16.mxu0 0
  %151 = vmatpush1.bf16.msra.mxu0 0
  %152 = vmatprep.subr.bf16.mxu0 0
  %153 = vmatpush1.bf16.msra.mxu0 0
  %154 = vmatprep.subr.bf16.mxu0 0
  %155 = vmatpush1.bf16.msra.mxu0 0
  %156 = vmatprep.subr.bf16.mxu0 0
  %157 = vmatpush1.bf16.msra.mxu0 0
  %158 = vmatprep.subr.bf16.mxu0 0
  %159 = vmatpush1.bf16.msra.mxu0 0
  %160 = vmatprep.subr.bf16.mxu0 0
  %161 = vmatpush1.bf16.msra.mxu0 0
  %162 = vmatprep.subr.bf16.mxu0 0
  %163 = vmatpush1.bf16.msra.mxu0 0
  %164 = vmatprep.subr.bf16.mxu0 0
  %165 = vmatpush1.bf16.msra.mxu0 0
  %166 = vmatprep.mubr.bf16.mxu0 0
  %167 = vmatmul.mubr.bf16.gmra.mrb[0].mxu0 %v78
  %v168 = vpop.f32.mrb[0].mxu0
  %v169 = vadd.f32 0.0, %v168
  %v170 = vpop.f32.mrb[0].mxu0
  %v171 = vpop.f32.mrb[0].mxu0
  %v172 = vadd.f32 0.0, %v171
  %v173 = vpop.f32.mrb[0].mxu0
  %174 = vmatprep.mubr.bf16.mxu0 0
  %175 = vmatmul.mubr.bf16.gmra.mrb[0].mxu0 %v79
  %v176 = vpop.f32.mrb[0].mxu0
  %v177 = vadd.f32 0.0, %v176
  %v178 = vpop.f32.mrb[0].mxu0
  %v179 = vpop.f32.mrb[0].mxu0
  %v180 = vadd.f32 0.0, %v179
  %v181 = vpop.f32.mrb[0].mxu0
  %182 = vmatprep.mubr.bf16.mxu0 0
  %183 = vmatmul.mubr.bf16.gmra.mrb[0].mxu0 %v80
  %v184 = vpop.f32.mrb[0].mxu0
  %v185 = vadd.f32 0.0, %v184
  %v186 = vpop.f32.mrb[0].mxu0
  %v187 = vpop.f32.mrb[0].mxu0
  %v188 = vadd.f32 0.0, %v187
  %v189 = vpop.f32.mrb[0].mxu0
  %190 = vmatprep.mubr.bf16.mxu0 0
  %191 = vmatmul.mubr.bf16.gmra.mrb[0].mxu0 %v81
  %v192 = vpop.f32.mrb[0].mxu0
  %v193 = vadd.f32 0.0, %v192
  %v194 = vpop.f32.mrb[0].mxu0
  %v195 = vpop.f32.mrb[0].mxu0
  %v196 = vadd.f32 0.0, %v195
  %v197 = vpop.f32.mrb[0].mxu0
  %198 = vdwg.mxu0
  %v199 = vadd.f32 %v38, %v169
  %v200 = vadd.f32 %v39, %v172
  %v201 = vadd.f32 %v40, %v177
  %v202 = vadd.f32 %v41, %v180
  %v203 = vadd.f32 %v42, %v185
  %v204 = vadd.f32 %v43, %v188
  %v205 = vadd.f32 %v44, %v193
  %v206 = vadd.f32 %v45, %v196
  %207 = vst [vmem:[#allocation2] sm:$0xff] %v199
  %208 = vst [vmem:[#allocation2 + $0x8] sm:$0xff] %v200
  %209 = vst [vmem:[#allocation2 + $0x10] sm:$0xff] %v201
  %210 = vst [vmem:[#allocation2 + $0x18] sm:$0xff] %v202
  %211 = vst [vmem:[#allocation2 + $0x20] sm:$0xff] %v203
  %212 = vst [vmem:[#allocation2 + $0x28] sm:$0xff] %v204
  %213 = vst [vmem:[#allocation2 + $0x30] sm:$0xff] %v205
  %214 = vst [vmem:[#allocation2 + $0x38] sm:$0xff] %v206
  // Predicated region
  $region22: #{_lambda_.12} parent=0 // pred_check
    %p215 = pneg %p18
  $region23: #{_lambda_.12} parent=0 // pred_check_branch
    %217 = sbr.rel (%p215) target = $region25
  $region24: #{_lambda_.12} parent=0 // pred_region
    %v218 = vld [vmem:[#allocation2] sm:$0xff]
    %v219 = vld [vmem:[#allocation2 + $0x8] sm:$0xff]
    %v220 = vld [vmem:[#allocation2 + $0x10] sm:$0xff]
    %v221 = vld [vmem:[#allocation2 + $0x18] sm:$0xff]
    %v222 = vld [vmem:[#allocation2 + $0x20] sm:$0xff]
    %v223 = vld [vmem:[#allocation2 + $0x28] sm:$0xff]
    %v224 = vld [vmem:[#allocation2 + $0x30] sm:$0xff]
    %v225 = vld [vmem:[#allocation2 + $0x38] sm:$0xff]
    %v226 = vld [vmem:[%s2] sm:$0x1]
    %v228 = vlaneseq
    %v229 = vshrl.u32 %v228, 7
    %v230 = vsub.s32 0, %v229
    %v231 = vrot.slane %v226, %v230
    %v233 = vadd.f32 %v218, %v231
    %v234 = vadd.f32 %v219, %v231
    %v235 = vadd.f32 %v220, %v231
    %v236 = vadd.f32 %v221, %v231
    %v237 = vadd.f32 %v222, %v231
    %v238 = vadd.f32 %v223, %v231
    %v239 = vadd.f32 %v224, %v231
    %v240 = vadd.f32 %v225, %v231
    %v241 = vld [vmem:[%s3] sm:$0xf]
    %v242 = vld [vmem:[%s3 + $0x4] sm:$0xf]
    %v243 = vld [vmem:[%s3 + $0x8] sm:$0xf]
    %v244 = vld [vmem:[%s3 + $0xc] sm:$0xf]
    %v245 = vld [vmem:[%s3 + $0x10] sm:$0xf]
    %v246 = vld [vmem:[%s3 + $0x14] sm:$0xf]
    %v247 = vld [vmem:[%s3 + $0x18] sm:$0xf]
    %v248 = vld [vmem:[%s3 + $0x1c] sm:$0xf]
    %v249 = vunpack.c.l.bf16 %v241
    %v250 = vunpack.c.l.bf16 %v242
    %v251 = vunpack.c.l.bf16 %v243
    %v252 = vunpack.c.l.bf16 %v244
    %v253 = vunpack.c.l.bf16 %v245
    %v254 = vunpack.c.l.bf16 %v246
    %v255 = vunpack.c.l.bf16 %v247
    %v256 = vunpack.c.l.bf16 %v248
    %v257 = vadd.f32 %v233, %v249
    %v258 = vadd.f32 %v234, %v250
    %v259 = vadd.f32 %v235, %v251
    %v260 = vadd.f32 %v236, %v252
    %v261 = vadd.f32 %v237, %v253
    %v262 = vadd.f32 %v238, %v254
    %v263 = vadd.f32 %v239, %v255
    %v264 = vadd.f32 %v240, %v256
    %v265 = vpack.c.bf16 %v258, %v257
    %v266 = vpack.c.bf16 %v260, %v259
    %v267 = vpack.c.bf16 %v262, %v261
    %v268 = vpack.c.bf16 %v264, %v263
    %v273 = vunpack.c.l.b16 %v265
    %v274 = vunpack.c.h.b16 %v265
    %v275 = vunpack.c.l.b16 %v266
    %v276 = vunpack.c.h.b16 %v266
    %v277 = vunpack.c.l.b16 %v267
    %v278 = vunpack.c.h.b16 %v267
    %v279 = vunpack.c.l.b16 %v268
    %v280 = vunpack.c.h.b16 %v268
    %v281 = vpack.c.b16 %v273, %v273
    %v282 = vpack.c.b16 %v274, %v274
    %v283 = vpack.c.b16 %v275, %v275
    %v284 = vpack.c.b16 %v276, %v276
    %v285 = vpack.c.b16 %v277, %v277
    %v286 = vpack.c.b16 %v278, %v278
    %v287 = vpack.c.b16 %v279, %v279
    %v288 = vpack.c.b16 %v280, %v280
    %297 = vst [vmem:[%s4] sm:$0xf] %v281
    %298 = vst [vmem:[%s4 + $0x4] sm:$0xf] %v282
    %299 = vst [vmem:[%s4 + $0x8] sm:$0xf] %v283
    %300 = vst [vmem:[%s4 + $0xc] sm:$0xf] %v284
    %301 = vst [vmem:[%s4 + $0x10] sm:$0xf] %v285
    %302 = vst [vmem:[%s4 + $0x14] sm:$0xf] %v286
    %303 = vst [vmem:[%s4 + $0x18] sm:$0xf] %v287
    %304 = vst [vmem:[%s4 + $0x1c] sm:$0xf] %v288
  $region25: #{_lambda_.12} parent=0 // pred_fallthru
    _
  // Predicated region
  $region26: #{_lambda_.12} parent=0 // pred_check
    _
  $region27: #{_lambda_.12} parent=0 // pred_check_branch
    %306 = sbr.rel (0) target = $region29
  $region28: #{_lambda_.12} parent=0 // pred_region
    _
  $region29: #{_lambda_.12} parent=0 // pred_fallthru
    _
  // Predicated region
  $region30: #{_lambda_.12} parent=0 // pred_check
    _
  $region31: #{_lambda_.12} parent=0 // pred_check_branch
    %308 = sbr.rel (0) target = $region33
  $region32: #{_lambda_.12} parent=0 // pred_region
    _
  $region33: #{_lambda_.12} parent=0 // pred_fallthru
    _

// kernel: _lambda_.10
$region0: #{_lambda_.10}
  #allocation0 [shape = 'u32[]', space=smem, size = 0x4, offset = 0x4, fixed_abs, tag = 'smem constant byte address 0x4 - core index']
  #allocation1 [shape = 'u32[144,128]{1,0:T(1,128)}', space=vmem, size = 0x12000, scoped, tag = 'internal scratch']
  #allocation2 [shape = 'f32[64,384]{1,0:T(8,128)}', space=vmem, size = 0x18000, scoped, tag = 'scratch operand']
  %s0 = inlined_call_operand.vmem [shape: bf16[64,128], index: 0, kind: input, shape index: {}]
  %s1 = inlined_call_operand.vmem [shape: bf16[128,384], index: 1, kind: input, shape index: {}]
  %s2 = inlined_call_operand.vmem [shape: f32[1,384], index: 2, kind: input, shape index: {}]
  %s3 = inlined_call_operand.vmem [shape: f32[1,128], index: 3, kind: input, shape index: {}]
  %s4 = inlined_call_operand.vmem [shape: f32[1,128], index: 4, kind: input, shape index: {}]
  %s5 = inlined_call_operand.vmem [shape: bf16[64,384], index: 5, kind: output, shape index: {}]
  %s6 = sld [smem:[#allocation0]]
  $region38: #{_lambda_.10} parent=0
    _
  %s8 = ssub.s32 1, %s6
  %s9 = scalar_select 0, %s8, %s6
  // Predicated region
  $region2: #{_lambda_.10} parent=0 // pred_check
    _
  $region3: #{_lambda_.10} parent=0 // pred_check_branch
    %11 = sbr.rel (0) target = $region5
  $region4: #{_lambda_.10} parent=0 // pred_region
    _
  $region5: #{_lambda_.10} parent=0 // pred_fallthru
    _
  // Predicated region
  $region6: #{_lambda_.10} parent=0 // pred_check
    _
  $region7: #{_lambda_.10} parent=0 // pred_check_branch
    %13 = sbr.rel (0) target = $region9
  $region8: #{_lambda_.10} parent=0 // pred_region
    _
  $region9: #{_lambda_.10} parent=0 // pred_fallthru
    _
  // Predicated region
  $region10: #{_lambda_.10} parent=0 // pred_check
    _
  $region11: #{_lambda_.10} parent=0 // pred_check_branch
    %15 = sbr.rel (0) target = $region13
  $region12: #{_lambda_.10} parent=0 // pred_region
    _
  $region13: #{_lambda_.10} parent=0 // pred_fallthru
    _
  // Predicated region
  $region14: #{_lambda_.10} parent=0 // pred_check
    _
  $region15: #{_lambda_.10} parent=0 // pred_check_branch
    %17 = sbr.rel (0) target = $region17
  $region16: #{_lambda_.10} parent=0 // pred_region
    _
  $region17: #{_lambda_.10} parent=0 // pred_fallthru
    _
  // Predicated region
  $region18: #{_lambda_.10} parent=0 // pred_check
    _
  $region19: #{_lambda_.10} parent=0 // pred_check_branch
    %19 = sbr.rel (0) target = $region21
  $region20: #{_lambda_.10} parent=0 // pred_region
    _
  $region21: #{_lambda_.10} parent=0 // pred_fallthru
    _
  %p21 = scmp.eq.s32.totalorder 0, 0
  // Predicated region
  $region22: #{_lambda_.10} parent=0 // pred_check
    %p22 = pneg %p21
  $region23: #{_lambda_.10} parent=0 // pred_check_branch
    %24 = sbr.rel (%p22) target = $region25
  $region24: #{_lambda_.10} parent=0 // pred_region
    %25 = vst [vmem:[#allocation2] sm:$0xff] 0.0
    %26 = vst [vmem:[#allocation2 + $0x8] sm:$0xff] 0.0
    %27 = vst [vmem:[#allocation2 + $0x10] sm:$0xff] 0.0
    %28 = vst [vmem:[#allocation2 + $0x18] sm:$0xff] 0.0
    %29 = vst [vmem:[#allocation2 + $0x20] sm:$0xff] 0.0
    %30 = vst [vmem:[#allocation2 + $0x28] sm:$0xff] 0.0
    %31 = vst [vmem:[#allocation2 + $0x30] sm:$0xff] 0.0
    %32 = vst [vmem:[#allocation2 + $0x38] sm:$0xff] 0.0
    %33 = vst [vmem:[#allocation2 + $0x40] sm:$0xff] 0.0
    %34 = vst [vmem:[#allocation2 + $0x48] sm:$0xff] 0.0
    %35 = vst [vmem:[#allocation2 + $0x50] sm:$0xff] 0.0
    %36 = vst [vmem:[#allocation2 + $0x58] sm:$0xff] 0.0
    %37 = vst [vmem:[#allocation2 + $0x60] sm:$0xff] 0.0
    %38 = vst [vmem:[#allocation2 + $0x68] sm:$0xff] 0.0
    %39 = vst [vmem:[#allocation2 + $0x70] sm:$0xff] 0.0
    %40 = vst [vmem:[#allocation2 + $0x78] sm:$0xff] 0.0
    %41 = vst [vmem:[#allocation2 + $0x80] sm:$0xff] 0.0
    %42 = vst [vmem:[#allocation2 + $0x88] sm:$0xff] 0.0
    %43 = vst [vmem:[#allocation2 + $0x90] sm:$0xff] 0.0
    %44 = vst [vmem:[#allocation2 + $0x98] sm:$0xff] 0.0
    %45 = vst [vmem:[#allocation2 + $0xa0] sm:$0xff] 0.0
    %46 = vst [vmem:[#allocation2 + $0xa8] sm:$0xff] 0.0
    %47 = vst [vmem:[#allocation2 + $0xb0] sm:$0xff] 0.0
    %48 = vst [vmem:[#allocation2 + $0xb8] sm:$0xff] 0.0
  $region25: #{_lambda_.10} parent=0 // pred_fallthru
    _
  %v49 = vld [vmem:[%s0] sm:$0xf]
  %v50 = vld [vmem:[%s0 + $0x4] sm:$0xf]
  %v51 = vld [vmem:[%s0 + $0x8] sm:$0xf]
  %v52 = vld [vmem:[%s0 + $0xc] sm:$0xf]
  %v53 = vld [vmem:[%s0 + $0x10] sm:$0xf]
  %v54 = vld [vmem:[%s0 + $0x14] sm:$0xf]
  %v55 = vld [vmem:[%s0 + $0x18] sm:$0xf]
  %v56 = vld [vmem:[%s0 + $0x1c] sm:$0xf]
  %v57 = vunpack.c.l.bf16 %v49
  %v58 = vunpack.c.l.bf16 %v50
  %v59 = vunpack.c.l.bf16 %v51
  %v60 = vunpack.c.l.bf16 %v52
  %v61 = vunpack.c.l.bf16 %v53
  %v62 = vunpack.c.l.bf16 %v54
  %v63 = vunpack.c.l.bf16 %v55
  %v64 = vunpack.c.l.bf16 %v56
  %v65 = vlaneseq
  %v66 = vand.u32 %v65, 127
  %vm67 = vcmp.lt.s32.totalorder %v66, 32
  %v68 = vsel %vm67, %v57, 0.0
  %v69 = vsel %vm67, %v58, 0.0
  %v70 = vsel %vm67, %v59, 0.0
  %v71 = vsel %vm67, %v60, 0.0
  %v72 = vsel %vm67, %v61, 0.0
  %v73 = vsel %vm67, %v62, 0.0
  %v74 = vsel %vm67, %v63, 0.0
  %v75 = vsel %vm67, %v64, 0.0
  %76 = vadd.xlane.f32.xlu0 %v68
  %v77 = vpop.xlane.xlu0 %76
  %78 = vadd.xlane.f32.xlu0 %v69
  %v79 = vpop.xlane.xlu0 %78
  %80 = vadd.xlane.f32.xlu0 %v70
  %v81 = vpop.xlane.xlu0 %80
  %82 = vadd.xlane.f32.xlu0 %v71
  %v83 = vpop.xlane.xlu0 %82
  %84 = vadd.xlane.f32.xlu0 %v72
  %v85 = vpop.xlane.xlu0 %84
  %86 = vadd.xlane.f32.xlu0 %v73
  %v87 = vpop.xlane.xlu0 %86
  %88 = vadd.xlane.f32.xlu0 %v74
  %v89 = vpop.xlane.xlu0 %88
  %90 = vadd.xlane.f32.xlu0 %v75
  %v91 = vpop.xlane.xlu0 %90
  %v92 = vmul.f32 %v77, 0.03125
  %v93 = vmul.f32 %v79, 0.03125
  %v94 = vmul.f32 %v81, 0.03125
  %v95 = vmul.f32 %v83, 0.03125
  %v96 = vmul.f32 %v85, 0.03125
  %v97 = vmul.f32 %v87, 0.03125
  %v98 = vmul.f32 %v89, 0.03125
  %v99 = vmul.f32 %v91, 0.03125
  %v100 = vsub.f32 %v57, %v92
  %v101 = vsub.f32 %v58, %v93
  %v102 = vsub.f32 %v59, %v94
  %v103 = vsub.f32 %v60, %v95
  %v104 = vsub.f32 %v61, %v96
  %v105 = vsub.f32 %v62, %v97
  %v106 = vsub.f32 %v63, %v98
  %v107 = vsub.f32 %v64, %v99
  %v108 = vsel %vm67, %v100, 0.0
  %v109 = vsel %vm67, %v101, 0.0
  %v110 = vsel %vm67, %v102, 0.0
  %v111 = vsel %vm67, %v103, 0.0
  %v112 = vsel %vm67, %v104, 0.0
  %v113 = vsel %vm67, %v105, 0.0
  %v114 = vsel %vm67, %v106, 0.0
  %v115 = vsel %vm67, %v107, 0.0
  %v116 = vmul.f32 %v108, %v108
  %v117 = vmul.f32 %v109, %v109
  %v118 = vmul.f32 %v110, %v110
  %v119 = vmul.f32 %v111, %v111
  %v120 = vmul.f32 %v112, %v112
  %v121 = vmul.f32 %v113, %v113
  %v122 = vmul.f32 %v114, %v114
  %v123 = vmul.f32 %v115, %v115
  %124 = vadd.xlane.f32.xlu0 %v116
  %v125 = vpop.xlane.xlu0 %124
  %126 = vadd.xlane.f32.xlu0 %v117
  %v127 = vpop.xlane.xlu0 %126
  %128 = vadd.xlane.f32.xlu0 %v118
  %v129 = vpop.xlane.xlu0 %128
  %130 = vadd.xlane.f32.xlu0 %v119
  %v131 = vpop.xlane.xlu0 %130
  %132 = vadd.xlane.f32.xlu0 %v120
  %v133 = vpop.xlane.xlu0 %132
  %134 = vadd.xlane.f32.xlu0 %v121
  %v135 = vpop.xlane.xlu0 %134
  %136 = vadd.xlane.f32.xlu0 %v122
  %v137 = vpop.xlane.xlu0 %136
  %138 = vadd.xlane.f32.xlu0 %v123
  %v139 = vpop.xlane.xlu0 %138
  %v140 = vmul.f32 %v125, 0.03125
  %v141 = vmul.f32 %v127, 0.03125
  %v142 = vmul.f32 %v129, 0.03125
  %v143 = vmul.f32 %v131, 0.03125
  %v144 = vmul.f32 %v133, 0.03125
  %v145 = vmul.f32 %v135, 0.03125
  %v146 = vmul.f32 %v137, 0.03125
  %v147 = vmul.f32 %v139, 0.03125
  %v148 = vadd.f32 %v140, 1e-05
  %v149 = vadd.f32 %v141, 1e-05
  %v150 = vadd.f32 %v142, 1e-05
  %v151 = vadd.f32 %v143, 1e-05
  %v152 = vadd.f32 %v144, 1e-05
  %v153 = vadd.f32 %v145, 1e-05
  %v154 = vadd.f32 %v146, 1e-05
  %v155 = vadd.f32 %v147, 1e-05
  %v156 = vrsqrt.pop %v148
  %v157 = vrsqrt.pop %v149
  %v158 = vrsqrt.pop %v150
  %v159 = vrsqrt.pop %v151
  %v160 = vrsqrt.pop %v152
  %v161 = vrsqrt.pop %v153
  %v162 = vrsqrt.pop %v154
  %v163 = vrsqrt.pop %v155
  %v164 = vmul.f32 %v108, %v156
  %v165 = vmul.f32 %v109, %v157
  %v166 = vmul.f32 %v110, %v158
  %v167 = vmul.f32 %v111, %v159
  %v168 = vmul.f32 %v112, %v160
  %v169 = vmul.f32 %v113, %v161
  %v170 = vmul.f32 %v114, %v162
  %v171 = vmul.f32 %v115, %v163
  %v172 = vld [vmem:[%s3] sm:$0x1]
  %v174 = vlaneseq
  %v175 = vshrl.u32 %v174, 7
  %v176 = vsub.s32 0, %v175
  %v177 = vrot.slane %v172, %v176
  %v179 = vmul.f32 %v164, %v177
  %v180 = vmul.f32 %v165, %v177
  %v181 = vmul.f32 %v166, %v177
  %v182 = vmul.f32 %v167, %v177
  %v183 = vmul.f32 %v168, %v177
  %v184 = vmul.f32 %v169, %v177
  %v185 = vmul.f32 %v170, %v177
  %v186 = vmul.f32 %v171, %v177
  %v187 = vld [vmem:[%s4] sm:$0x1]
  %v189 = vlaneseq
  %v190 = vshrl.u32 %v189, 7
  %v191 = vsub.s32 0, %v190
  %v192 = vrot.slane %v187, %v191
  %v194 = vadd.f32 %v179, %v192
  %v195 = vadd.f32 %v180, %v192
  %v196 = vadd.f32 %v181, %v192
  %v197 = vadd.f32 %v182, %v192
  %v198 = vadd.f32 %v183, %v192
  %v199 = vadd.f32 %v184, %v192
  %v200 = vadd.f32 %v185, %v192
  %v201 = vadd.f32 %v186, %v192
  %v202 = vpack.c.bf16 %v195, %v194
  %v203 = vpack.c.bf16 %v197, %v196
  %v204 = vpack.c.bf16 %v199, %v198
  %v205 = vpack.c.bf16 %v201, %v200
  %v206 = vld [vmem:[#allocation2] sm:$0xff]
  %v207 = vld [vmem:[#allocation2 + $0x8] sm:$0xff]
  %v208 = vld [vmem:[#allocation2 + $0x10] sm:$0xff]
  %v209 = vld [vmem:[#allocation2 + $0x18] sm:$0xff]
  %v210 = vld [vmem:[#allocation2 + $0x20] sm:$0xff]
  %v211 = vld [vmem:[#allocation2 + $0x28] sm:$0xff]
  %v212 = vld [vmem:[#allocation2 + $0x30] sm:$0xff]
  %v213 = vld [vmem:[#allocation2 + $0x38] sm:$0xff]
  %v214 = vld [vmem:[#allocation2 + $0x40] sm:$0xff]
  %v215 = vld [vmem:[#allocation2 + $0x48] sm:$0xff]
  %v216 = vld [vmem:[#allocation2 + $0x50] sm:$0xff]
  %v217 = vld [vmem:[#allocation2 + $0x58] sm:$0xff]
  %v218 = vld [vmem:[#allocation2 + $0x60] sm:$0xff]
  %v219 = vld [vmem:[#allocation2 + $0x68] sm:$0xff]
  %v220 = vld [vmem:[#allocation2 + $0x70] sm:$0xff]
  %v221 = vld [vmem:[#allocation2 + $0x78] sm:$0xff]
  %v222 = vld [vmem:[#allocation2 + $0x80] sm:$0xff]
  %v223 = vld [vmem:[#allocation2 + $0x88] sm:$0xff]
  %v224 = vld [vmem:[#allocation2 + $0x90] sm:$0xff]
  %v225 = vld [vmem:[#allocation2 + $0x98] sm:$0xff]
  %v226 = vld [vmem:[#allocation2 + $0xa0] sm:$0xff]
  %v227 = vld [vmem:[#allocation2 + $0xa8] sm:$0xff]
  %v228 = vld [vmem:[#allocation2 + $0xb0] sm:$0xff]
  %v229 = vld [vmem:[#allocation2 + $0xb8] sm:$0xff]
  %v230 = vld [vmem:[%s1] sm:$0xff]
  %v231 = vld [vmem:[%s1 + $0x8] sm:$0xf]
  %v232 = vld [vmem:[%s1 + $0xc] sm:$0xff]
  %v233 = vld [vmem:[%s1 + $0x14] sm:$0xf]
  %v234 = vld [vmem:[%s1 + $0x18] sm:$0xff]
  %v235 = vld [vmem:[%s1 + $0x20] sm:$0xf]
  %v236 = vld [vmem:[%s1 + $0x24] sm:$0xff]
  %v237 = vld [vmem:[%s1 + $0x2c] sm:$0xf]
  %v238 = vld [vmem:[%s1 + $0x30] sm:$0xff]
  %v239 = vld [vmem:[%s1 + $0x38] sm:$0xf]
  %v240 = vld [vmem:[%s1 + $0x3c] sm:$0xff]
  %v241 = vld [vmem:[%s1 + $0x44] sm:$0xf]
  %v242 = vld [vmem:[%s1 + $0x48] sm:$0xff]
  %v243 = vld [vmem:[%s1 + $0x50] sm:$0xf]
  %v244 = vld [vmem:[%s1 + $0x54] sm:$0xff]
  %v245 = vld [vmem:[%s1 + $0x5c] sm:$0xf]
  %v246 = vld [vmem:[%s1 + $0x60] sm:$0xff]
  %v247 = vld [vmem:[%s1 + $0x68] sm:$0xf]
  %v248 = vld [vmem:[%s1 + $0x6c] sm:$0xff]
  %v249 = vld [vmem:[%s1 + $0x74] sm:$0xf]
  %v250 = vld [vmem:[%s1 + $0x78] sm:$0xff]
  %v251 = vld [vmem:[%s1 + $0x80] sm:$0xf]
  %v252 = vld [vmem:[%s1 + $0x84] sm:$0xff]
  %v253 = vld [vmem:[%s1 + $0x8c] sm:$0xf]
  %v254 = vld [vmem:[%s1 + $0x90] sm:$0xff]
  %v255 = vld [vmem:[%s1 + $0x98] sm:$0xf]
  %v256 = vld [vmem:[%s1 + $0x9c] sm:$0xff]
  %v257 = vld [vmem:[%s1 + $0xa4] sm:$0xf]
  %v258 = vld [vmem:[%s1 + $0xa8] sm:$0xff]
  %v259 = vld [vmem:[%s1 + $0xb0] sm:$0xf]
  %v260 = vld [vmem:[%s1 + $0xb4] sm:$0xff]
  %v261 = vld [vmem:[%s1 + $0xbc] sm:$0xf]
  %v294 = vunpack.c.l.b16 %v230
  %v295 = vunpack.c.h.b16 %v230
  %v296 = vunpack.c.l.b16 %v231
  %v297 = vunpack.c.l.b16 %v232
  %v298 = vunpack.c.h.b16 %v232
  %v299 = vunpack.c.l.b16 %v233
  %v300 = vunpack.c.l.b16 %v234
  %v301 = vunpack.c.h.b16 %v234
  %v302 = vunpack.c.l.b16 %v235
  %v303 = vunpack.c.l.b16 %v236
  %v304 = vunpack.c.h.b16 %v236
  %v305 = vunpack.c.l.b16 %v237
  %v306 = vunpack.c.l.b16 %v238
  %v307 = vunpack.c.h.b16 %v238
  %v308 = vunpack.c.l.b16 %v239
  %v309 = vunpack.c.l.b16 %v240
  %v310 = vunpack.c.h.b16 %v240
  %v311 = vunpack.c.l.b16 %v241
  %v312 = vunpack.c.l.b16 %v242
  %v313 = vunpack.c.h.b16 %v242
  %v314 = vunpack.c.l.b16 %v243
  %v315 = vunpack.c.l.b16 %v244
  %v316 = vunpack.c.h.b16 %v244
  %v317 = vunpack.c.l.b16 %v245
  %v318 = vunpack.c.l.b16 %v246
  %v319 = vunpack.c.h.b16 %v246
  %v320 = vunpack.c.l.b16 %v247
  %v321 = vunpack.c.l.b16 %v248
  %v322 = vunpack.c.h.b16 %v248
  %v323 = vunpack.c.l.b16 %v249
  %v324 = vunpack.c.l.b16 %v250
  %v325 = vunpack.c.h.b16 %v250
  %v326 = vunpack.c.l.b16 %v251
  %v327 = vunpack.c.l.b16 %v252
  %v328 = vunpack.c.h.b16 %v252
  %v329 = vunpack.c.l.b16 %v253
  %v330 = vunpack.c.l.b16 %v254
  %v331 = vunpack.c.h.b16 %v254
  %v332 = vunpack.c.l.b16 %v255
  %v333 = vunpack.c.l.b16 %v256
  %v334 = vunpack.c.h.b16 %v256
  %v335 = vunpack.c.l.b16 %v257
  %v336 = vunpack.c.l.b16 %v258
  %v337 = vunpack.c.h.b16 %v258
  %v338 = vunpack.c.l.b16 %v259
  %v339 = vunpack.c.l.b16 %v260
  %v340 = vunpack.c.h.b16 %v260
  %v341 = vunpack.c.l.b16 %v261
  %v342 = vpack.c.b16 %v297, %v294
  %v343 = vpack.c.b16 %v298, %v295
  %v344 = vpack.c.b16 %v299, %v296
  %v345 = vpack.c.b16 %v303, %v300
  %v346 = vpack.c.b16 %v304, %v301
  %v347 = vpack.c.b16 %v305, %v302
  %v348 = vpack.c.b16 %v309, %v306
  %v349 = vpack.c.b16 %v310, %v307
  %v350 = vpack.c.b16 %v311, %v308
  %v351 = vpack.c.b16 %v315, %v312
  %v352 = vpack.c.b16 %v316, %v313
  %v353 = vpack.c.b16 %v317, %v314
  %v354 = vpack.c.b16 %v321, %v318
  %v355 = vpack.c.b16 %v322, %v319
  %v356 = vpack.c.b16 %v323, %v320
  %v357 = vpack.c.b16 %v327, %v324
  %v358 = vpack.c.b16 %v328, %v325
  %v359 = vpack.c.b16 %v329, %v326
  %v360 = vpack.c.b16 %v333, %v330
  %v361 = vpack.c.b16 %v334, %v331
  %v362 = vpack.c.b16 %v335, %v332
  %v363 = vpack.c.b16 %v339, %v336
  %v364 = vpack.c.b16 %v340, %v337
  %v365 = vpack.c.b16 %v341, %v338
  %390 = vmatprep.subr.bf16.mxu0 %v343
  %391 = vmatpush1.bf16.msra.mxu0 %v342
  %392 = vmatprep.subr.bf16.mxu0 %v346
  %393 = vmatpush1.bf16.msra.mxu0 %v345
  %394 = vmatprep.subr.bf16.mxu0 %v349
  %395 = vmatpush1.bf16.msra.mxu0 %v348
  %396 = vmatprep.subr.bf16.mxu0 %v352
  %397 = vmatpush1.bf16.msra.mxu0 %v351
  %398 = vmatprep.subr.bf16.mxu0 %v355
  %399 = vmatpush1.bf16.msra.mxu0 %v354
  %400 = vmatprep.subr.bf16.mxu0 %v358
  %401 = vmatpush1.bf16.msra.mxu0 %v357
  %402 = vmatprep.subr.bf16.mxu0 %v361
  %403 = vmatpush1.bf16.msra.mxu0 %v360
  %404 = vmatprep.subr.bf16.mxu0 %v364
  %405 = vmatpush1.bf16.msra.mxu0 %v363
  %406 = vmatprep.subr.bf16.mxu0 0
  %407 = vmatpush1.bf16.msra.mxu0 0
  %408 = vmatprep.subr.bf16.mxu0 0
  %409 = vmatpush1.bf16.msra.mxu0 0
  %410 = vmatprep.subr.bf16.mxu0 0
  %411 = vmatpush1.bf16.msra.mxu0 0
  %412 = vmatprep.subr.bf16.mxu0 0
  %413 = vmatpush1.bf16.msra.mxu0 0
  %414 = vmatprep.subr.bf16.mxu0 0
  %415 = vmatpush1.bf16.msra.mxu0 0
  %416 = vmatprep.subr.bf16.mxu0 0
  %417 = vmatpush1.bf16.msra.mxu0 0
  %418 = vmatprep.subr.bf16.mxu0 0
  %419 = vmatpush1.bf16.msra.mxu0 0
  %420 = vmatprep.subr.bf16.mxu0 0
  %421 = vmatpush1.bf16.msra.mxu0 0
  %422 = vmatprep.mubr.bf16.mxu0 0
  %423 = vmatmul.mubr.bf16.gmra.mrb[0].mxu0 %v202
  %v424 = vpop.f32.mrb[0].mxu0
  %v425 = vadd.f32 0.0, %v424
  %v426 = vpop.f32.mrb[0].mxu0
  %v427 = vadd.f32 0.0, %v426
  %v428 = vpop.f32.mrb[0].mxu0
  %v429 = vadd.f32 0.0, %v428
  %v430 = vpop.f32.mrb[0].mxu0
  %v431 = vadd.f32 0.0, %v430
  %432 = vmatprep.mubr.bf16.mxu0 0
  %433 = vmatmul.mubr.bf16.gmra.mrb[0].mxu0 %v203
  %v434 = vpop.f32.mrb[0].mxu0
  %v435 = vadd.f32 0.0, %v434
  %v436 = vpop.f32.mrb[0].mxu0
  %v437 = vadd.f32 0.0, %v436
  %v438 = vpop.f32.mrb[0].mxu0
  %v439 = vadd.f32 0.0, %v438
  %v440 = vpop.f32.mrb[0].mxu0
  %v441 = vadd.f32 0.0, %v440
  %442 = vmatprep.mubr.bf16.mxu0 0
  %443 = vmatmul.mubr.bf16.gmra.mrb[0].mxu0 %v204
  %v444 = vpop.f32.mrb[0].mxu0
  %v445 = vadd.f32 0.0, %v444
  %v446 = vpop.f32.mrb[0].mxu0
  %v447 = vadd.f32 0.0, %v446
  %v448 = vpop.f32.mrb[0].mxu0
  %v449 = vadd.f32 0.0, %v448
  %v450 = vpop.f32.mrb[0].mxu0
  %v451 = vadd.f32 0.0, %v450
  %452 = vmatprep.mubr.bf16.mxu0 0
  %453 = vmatmul.mubr.bf16.gmra.mrb[0].mxu0 %v205
  %v454 = vpop.f32.mrb[0].mxu0
  %v455 = vadd.f32 0.0, %v454
  %v456 = vpop.f32.mrb[0].mxu0
  %v457 = vadd.f32 0.0, %v456
  %v458 = vpop.f32.mrb[0].mxu0
  %v459 = vadd.f32 0.0, %v458
  %v460 = vpop.f32.mrb[0].mxu0
  %v461 = vadd.f32 0.0, %v460
  %462 = vdwg.mxu0
  %463 = vmatprep.subr.bf16.mxu0 0
  %464 = vmatpush1.bf16.msra.mxu0 %v344
  %465 = vmatprep.subr.bf16.mxu0 0
  %466 = vmatpush1.bf16.msra.mxu0 %v347
  %467 = vmatprep.subr.bf16.mxu0 0
  %468 = vmatpush1.bf16.msra.mxu0 %v350
  %469 = vmatprep.subr.bf16.mxu0 0
  %470 = vmatpush1.bf16.msra.mxu0 %v353
  %471 = vmatprep.subr.bf16.mxu0 0
  %472 = vmatpush1.bf16.msra.mxu0 %v356
  %473 = vmatprep.subr.bf16.mxu0 0
  %474 = vmatpush1.bf16.msra.mxu0 %v359
  %475 = vmatprep.subr.bf16.mxu0 0
  %476 = vmatpush1.bf16.msra.mxu0 %v362
  %477 = vmatprep.subr.bf16.mxu0 0
  %478 = vmatpush1.bf16.msra.mxu0 %v365
  %479 = vmatprep.subr.bf16.mxu0 0
  %480 = vmatpush1.bf16.msra.mxu0 0
  %481 = vmatprep.subr.bf16.mxu0 0
  %482 = vmatpush1.bf16.msra.mxu0 0
  %483 = vmatprep.subr.bf16.mxu0 0
  %484 = vmatpush1.bf16.msra.mxu0 0
  %485 = vmatprep.subr.bf16.mxu0 0
  %486 = vmatpush1.bf16.msra.mxu0 0
  %487 = vmatprep.subr.bf16.mxu0 0
  %488 = vmatpush1.bf16.msra.mxu0 0
  %489 = vmatprep.subr.bf16.mxu0 0
  %490 = vmatpush1.bf16.msra.mxu0 0
  %491 = vmatprep.subr.bf16.mxu0 0
  %492 = vmatpush1.bf16.msra.mxu0 0
  %493 = vmatprep.subr.bf16.mxu0 0
  %494 = vmatpush1.bf16.msra.mxu0 0
  %495 = vmatprep.mubr.bf16.mxu0 0
  %496 = vmatmul.mubr.bf16.gmra.mrb[0].mxu0 %v202
  %v497 = vpop.f32.mrb[0].mxu0
  %v498 = vadd.f32 0.0, %v497
  %v499 = vpop.f32.mrb[0].mxu0
  %v500 = vpop.f32.mrb[0].mxu0
  %v501 = vadd.f32 0.0, %v500
  %v502 = vpop.f32.mrb[0].mxu0
  %503 = vmatprep.mubr.bf16.mxu0 0
  %504 = vmatmul.mubr.bf16.gmra.mrb[0].mxu0 %v203
  %v505 = vpop.f32.mrb[0].mxu0
  %v506 = vadd.f32 0.0, %v505
  %v507 = vpop.f32.mrb[0].mxu0
  %v508 = vpop.f32.mrb[0].mxu0
  %v509 = vadd.f32 0.0, %v508
  %v510 = vpop.f32.mrb[0].mxu0
  %511 = vmatprep.mubr.bf16.mxu0 0
  %512 = vmatmul.mubr.bf16.gmra.mrb[0].mxu0 %v204
  %v513 = vpop.f32.mrb[0].mxu0
  %v514 = vadd.f32 0.0, %v513
  %v515 = vpop.f32.mrb[0].mxu0
  %v516 = vpop.f32.mrb[0].mxu0
  %v517 = vadd.f32 0.0, %v516
  %v518 = vpop.f32.mrb[0].mxu0
  %519 = vmatprep.mubr.bf16.mxu0 0
  %520 = vmatmul.mubr.bf16.gmra.mrb[0].mxu0 %v205
  %v521 = vpop.f32.mrb[0].mxu0
  %v522 = vadd.f32 0.0, %v521
  %v523 = vpop.f32.mrb[0].mxu0
  %v524 = vpop.f32.mrb[0].mxu0
  %v525 = vadd.f32 0.0, %v524
  %v526 = vpop.f32.mrb[0].mxu0
  %527 = vdwg.mxu0
  %v528 = vadd.f32 %v206, %v425
  %v529 = vadd.f32 %v207, %v427
  %v530 = vadd.f32 %v208, %v498
  %v531 = vadd.f32 %v209, %v429
  %v532 = vadd.f32 %v210, %v431
  %v533 = vadd.f32 %v211, %v501
  %v534 = vadd.f32 %v212, %v435
  %v535 = vadd.f32 %v213, %v437
  %v536 = vadd.f32 %v214, %v506
  %v537 = vadd.f32 %v215, %v439
  %v538 = vadd.f32 %v216, %v441
  %v539 = vadd.f32 %v217, %v509
  %v540 = vadd.f32 %v218, %v445
  %v541 = vadd.f32 %v219, %v447
  %v542 = vadd.f32 %v220, %v514
  %v543 = vadd.f32 %v221, %v449
  %v544 = vadd.f32 %v222, %v451
  %v545 = vadd.f32 %v223, %v517
  %v546 = vadd.f32 %v224, %v455
  %v547 = vadd.f32 %v225, %v457
  %v548 = vadd.f32 %v226, %v522
  %v549 = vadd.f32 %v227, %v459
  %v550 = vadd.f32 %v228, %v461
  %v551 = vadd.f32 %v229, %v525
  %552 = vst [vmem:[#allocation2] sm:$0xff] %v528
  %553 = vst [vmem:[#allocation2 + $0x8] sm:$0xff] %v529
  %554 = vst [vmem:[#allocation2 + $0x10] sm:$0xff] %v530
  %555 = vst [vmem:[#allocation2 + $0x18] sm:$0xff] %v531
  %556 = vst [vmem:[#allocation2 + $0x20] sm:$0xff] %v532
  %557 = vst [vmem:[#allocation2 + $0x28] sm:$0xff] %v533
  %558 = vst [vmem:[#allocation2 + $0x30] sm:$0xff] %v534
  %559 = vst [vmem:[#allocation2 + $0x38] sm:$0xff] %v535
  %560 = vst [vmem:[#allocation2 + $0x40] sm:$0xff] %v536
  %561 = vst [vmem:[#allocation2 + $0x48] sm:$0xff] %v537
  %562 = vst [vmem:[#allocation2 + $0x50] sm:$0xff] %v538
  %563 = vst [vmem:[#allocation2 + $0x58] sm:$0xff] %v539
  %564 = vst [vmem:[#allocation2 + $0x60] sm:$0xff] %v540
  %565 = vst [vmem:[#allocation2 + $0x68] sm:$0xff] %v541
  %566 = vst [vmem:[#allocation2 + $0x70] sm:$0xff] %v542
  %567 = vst [vmem:[#allocation2 + $0x78] sm:$0xff] %v543
  %568 = vst [vmem:[#allocation2 + $0x80] sm:$0xff] %v544
  %569 = vst [vmem:[#allocation2 + $0x88] sm:$0xff] %v545
  %570 = vst [vmem:[#allocation2 + $0x90] sm:$0xff] %v546
  %571 = vst [vmem:[#allocation2 + $0x98] sm:$0xff] %v547
  %572 = vst [vmem:[#allocation2 + $0xa0] sm:$0xff] %v548
  %573 = vst [vmem:[#allocation2 + $0xa8] sm:$0xff] %v549
  %574 = vst [vmem:[#allocation2 + $0xb0] sm:$0xff] %v550
  %575 = vst [vmem:[#allocation2 + $0xb8] sm:$0xff] %v551
  // Predicated region
  $region26: #{_lambda_.10} parent=0 // pred_check
    %p576 = pneg %p21
  $region27: #{_lambda_.10} parent=0 // pred_check_branch
    %578 = sbr.rel (%p576) target = $region29
  $region28: #{_lambda_.10} parent=0 // pred_region
    %v579 = vld [vmem:[#allocation2] sm:$0xff]
    %v580 = vld [vmem:[#allocation2 + $0x8] sm:$0xff]
    %v581 = vld [vmem:[#allocation2 + $0x10] sm:$0xff]
    %v582 = vld [vmem:[#allocation2 + $0x18] sm:$0xff]
    %v583 = vld [vmem:[#allocation2 + $0x20] sm:$0xff]
    %v584 = vld [vmem:[#allocation2 + $0x28] sm:$0xff]
    %v585 = vld [vmem:[#allocation2 + $0x30] sm:$0xff]
    %v586 = vld [vmem:[#allocation2 + $0x38] sm:$0xff]
    %v587 = vld [vmem:[#allocation2 + $0x40] sm:$0xff]
    %v588 = vld [vmem:[#allocation2 + $0x48] sm:$0xff]
    %v589 = vld [vmem:[#allocation2 + $0x50] sm:$0xff]
    %v590 = vld [vmem:[#allocation2 + $0x58] sm:$0xff]
    %v591 = vld [vmem:[#allocation2 + $0x60] sm:$0xff]
    %v592 = vld [vmem:[#allocation2 + $0x68] sm:$0xff]
    %v593 = vld [vmem:[#allocation2 + $0x70] sm:$0xff]
    %v594 = vld [vmem:[#allocation2 + $0x78] sm:$0xff]
    %v595 = vld [vmem:[#allocation2 + $0x80] sm:$0xff]
    %v596 = vld [vmem:[#allocation2 + $0x88] sm:$0xff]
    %v597 = vld [vmem:[#allocation2 + $0x90] sm:$0xff]
    %v598 = vld [vmem:[#allocation2 + $0x98] sm:$0xff]
    %v599 = vld [vmem:[#allocation2 + $0xa0] sm:$0xff]
    %v600 = vld [vmem:[#allocation2 + $0xa8] sm:$0xff]
    %v601 = vld [vmem:[#allocation2 + $0xb0] sm:$0xff]
    %v602 = vld [vmem:[#allocation2 + $0xb8] sm:$0xff]
    %v603 = vld [vmem:[%s2] sm:$0x7]
    %v605 = vlaneseq
    %v606 = vshrl.u32 %v605, 7
    %v607 = vsub.s32 0, %v606
    %v608 = vrot.slane %v603, %v607
    %v609 = vlaneseq
    %v610 = vshrl.u32 %v609, 7
    %v611 = vsub.s32 1, %v610
    %v612 = vrot.slane %v603, %v611
    %v613 = vlaneseq
    %v614 = vshrl.u32 %v613, 7
    %v615 = vsub.s32 2, %v614
    %v616 = vrot.slane %v603, %v615
    %v620 = vadd.f32 %v579, %v608
    %v621 = vadd.f32 %v580, %v612
    %v622 = vadd.f32 %v581, %v616
    %v623 = vadd.f32 %v582, %v608
    %v624 = vadd.f32 %v583, %v612
    %v625 = vadd.f32 %v584, %v616
    %v626 = vadd.f32 %v585, %v608
    %v627 = vadd.f32 %v586, %v612
    %v628 = vadd.f32 %v587, %v616
    %v629 = vadd.f32 %v588, %v608
    %v630 = vadd.f32 %v589, %v612
    %v631 = vadd.f32 %v590, %v616
    %v632 = vadd.f32 %v591, %v608
    %v633 = vadd.f32 %v592, %v612
    %v634 = vadd.f32 %v593, %v616
    %v635 = vadd.f32 %v594, %v608
    %v636 = vadd.f32 %v595, %v612
    %v637 = vadd.f32 %v596, %v616
    %v638 = vadd.f32 %v597, %v608
    %v639 = vadd.f32 %v598, %v612
    %v640 = vadd.f32 %v599, %v616
    %v641 = vadd.f32 %v600, %v608
    %v642 = vadd.f32 %v601, %v612
    %v643 = vadd.f32 %v602, %v616
    %v644 = vpack.c.bf16 %v623, %v620
    %v645 = vpack.c.bf16 %v624, %v621
    %v646 = vpack.c.bf16 %v625, %v622
    %v647 = vpack.c.bf16 %v629, %v626
    %v648 = vpack.c.bf16 %v630, %v627
    %v649 = vpack.c.bf16 %v631, %v628
    %v650 = vpack.c.bf16 %v635, %v632
    %v651 = vpack.c.bf16 %v636, %v633
    %v652 = vpack.c.bf16 %v637, %v634
    %v653 = vpack.c.bf16 %v641, %v638
    %v654 = vpack.c.bf16 %v642, %v639
    %v655 = vpack.c.bf16 %v643, %v640
    %v668 = vunpack.c.l.b16 %v644
    %v669 = vunpack.c.l.b16 %v645
    %v670 = vunpack.c.l.b16 %v646
    %v671 = vunpack.c.h.b16 %v644
    %v672 = vunpack.c.h.b16 %v645
    %v673 = vunpack.c.h.b16 %v646
    %v674 = vunpack.c.l.b16 %v647
    %v675 = vunpack.c.l.b16 %v648
    %v676 = vunpack.c.l.b16 %v649
    %v677 = vunpack.c.h.b16 %v647
    %v678 = vunpack.c.h.b16 %v648
    %v679 = vunpack.c.h.b16 %v649
    %v680 = vunpack.c.l.b16 %v650
    %v681 = vunpack.c.l.b16 %v651
    %v682 = vunpack.c.l.b16 %v652
    %v683 = vunpack.c.h.b16 %v650
    %v684 = vunpack.c.h.b16 %v651
    %v685 = vunpack.c.h.b16 %v652
    %v686 = vunpack.c.l.b16 %v653
    %v687 = vunpack.c.l.b16 %v654
    %v688 = vunpack.c.l.b16 %v655
    %v689 = vunpack.c.h.b16 %v653
    %v690 = vunpack.c.h.b16 %v654
    %v691 = vunpack.c.h.b16 %v655
    %v692 = vpack.c.b16 %v669, %v668
    %v693 = vpack.c.b16 %v670, %v670
    %v694 = vpack.c.b16 %v672, %v671
    %v695 = vpack.c.b16 %v673, %v673
    %v696 = vpack.c.b16 %v675, %v674
    %v697 = vpack.c.b16 %v676, %v676
    %v698 = vpack.c.b16 %v678, %v677
    %v699 = vpack.c.b16 %v679, %v679
    %v700 = vpack.c.b16 %v681, %v680
    %v701 = vpack.c.b16 %v682, %v682
    %v702 = vpack.c.b16 %v684, %v683
    %v703 = vpack.c.b16 %v685, %v685
    %v704 = vpack.c.b16 %v687, %v686
    %v705 = vpack.c.b16 %v688, %v688
    %v706 = vpack.c.b16 %v690, %v689
    %v707 = vpack.c.b16 %v691, %v691
    %724 = vst [vmem:[%s5] sm:$0xff] %v692
    %725 = vst [vmem:[%s5 + $0x8] sm:$0xf] %v693
    %726 = vst [vmem:[%s5 + $0xc] sm:$0xff] %v694
    %727 = vst [vmem:[%s5 + $0x14] sm:$0xf] %v695
    %728 = vst [vmem:[%s5 + $0x18] sm:$0xff] %v696
    %729 = vst [vmem:[%s5 + $0x20] sm:$0xf] %v697
    %730 = vst [vmem:[%s5 + $0x24] sm:$0xff] %v698
    %731 = vst [vmem:[%s5 + $0x2c] sm:$0xf] %v699
    %732 = vst [vmem:[%s5 + $0x30] sm:$0xff] %v700
    %733 = vst [vmem:[%s5 + $0x38] sm:$0xf] %v701
    %734 = vst [vmem:[%s5 + $0x3c] sm:$0xff] %v702
    %735 = vst [vmem:[%s5 + $0x44] sm:$0xf] %v703
    %736 = vst [vmem:[%s5 + $0x48] sm:$0xff] %v704
    %737 = vst [vmem:[%s5 + $0x50] sm:$0xf] %v705
    %738 = vst [vmem:[%s5 + $0x54] sm:$0xff] %v706
    %739 = vst [vmem:[%s5 + $0x5c] sm:$0xf] %v707
  $region29: #{_lambda_.10} parent=0 // pred_fallthru
    _
  // Predicated region
  $region30: #{_lambda_.10} parent=0 // pred_check
    _
  $region31: #{_lambda_.10} parent=0 // pred_check_branch
    %741 = sbr.rel (0) target = $region33
  $region32: #{_lambda_.10} parent=0 // pred_region
    _
  $region33: #{_lambda_.10} parent=0 // pred_fallthru
    _
  // Predicated region
  $region34: #{_lambda_.10} parent=0 // pred_check
    _
  $region35: #{_lambda_.10} parent=0 // pred_check_branch
    %743 = sbr.rel (0) target = $region37
  $region36: #{_lambda_.10} parent=0 // pred_region
    _
  $region37: #{_lambda_.10} parent=0 // pred_fallthru
    _

// kernel: _lambda_.11
$region0: #{_lambda_.11}
  #allocation0 [shape = 'u32[]', space=smem, size = 0x4, offset = 0x4, fixed_abs, tag = 'smem constant byte address 0x4 - core index']
  #allocation1 [shape = 'u32[144,128]{1,0:T(1,128)}', space=vmem, size = 0x12000, scoped, tag = 'internal scratch']
  %s0 = inlined_call_operand.vmem [shape: f32[16,8,128], index: 0, kind: input, shape index: {}]
  %s1 = inlined_call_operand.vmem [shape: f32[16,8,128], index: 1, kind: input, shape index: {}]
  %s2 = inlined_call_operand.vmem [shape: f32[16,8,128], index: 2, kind: input, shape index: {}]
  %s3 = inlined_call_operand.vmem [shape: f32[16,8,128], index: 3, kind: output, shape index: {}]
  %s4 = sld [smem:[#allocation0]]
  $region22: #{_lambda_.11} parent=0
    _
  %s6 = ssub.s32 1, %s4
  %s7 = scalar_select 0, %s6, %s4
  // Predicated region
  $region2: #{_lambda_.11} parent=0 // pred_check
    _
  $region3: #{_lambda_.11} parent=0 // pred_check_branch
    %9 = sbr.rel (0) target = $region5
  $region4: #{_lambda_.11} parent=0 // pred_region
    _
  $region5: #{_lambda_.11} parent=0 // pred_fallthru
    _
  // Predicated region
  $region6: #{_lambda_.11} parent=0 // pred_check
    _
  $region7: #{_lambda_.11} parent=0 // pred_check_branch
    %11 = sbr.rel (0) target = $region9
  $region8: #{_lambda_.11} parent=0 // pred_region
    _
  $region9: #{_lambda_.11} parent=0 // pred_fallthru
    _
  // Predicated region
  $region10: #{_lambda_.11} parent=0 // pred_check
    _
  $region11: #{_lambda_.11} parent=0 // pred_check_branch
    %13 = sbr.rel (0) target = $region13
  $region12: #{_lambda_.11} parent=0 // pred_region
    _
  $region13: #{_lambda_.11} parent=0 // pred_fallthru
    _
  %v14 = vld [vmem:[%s0] sm:$0xff]
  %v15 = vld [vmem:[%s0 + $0x8] sm:$0xff]
  %v16 = vld [vmem:[%s0 + $0x10] sm:$0xff]
  %v17 = vld [vmem:[%s0 + $0x18] sm:$0xff]
  %v18 = vld [vmem:[%s0 + $0x20] sm:$0xff]
  %v19 = vld [vmem:[%s0 + $0x28] sm:$0xff]
  %v20 = vld [vmem:[%s0 + $0x30] sm:$0xff]
  %v21 = vld [vmem:[%s0 + $0x38] sm:$0xff]
  %v22 = vld [vmem:[%s0 + $0x40] sm:$0xff]
  %v23 = vld [vmem:[%s0 + $0x48] sm:$0xff]
  %v24 = vld [vmem:[%s0 + $0x50] sm:$0xff]
  %v25 = vld [vmem:[%s0 + $0x58] sm:$0xff]
  %v26 = vld [vmem:[%s0 + $0x60] sm:$0xff]
  %v27 = vld [vmem:[%s0 + $0x68] sm:$0xff]
  %v28 = vld [vmem:[%s0 + $0x70] sm:$0xff]
  %v29 = vld [vmem:[%s0 + $0x78] sm:$0xff]
  %v30 = vld [vmem:[%s1] sm:$0xff]
  %v31 = vld [vmem:[%s1 + $0x8] sm:$0xff]
  %v32 = vld [vmem:[%s1 + $0x10] sm:$0xff]
  %v33 = vld [vmem:[%s1 + $0x18] sm:$0xff]
  %v34 = vld [vmem:[%s1 + $0x20] sm:$0xff]
  %v35 = vld [vmem:[%s1 + $0x28] sm:$0xff]
  %v36 = vld [vmem:[%s1 + $0x30] sm:$0xff]
  %v37 = vld [vmem:[%s1 + $0x38] sm:$0xff]
  %v38 = vld [vmem:[%s1 + $0x40] sm:$0xff]
  %v39 = vld [vmem:[%s1 + $0x48] sm:$0xff]
  %v40 = vld [vmem:[%s1 + $0x50] sm:$0xff]
  %v41 = vld [vmem:[%s1 + $0x58] sm:$0xff]
  %v42 = vld [vmem:[%s1 + $0x60] sm:$0xff]
  %v43 = vld [vmem:[%s1 + $0x68] sm:$0xff]
  %v44 = vld [vmem:[%s1 + $0x70] sm:$0xff]
  %v45 = vld [vmem:[%s1 + $0x78] sm:$0xff]
  %v46 = vld [vmem:[%s2] sm:$0xff]
  %v47 = vld [vmem:[%s2 + $0x8] sm:$0xff]
  %v48 = vld [vmem:[%s2 + $0x10] sm:$0xff]
  %v49 = vld [vmem:[%s2 + $0x18] sm:$0xff]
  %v50 = vld [vmem:[%s2 + $0x20] sm:$0xff]
  %v51 = vld [vmem:[%s2 + $0x28] sm:$0xff]
  %v52 = vld [vmem:[%s2 + $0x30] sm:$0xff]
  %v53 = vld [vmem:[%s2 + $0x38] sm:$0xff]
  %v54 = vld [vmem:[%s2 + $0x40] sm:$0xff]
  %v55 = vld [vmem:[%s2 + $0x48] sm:$0xff]
  %v56 = vld [vmem:[%s2 + $0x50] sm:$0xff]
  %v57 = vld [vmem:[%s2 + $0x58] sm:$0xff]
  %v58 = vld [vmem:[%s2 + $0x60] sm:$0xff]
  %v59 = vld [vmem:[%s2 + $0x68] sm:$0xff]
  %v60 = vld [vmem:[%s2 + $0x70] sm:$0xff]
  %v61 = vld [vmem:[%s2 + $0x78] sm:$0xff]
  %62 = vmatprep.subr.mxu0 0.0
  %63 = vmatpush1.xpose.msra.mxu0 %v30
  %64 = vmatprep.subr.mxu0 0.0
  %65 = vmatpush1.xpose.msra.mxu0 0.0
  %66 = vmatprep.subr.mxu0 0.0
  %67 = vmatpush1.xpose.msra.mxu0 0.0
  %68 = vmatprep.subr.mxu0 0.0
  %69 = vmatpush1.xpose.msra.mxu0 0.0
  %70 = vmatprep.subr.mxu0 0.0
  %71 = vmatpush1.xpose.msra.mxu0 0.0
  %72 = vmatprep.subr.mxu0 0.0
  %73 = vmatpush1.xpose.msra.mxu0 0.0
  %74 = vmatprep.subr.mxu0 0.0
  %75 = vmatpush1.xpose.msra.mxu0 0.0
  %76 = vmatprep.subr.mxu0 0.0
  %77 = vmatpush1.xpose.msra.mxu0 0.0
  %78 = vmatprep.subr.mxu0 0.0
  %79 = vmatpush1.xpose.msra.mxu0 0.0
  %80 = vmatprep.subr.mxu0 0.0
  %81 = vmatpush1.xpose.msra.mxu0 0.0
  %82 = vmatprep.subr.mxu0 0.0
  %83 = vmatpush1.xpose.msra.mxu0 0.0
  %84 = vmatprep.subr.mxu0 0.0
  %85 = vmatpush1.xpose.msra.mxu0 0.0
  %86 = vmatprep.subr.mxu0 0.0
  %87 = vmatpush1.xpose.msra.mxu0 0.0
  %88 = vmatprep.subr.mxu0 0.0
  %89 = vmatpush1.xpose.msra.mxu0 0.0
  %90 = vmatprep.subr.mxu0 0.0
  %91 = vmatpush1.xpose.msra.mxu0 0.0
  %92 = vmatprep.subr.mxu0 0.0
  %93 = vmatpush1.xpose.msra.mxu0 0.0
  %94 = vmatprep.subr.mxu0 0.0
  %95 = vmatpush1.xpose.msra.mxu0 0.0
  %96 = vmatprep.subr.mxu0 0.0
  %97 = vmatpush1.xpose.msra.mxu0 0.0
  %98 = vmatprep.subr.mxu0 0.0
  %99 = vmatpush1.xpose.msra.mxu0 0.0
  %100 = vmatprep.subr.mxu0 0.0
  %101 = vmatpush1.xpose.msra.mxu0 0.0
  %102 = vmatprep.subr.mxu0 0.0
  %103 = vmatpush1.xpose.msra.mxu0 0.0
  %104 = vmatprep.subr.mxu0 0.0
  %105 = vmatpush1.xpose.msra.mxu0 0.0
  %106 = vmatprep.subr.mxu0 0.0
  %107 = vmatpush1.xpose.msra.mxu0 0.0
  %108 = vmatprep.subr.mxu0 0.0
  %109 = vmatpush1.xpose.msra.mxu0 0.0
  %110 = vmatprep.subr.mxu0 0.0
  %111 = vmatpush1.xpose.msra.mxu0 0.0
  %112 = vmatprep.subr.mxu0 0.0
  %113 = vmatpush1.xpose.msra.mxu0 0.0
  %114 = vmatprep.subr.mxu0 0.0
  %115 = vmatpush1.xpose.msra.mxu0 0.0
  %116 = vmatprep.subr.mxu0 0.0
  %117 = vmatpush1.xpose.msra.mxu0 0.0
  %118 = vmatprep.subr.mxu0 0.0
  %119 = vmatpush1.xpose.msra.mxu0 0.0
  %120 = vmatprep.subr.mxu0 0.0
  %121 = vmatpush1.xpose.msra.mxu0 0.0
  %122 = vmatprep.subr.mxu0 0.0
  %123 = vmatpush1.xpose.msra.mxu0 0.0
  %124 = vmatprep.subr.mxu0 0.0
  %125 = vmatpush1.xpose.msra.mxu0 0.0
  %126 = vmatprep.mubr.f32.mxu0 0.0
  %127 = vmatmul.mubr.f32.gmra.mrb[0].mxu0 %v14
  %v128 = vpop.f32.mrb[0].mxu0
  %v129 = vadd.f32 0.0, %v128
  %v130 = vpop.f32.mrb[0].mxu0
  %131 = vdwg.mxu0
  %132 = vmatprep.subr.mxu0 0.0
  %133 = vmatpush1.xpose.msra.mxu0 %v31
  %134 = vmatprep.subr.mxu0 0.0
  %135 = vmatpush1.xpose.msra.mxu0 0.0
  %136 = vmatprep.subr.mxu0 0.0
  %137 = vmatpush1.xpose.msra.mxu0 0.0
  %138 = vmatprep.subr.mxu0 0.0
  %139 = vmatpush1.xpose.msra.mxu0 0.0
  %140 = vmatprep.subr.mxu0 0.0
  %141 = vmatpush1.xpose.msra.mxu0 0.0
  %142 = vmatprep.subr.mxu0 0.0
  %143 = vmatpush1.xpose.msra.mxu0 0.0
  %144 = vmatprep.subr.mxu0 0.0
  %145 = vmatpush1.xpose.msra.mxu0 0.0
  %146 = vmatprep.subr.mxu0 0.0
  %147 = vmatpush1.xpose.msra.mxu0 0.0
  %148 = vmatprep.subr.mxu0 0.0
  %149 = vmatpush1.xpose.msra.mxu0 0.0
  %150 = vmatprep.subr.mxu0 0.0
  %151 = vmatpush1.xpose.msra.mxu0 0.0
  %152 = vmatprep.subr.mxu0 0.0
  %153 = vmatpush1.xpose.msra.mxu0 0.0
  %154 = vmatprep.subr.mxu0 0.0
  %155 = vmatpush1.xpose.msra.mxu0 0.0
  %156 = vmatprep.subr.mxu0 0.0
  %157 = vmatpush1.xpose.msra.mxu0 0.0
  %158 = vmatprep.subr.mxu0 0.0
  %159 = vmatpush1.xpose.msra.mxu0 0.0
  %160 = vmatprep.subr.mxu0 0.0
  %161 = vmatpush1.xpose.msra.mxu0 0.0
  %162 = vmatprep.subr.mxu0 0.0
  %163 = vmatpush1.xpose.msra.mxu0 0.0
  %164 = vmatprep.subr.mxu0 0.0
  %165 = vmatpush1.xpose.msra.mxu0 0.0
  %166 = vmatprep.subr.mxu0 0.0
  %167 = vmatpush1.xpose.msra.mxu0 0.0
  %168 = vmatprep.subr.mxu0 0.0
  %169 = vmatpush1.xpose.msra.mxu0 0.0
  %170 = vmatprep.subr.mxu0 0.0
  %171 = vmatpush1.xpose.msra.mxu0 0.0
  %172 = vmatprep.subr.mxu0 0.0
  %173 = vmatpush1.xpose.msra.mxu0 0.0
  %174 = vmatprep.subr.mxu0 0.0
  %175 = vmatpush1.xpose.msra.mxu0 0.0
  %176 = vmatprep.subr.mxu0 0.0
  %177 = vmatpush1.xpose.msra.mxu0 0.0
  %178 = vmatprep.subr.mxu0 0.0
  %179 = vmatpush1.xpose.msra.mxu0 0.0
  %180 = vmatprep.subr.mxu0 0.0
  %181 = vmatpush1.xpose.msra.mxu0 0.0
  %182 = vmatprep.subr.mxu0 0.0
  %183 = vmatpush1.xpose.msra.mxu0 0.0
  %184 = vmatprep.subr.mxu0 0.0
  %185 = vmatpush1.xpose.msra.mxu0 0.0
  %186 = vmatprep.subr.mxu0 0.0
  %187 = vmatpush1.xpose.msra.mxu0 0.0
  %188 = vmatprep.subr.mxu0 0.0
  %189 = vmatpush1.xpose.msra.mxu0 0.0
  %190 = vmatprep.subr.mxu0 0.0
  %191 = vmatpush1.xpose.msra.mxu0 0.0
  %192 = vmatprep.subr.mxu0 0.0
  %193 = vmatpush1.xpose.msra.mxu0 0.0
  %194 = vmatprep.subr.mxu0 0.0
  %195 = vmatpush1.xpose.msra.mxu0 0.0
  %196 = vmatprep.mubr.f32.mxu0 0.0
  %197 = vmatmul.mubr.f32.gmra.mrb[0].mxu0 %v15
  %v198 = vpop.f32.mrb[0].mxu0
  %v199 = vadd.f32 0.0, %v198
  %v200 = vpop.f32.mrb[0].mxu0
  %201 = vdwg.mxu0
  %202 = vmatprep.subr.mxu0 0.0
  %203 = vmatpush1.xpose.msra.mxu0 %v32
  %204 = vmatprep.subr.mxu0 0.0
  %205 = vmatpush1.xpose.msra.mxu0 0.0
  %206 = vmatprep.subr.mxu0 0.0
  %207 = vmatpush1.xpose.msra.mxu0 0.0
  %208 = vmatprep.subr.mxu0 0.0
  %209 = vmatpush1.xpose.msra.mxu0 0.0
  %210 = vmatprep.subr.mxu0 0.0
  %211 = vmatpush1.xpose.msra.mxu0 0.0
  %212 = vmatprep.subr.mxu0 0.0
  %213 = vmatpush1.xpose.msra.mxu0 0.0
  %214 = vmatprep.subr.mxu0 0.0
  %215 = vmatpush1.xpose.msra.mxu0 0.0
  %216 = vmatprep.subr.mxu0 0.0
  %217 = vmatpush1.xpose.msra.mxu0 0.0
  %218 = vmatprep.subr.mxu0 0.0
  %219 = vmatpush1.xpose.msra.mxu0 0.0
  %220 = vmatprep.subr.mxu0 0.0
  %221 = vmatpush1.xpose.msra.mxu0 0.0
  %222 = vmatprep.subr.mxu0 0.0
  %223 = vmatpush1.xpose.msra.mxu0 0.0
  %224 = vmatprep.subr.mxu0 0.0
  %225 = vmatpush1.xpose.msra.mxu0 0.0
  %226 = vmatprep.subr.mxu0 0.0
  %227 = vmatpush1.xpose.msra.mxu0 0.0
  %228 = vmatprep.subr.mxu0 0.0
  %229 = vmatpush1.xpose.msra.mxu0 0.0
  %230 = vmatprep.subr.mxu0 0.0
  %231 = vmatpush1.xpose.msra.mxu0 0.0
  %232 = vmatprep.subr.mxu0 0.0
  %233 = vmatpush1.xpose.msra.mxu0 0.0
  %234 = vmatprep.subr.mxu0 0.0
  %235 = vmatpush1.xpose.msra.mxu0 0.0
  %236 = vmatprep.subr.mxu0 0.0
  %237 = vmatpush1.xpose.msra.mxu0 0.0
  %238 = vmatprep.subr.mxu0 0.0
  %239 = vmatpush1.xpose.msra.mxu0 0.0
  %240 = vmatprep.subr.mxu0 0.0
  %241 = vmatpush1.xpose.msra.mxu0 0.0
  %242 = vmatprep.subr.mxu0 0.0
  %243 = vmatpush1.xpose.msra.mxu0 0.0
  %244 = vmatprep.subr.mxu0 0.0
  %245 = vmatpush1.xpose.msra.mxu0 0.0
  %246 = vmatprep.subr.mxu0 0.0
  %247 = vmatpush1.xpose.msra.mxu0 0.0
  %248 = vmatprep.subr.mxu0 0.0
  %249 = vmatpush1.xpose.msra.mxu0 0.0
  %250 = vmatprep.subr.mxu0 0.0
  %251 = vmatpush1.xpose.msra.mxu0 0.0
  %252 = vmatprep.subr.mxu0 0.0
  %253 = vmatpush1.xpose.msra.mxu0 0.0
  %254 = vmatprep.subr.mxu0 0.0
  %255 = vmatpush1.xpose.msra.mxu0 0.0
  %256 = vmatprep.subr.mxu0 0.0
  %257 = vmatpush1.xpose.msra.mxu0 0.0
  %258 = vmatprep.subr.mxu0 0.0
  %259 = vmatpush1.xpose.msra.mxu0 0.0
  %260 = vmatprep.subr.mxu0 0.0
  %261 = vmatpush1.xpose.msra.mxu0 0.0
  %262 = vmatprep.subr.mxu0 0.0
  %263 = vmatpush1.xpose.msra.mxu0 0.0
  %264 = vmatprep.subr.mxu0 0.0
  %265 = vmatpush1.xpose.msra.mxu0 0.0
  %266 = vmatprep.mubr.f32.mxu0 0.0
  %267 = vmatmul.mubr.f32.gmra.mrb[0].mxu0 %v16
  %v268 = vpop.f32.mrb[0].mxu0
  %v269 = vadd.f32 0.0, %v268
  %v270 = vpop.f32.mrb[0].mxu0
  %271 = vdwg.mxu0
  %272 = vmatprep.subr.mxu0 0.0
  %273 = vmatpush1.xpose.msra.mxu0 %v33
  %274 = vmatprep.subr.mxu0 0.0
  %275 = vmatpush1.xpose.msra.mxu0 0.0
  %276 = vmatprep.subr.mxu0 0.0
  %277 = vmatpush1.xpose.msra.mxu0 0.0
  %278 = vmatprep.subr.mxu0 0.0
  %279 = vmatpush1.xpose.msra.mxu0 0.0
  %280 = vmatprep.subr.mxu0 0.0
  %281 = vmatpush1.xpose.msra.mxu0 0.0
  %282 = vmatprep.subr.mxu0 0.0
  %283 = vmatpush1.xpose.msra.mxu0 0.0
  %284 = vmatprep.subr.mxu0 0.0
  %285 = vmatpush1.xpose.msra.mxu0 0.0
  %286 = vmatprep.subr.mxu0 0.0
  %287 = vmatpush1.xpose.msra.mxu0 0.0
  %288 = vmatprep.subr.mxu0 0.0
  %289 = vmatpush1.xpose.msra.mxu0 0.0
  %290 = vmatprep.subr.mxu0 0.0
  %291 = vmatpush1.xpose.msra.mxu0 0.0
  %292 = vmatprep.subr.mxu0 0.0
  %293 = vmatpush1.xpose.msra.mxu0 0.0
  %294 = vmatprep.subr.mxu0 0.0
  %295 = vmatpush1.xpose.msra.mxu0 0.0
  %296 = vmatprep.subr.mxu0 0.0
  %297 = vmatpush1.xpose.msra.mxu0 0.0
  %298 = vmatprep.subr.mxu0 0.0
  %299 = vmatpush1.xpose.msra.mxu0 0.0
  %300 = vmatprep.subr.mxu0 0.0
  %301 = vmatpush1.xpose.msra.mxu0 0.0
  %302 = vmatprep.subr.mxu0 0.0
  %303 = vmatpush1.xpose.msra.mxu0 0.0
  %304 = vmatprep.subr.mxu0 0.0
  %305 = vmatpush1.xpose.msra.mxu0 0.0
  %306 = vmatprep.subr.mxu0 0.0
  %307 = vmatpush1.xpose.msra.mxu0 0.0
  %308 = vmatprep.subr.mxu0 0.0
  %309 = vmatpush1.xpose.msra.mxu0 0.0
  %310 = vmatprep.subr.mxu0 0.0
  %311 = vmatpush1.xpose.msra.mxu0 0.0
  %312 = vmatprep.subr.mxu0 0.0
  %313 = vmatpush1.xpose.msra.mxu0 0.0
  %314 = vmatprep.subr.mxu0 0.0
  %315 = vmatpush1.xpose.msra.mxu0 0.0
  %316 = vmatprep.subr.mxu0 0.0
  %317 = vmatpush1.xpose.msra.mxu0 0.0
  %318 = vmatprep.subr.mxu0 0.0
  %319 = vmatpush1.xpose.msra.mxu0 0.0
  %320 = vmatprep.subr.mxu0 0.0
  %321 = vmatpush1.xpose.msra.mxu0 0.0
  %322 = vmatprep.subr.mxu0 0.0
  %323 = vmatpush1.xpose.msra.mxu0 0.0
  %324 = vmatprep.subr.mxu0 0.0
  %325 = vmatpush1.xpose.msra.mxu0 0.0
  %326 = vmatprep.subr.mxu0 0.0
  %327 = vmatpush1.xpose.msra.mxu0 0.0
  %328 = vmatprep.subr.mxu0 0.0
  %329 = vmatpush1.xpose.msra.mxu0 0.0
  %330 = vmatprep.subr.mxu0 0.0
  %331 = vmatpush1.xpose.msra.mxu0 0.0
  %332 = vmatprep.subr.mxu0 0.0
  %333 = vmatpush1.xpose.msra.mxu0 0.0
  %334 = vmatprep.subr.mxu0 0.0
  %335 = vmatpush1.xpose.msra.mxu0 0.0
  %336 = vmatprep.mubr.f32.mxu0 0.0
  %337 = vmatmul.mubr.f32.gmra.mrb[0].mxu0 %v17
  %v338 = vpop.f32.mrb[0].mxu0
  %v339 = vadd.f32 0.0, %v338
  %v340 = vpop.f32.mrb[0].mxu0
  %341 = vdwg.mxu0
  %342 = vmatprep.subr.mxu0 0.0
  %343 = vmatpush1.xpose.msra.mxu0 %v34
  %344 = vmatprep.subr.mxu0 0.0
  %345 = vmatpush1.xpose.msra.mxu0 0.0
  %346 = vmatprep.subr.mxu0 0.0
  %347 = vmatpush1.xpose.msra.mxu0 0.0
  %348 = vmatprep.subr.mxu0 0.0
  %349 = vmatpush1.xpose.msra.mxu0 0.0
  %350 = vmatprep.subr.mxu0 0.0
  %351 = vmatpush1.xpose.msra.mxu0 0.0
  %352 = vmatprep.subr.mxu0 0.0
  %353 = vmatpush1.xpose.msra.mxu0 0.0
  %354 = vmatprep.subr.mxu0 0.0
  %355 = vmatpush1.xpose.msra.mxu0 0.0
  %356 = vmatprep.subr.mxu0 0.0
  %357 = vmatpush1.xpose.msra.mxu0 0.0
  %358 = vmatprep.subr.mxu0 0.0
  %359 = vmatpush1.xpose.msra.mxu0 0.0
  %360 = vmatprep.subr.mxu0 0.0
  %361 = vmatpush1.xpose.msra.mxu0 0.0
  %362 = vmatprep.subr.mxu0 0.0
  %363 = vmatpush1.xpose.msra.mxu0 0.0
  %364 = vmatprep.subr.mxu0 0.0
  %365 = vmatpush1.xpose.msra.mxu0 0.0
  %366 = vmatprep.subr.mxu0 0.0
  %367 = vmatpush1.xpose.msra.mxu0 0.0
  %368 = vmatprep.subr.mxu0 0.0
  %369 = vmatpush1.xpose.msra.mxu0 0.0
  %370 = vmatprep.subr.mxu0 0.0
  %371 = vmatpush1.xpose.msra.mxu0 0.0
  %372 = vmatprep.subr.mxu0 0.0
  %373 = vmatpush1.xpose.msra.mxu0 0.0
  %374 = vmatprep.subr.mxu0 0.0
  %375 = vmatpush1.xpose.msra.mxu0 0.0
  %376 = vmatprep.subr.mxu0 0.0
  %377 = vmatpush1.xpose.msra.mxu0 0.0
  %378 = vmatprep.subr.mxu0 0.0
  %379 = vmatpush1.xpose.msra.mxu0 0.0
  %380 = vmatprep.subr.mxu0 0.0
  %381 = vmatpush1.xpose.msra.mxu0 0.0
  %382 = vmatprep.subr.mxu0 0.0
  %383 = vmatpush1.xpose.msra.mxu0 0.0
  %384 = vmatprep.subr.mxu0 0.0
  %385 = vmatpush1.xpose.msra.mxu0 0.0
  %386 = vmatprep.subr.mxu0 0.0
  %387 = vmatpush1.xpose.msra.mxu0 0.0
  %388 = vmatprep.subr.mxu0 0.0
  %389 = vmatpush1.xpose.msra.mxu0 0.0
  %390 = vmatprep.subr.mxu0 0.0
  %391 = vmatpush1.xpose.msra.mxu0 0.0
  %392 = vmatprep.subr.mxu0 0.0
  %393 = vmatpush1.xpose.msra.mxu0 0.0
  %394 = vmatprep.subr.mxu0 0.0
  %395 = vmatpush1.xpose.msra.mxu0 0.0
  %396 = vmatprep.subr.mxu0 0.0
  %397 = vmatpush1.xpose.msra.mxu0 0.0
  %398 = vmatprep.subr.mxu0 0.0
  %399 = vmatpush1.xpose.msra.mxu0 0.0
  %400 = vmatprep.subr.mxu0 0.0
  %401 = vmatpush1.xpose.msra.mxu0 0.0
  %402 = vmatprep.subr.mxu0 0.0
  %403 = vmatpush1.xpose.msra.mxu0 0.0
  %404 = vmatprep.subr.mxu0 0.0
  %405 = vmatpush1.xpose.msra.mxu0 0.0
  %406 = vmatprep.mubr.f32.mxu0 0.0
  %407 = vmatmul.mubr.f32.gmra.mrb[0].mxu0 %v18
  %v408 = vpop.f32.mrb[0].mxu0
  %v409 = vadd.f32 0.0, %v408
  %v410 = vpop.f32.mrb[0].mxu0
  %411 = vdwg.mxu0
  %412 = vmatprep.subr.mxu0 0.0
  %413 = vmatpush1.xpose.msra.mxu0 %v35
  %414 = vmatprep.subr.mxu0 0.0
  %415 = vmatpush1.xpose.msra.mxu0 0.0
  %416 = vmatprep.subr.mxu0 0.0
  %417 = vmatpush1.xpose.msra.mxu0 0.0
  %418 = vmatprep.subr.mxu0 0.0
  %419 = vmatpush1.xpose.msra.mxu0 0.0
  %420 = vmatprep.subr.mxu0 0.0
  %421 = vmatpush1.xpose.msra.mxu0 0.0
  %422 = vmatprep.subr.mxu0 0.0
  %423 = vmatpush1.xpose.msra.mxu0 0.0
  %424 = vmatprep.subr.mxu0 0.0
  %425 = vmatpush1.xpose.msra.mxu0 0.0
  %426 = vmatprep.subr.mxu0 0.0
  %427 = vmatpush1.xpose.msra.mxu0 0.0
  %428 = vmatprep.subr.mxu0 0.0
  %429 = vmatpush1.xpose.msra.mxu0 0.0
  %430 = vmatprep.subr.mxu0 0.0
  %431 = vmatpush1.xpose.msra.mxu0 0.0
  %432 = vmatprep.subr.mxu0 0.0
  %433 = vmatpush1.xpose.msra.mxu0 0.0
  %434 = vmatprep.subr.mxu0 0.0
  %435 = vmatpush1.xpose.msra.mxu0 0.0
  %436 = vmatprep.subr.mxu0 0.0
  %437 = vmatpush1.xpose.msra.mxu0 0.0
  %438 = vmatprep.subr.mxu0 0.0
  %439 = vmatpush1.xpose.msra.mxu0 0.0
  %440 = vmatprep.subr.mxu0 0.0
  %441 = vmatpush1.xpose.msra.mxu0 0.0
  %442 = vmatprep.subr.mxu0 0.0
  %443 = vmatpush1.xpose.msra.mxu0 0.0
  %444 = vmatprep.subr.mxu0 0.0
  %445 = vmatpush1.xpose.msra.mxu0 0.0
  %446 = vmatprep.subr.mxu0 0.0
  %447 = vmatpush1.xpose.msra.mxu0 0.0
  %448 = vmatprep.subr.mxu0 0.0
  %449 = vmatpush1.xpose.msra.mxu0 0.0
  %450 = vmatprep.subr.mxu0 0.0
  %451 = vmatpush1.xpose.msra.mxu0 0.0
  %452 = vmatprep.subr.mxu0 0.0
  %453 = vmatpush1.xpose.msra.mxu0 0.0
  %454 = vmatprep.subr.mxu0 0.0
  %455 = vmatpush1.xpose.msra.mxu0 0.0
  %456 = vmatprep.subr.mxu0 0.0
  %457 = vmatpush1.xpose.msra.mxu0 0.0
  %458 = vmatprep.subr.mxu0 0.0
  %459 = vmatpush1.xpose.msra.mxu0 0.0
  %460 = vmatprep.subr.mxu0 0.0
  %461 = vmatpush1.xpose.msra.mxu0 0.0
  %462 = vmatprep.subr.mxu0 0.0
  %463 = vmatpush1.xpose.msra.mxu0 0.0
  %464 = vmatprep.subr.mxu0 0.0
  %465 = vmatpush1.xpose.msra.mxu0 0.0
  %466 = vmatprep.subr.mxu0 0.0
  %467 = vmatpush1.xpose.msra.mxu0 0.0
  %468 = vmatprep.subr.mxu0 0.0
  %469 = vmatpush1.xpose.msra.mxu0 0.0
  %470 = vmatprep.subr.mxu0 0.0
  %471 = vmatpush1.xpose.msra.mxu0 0.0
  %472 = vmatprep.subr.mxu0 0.0
  %473 = vmatpush1.xpose.msra.mxu0 0.0
  %474 = vmatprep.subr.mxu0 0.0
  %475 = vmatpush1.xpose.msra.mxu0 0.0
  %476 = vmatprep.mubr.f32.mxu0 0.0
  %477 = vmatmul.mubr.f32.gmra.mrb[0].mxu0 %v19
  %v478 = vpop.f32.mrb[0].mxu0
  %v479 = vadd.f32 0.0, %v478
  %v480 = vpop.f32.mrb[0].mxu0
  %481 = vdwg.mxu0
  %482 = vmatprep.subr.mxu0 0.0
  %483 = vmatpush1.xpose.msra.mxu0 %v36
  %484 = vmatprep.subr.mxu0 0.0
  %485 = vmatpush1.xpose.msra.mxu0 0.0
  %486 = vmatprep.subr.mxu0 0.0
  %487 = vmatpush1.xpose.msra.mxu0 0.0
  %488 = vmatprep.subr.mxu0 0.0
  %489 = vmatpush1.xpose.msra.mxu0 0.0
  %490 = vmatprep.subr.mxu0 0.0
  %491 = vmatpush1.xpose.msra.mxu0 0.0
  %492 = vmatprep.subr.mxu0 0.0
  %493 = vmatpush1.xpose.msra.mxu0 0.0
  %494 = vmatprep.subr.mxu0 0.0
  %495 = vmatpush1.xpose.msra.mxu0 0.0
  %496 = vmatprep.subr.mxu0 0.0
  %497 = vmatpush1.xpose.msra.mxu0 0.0
  %498 = vmatprep.subr.mxu0 0.0
  %499 = vmatpush1.xpose.msra.mxu0 0.0
  %500 = vmatprep.subr.mxu0 0.0
  %501 = vmatpush1.xpose.msra.mxu0 0.0
  %502 = vmatprep.subr.mxu0 0.0
  %503 = vmatpush1.xpose.msra.mxu0 0.0
  %504 = vmatprep.subr.mxu0 0.0
  %505 = vmatpush1.xpose.msra.mxu0 0.0
  %506 = vmatprep.subr.mxu0 0.0
  %507 = vmatpush1.xpose.msra.mxu0 0.0
  %508 = vmatprep.subr.mxu0 0.0
  %509 = vmatpush1.xpose.msra.mxu0 0.0
  %510 = vmatprep.subr.mxu0 0.0
  %511 = vmatpush1.xpose.msra.mxu0 0.0
  %512 = vmatprep.subr.mxu0 0.0
  %513 = vmatpush1.xpose.msra.mxu0 0.0
  %514 = vmatprep.subr.mxu0 0.0
  %515 = vmatpush1.xpose.msra.mxu0 0.0
  %516 = vmatprep.subr.mxu0 0.0
  %517 = vmatpush1.xpose.msra.mxu0 0.0
  %518 = vmatprep.subr.mxu0 0.0
  %519 = vmatpush1.xpose.msra.mxu0 0.0
  %520 = vmatprep.subr.mxu0 0.0
  %521 = vmatpush1.xpose.msra.mxu0 0.0
  %522 = vmatprep.subr.mxu0 0.0
  %523 = vmatpush1.xpose.msra.mxu0 0.0
  %524 = vmatprep.subr.mxu0 0.0
  %525 = vmatpush1.xpose.msra.mxu0 0.0
  %526 = vmatprep.subr.mxu0 0.0
  %527 = vmatpush1.xpose.msra.mxu0 0.0
  %528 = vmatprep.subr.mxu0 0.0
  %529 = vmatpush1.xpose.msra.mxu0 0.0
  %530 = vmatprep.subr.mxu0 0.0
  %531 = vmatpush1.xpose.msra.mxu0 0.0
  %532 = vmatprep.subr.mxu0 0.0
  %533 = vmatpush1.xpose.msra.mxu0 0.0
  %534 = vmatprep.subr.mxu0 0.0
  %535 = vmatpush1.xpose.msra.mxu0 0.0
  %536 = vmatprep.subr.mxu0 0.0
  %537 = vmatpush1.xpose.msra.mxu0 0.0
  %538 = vmatprep.subr.mxu0 0.0
  %539 = vmatpush1.xpose.msra.mxu0 0.0
  %540 = vmatprep.subr.mxu0 0.0
  %541 = vmatpush1.xpose.msra.mxu0 0.0
  %542 = vmatprep.subr.mxu0 0.0
  %543 = vmatpush1.xpose.msra.mxu0 0.0
  %544 = vmatprep.subr.mxu0 0.0
  %545 = vmatpush1.xpose.msra.mxu0 0.0
  %546 = vmatprep.mubr.f32.mxu0 0.0
  %547 = vmatmul.mubr.f32.gmra.mrb[0].mxu0 %v20
  %v548 = vpop.f32.mrb[0].mxu0
  %v549 = vadd.f32 0.0, %v548
  %v550 = vpop.f32.mrb[0].mxu0
  %551 = vdwg.mxu0
  %552 = vmatprep.subr.mxu0 0.0
  %553 = vmatpush1.xpose.msra.mxu0 %v37
  %554 = vmatprep.subr.mxu0 0.0
  %555 = vmatpush1.xpose.msra.mxu0 0.0
  %556 = vmatprep.subr.mxu0 0.0
  %557 = vmatpush1.xpose.msra.mxu0 0.0
  %558 = vmatprep.subr.mxu0 0.0
  %559 = vmatpush1.xpose.msra.mxu0 0.0
  %560 = vmatprep.subr.mxu0 0.0
  %561 = vmatpush1.xpose.msra.mxu0 0.0
  %562 = vmatprep.subr.mxu0 0.0
  %563 = vmatpush1.xpose.msra.mxu0 0.0
  %564 = vmatprep.subr.mxu0 0.0
  %565 = vmatpush1.xpose.msra.mxu0 0.0
  %566 = vmatprep.subr.mxu0 0.0
  %567 = vmatpush1.xpose.msra.mxu0 0.0
  %568 = vmatprep.subr.mxu0 0.0
  %569 = vmatpush1.xpose.msra.mxu0 0.0
  %570 = vmatprep.subr.mxu0 0.0
  %571 = vmatpush1.xpose.msra.mxu0 0.0
  %572 = vmatprep.subr.mxu0 0.0
  %573 = vmatpush1.xpose.msra.mxu0 0.0
  %574 = vmatprep.subr.mxu0 0.0
  %575 = vmatpush1.xpose.msra.mxu0 0.0
  %576 = vmatprep.subr.mxu0 0.0
  %577 = vmatpush1.xpose.msra.mxu0 0.0
  %578 = vmatprep.subr.mxu0 0.0
  %579 = vmatpush1.xpose.msra.mxu0 0.0
  %580 = vmatprep.subr.mxu0 0.0
  %581 = vmatpush1.xpose.msra.mxu0 0.0
  %582 = vmatprep.subr.mxu0 0.0
  %583 = vmatpush1.xpose.msra.mxu0 0.0
  %584 = vmatprep.subr.mxu0 0.0
  %585 = vmatpush1.xpose.msra.mxu0 0.0
  %586 = vmatprep.subr.mxu0 0.0
  %587 = vmatpush1.xpose.msra.mxu0 0.0
  %588 = vmatprep.subr.mxu0 0.0
  %589 = vmatpush1.xpose.msra.mxu0 0.0
  %590 = vmatprep.subr.mxu0 0.0
  %591 = vmatpush1.xpose.msra.mxu0 0.0
  %592 = vmatprep.subr.mxu0 0.0
  %593 = vmatpush1.xpose.msra.mxu0 0.0
  %594 = vmatprep.subr.mxu0 0.0
  %595 = vmatpush1.xpose.msra.mxu0 0.0
  %596 = vmatprep.subr.mxu0 0.0
  %597 = vmatpush1.xpose.msra.mxu0 0.0
  %598 = vmatprep.subr.mxu0 0.0
  %599 = vmatpush1.xpose.msra.mxu0 0.0
  %600 = vmatprep.subr.mxu0 0.0
  %601 = vmatpush1.xpose.msra.mxu0 0.0
  %602 = vmatprep.subr.mxu0 0.0
  %603 = vmatpush1.xpose.msra.mxu0 0.0
  %604 = vmatprep.subr.mxu0 0.0
  %605 = vmatpush1.xpose.msra.mxu0 0.0
  %606 = vmatprep.subr.mxu0 0.0
  %607 = vmatpush1.xpose.msra.mxu0 0.0
  %608 = vmatprep.subr.mxu0 0.0
  %609 = vmatpush1.xpose.msra.mxu0 0.0
  %610 = vmatprep.subr.mxu0 0.0
  %611 = vmatpush1.xpose.msra.mxu0 0.0
  %612 = vmatprep.subr.mxu0 0.0
  %613 = vmatpush1.xpose.msra.mxu0 0.0
  %614 = vmatprep.subr.mxu0 0.0
  %615 = vmatpush1.xpose.msra.mxu0 0.0
  %616 = vmatprep.mubr.f32.mxu0 0.0
  %617 = vmatmul.mubr.f32.gmra.mrb[0].mxu0 %v21
  %v618 = vpop.f32.mrb[0].mxu0
  %v619 = vadd.f32 0.0, %v618
  %v620 = vpop.f32.mrb[0].mxu0
  %621 = vdwg.mxu0
  %622 = vmatprep.subr.mxu0 0.0
  %623 = vmatpush1.xpose.msra.mxu0 %v38
  %624 = vmatprep.subr.mxu0 0.0
  %625 = vmatpush1.xpose.msra.mxu0 0.0
  %626 = vmatprep.subr.mxu0 0.0
  %627 = vmatpush1.xpose.msra.mxu0 0.0
  %628 = vmatprep.subr.mxu0 0.0
  %629 = vmatpush1.xpose.msra.mxu0 0.0
  %630 = vmatprep.subr.mxu0 0.0
  %631 = vmatpush1.xpose.msra.mxu0 0.0
  %632 = vmatprep.subr.mxu0 0.0
  %633 = vmatpush1.xpose.msra.mxu0 0.0
  %634 = vmatprep.subr.mxu0 0.0
  %635 = vmatpush1.xpose.msra.mxu0 0.0
  %636 = vmatprep.subr.mxu0 0.0
  %637 = vmatpush1.xpose.msra.mxu0 0.0
  %638 = vmatprep.subr.mxu0 0.0
  %639 = vmatpush1.xpose.msra.mxu0 0.0
  %640 = vmatprep.subr.mxu0 0.0
  %641 = vmatpush1.xpose.msra.mxu0 0.0
  %642 = vmatprep.subr.mxu0 0.0
  %643 = vmatpush1.xpose.msra.mxu0 0.0
  %644 = vmatprep.subr.mxu0 0.0
  %645 = vmatpush1.xpose.msra.mxu0 0.0
  %646 = vmatprep.subr.mxu0 0.0
  %647 = vmatpush1.xpose.msra.mxu0 0.0
  %648 = vmatprep.subr.mxu0 0.0
  %649 = vmatpush1.xpose.msra.mxu0 0.0
  %650 = vmatprep.subr.mxu0 0.0
  %651 = vmatpush1.xpose.msra.mxu0 0.0
  %652 = vmatprep.subr.mxu0 0.0
  %653 = vmatpush1.xpose.msra.mxu0 0.0
  %654 = vmatprep.subr.mxu0 0.0
  %655 = vmatpush1.xpose.msra.mxu0 0.0
  %656 = vmatprep.subr.mxu0 0.0
  %657 = vmatpush1.xpose.msra.mxu0 0.0
  %658 = vmatprep.subr.mxu0 0.0
  %659 = vmatpush1.xpose.msra.mxu0 0.0
  %660 = vmatprep.subr.mxu0 0.0
  %661 = vmatpush1.xpose.msra.mxu0 0.0
  %662 = vmatprep.subr.mxu0 0.0
  %663 = vmatpush1.xpose.msra.mxu0 0.0
  %664 = vmatprep.subr.mxu0 0.0
  %665 = vmatpush1.xpose.msra.mxu0 0.0
  %666 = vmatprep.subr.mxu0 0.0
  %667 = vmatpush1.xpose.msra.mxu0 0.0
  %668 = vmatprep.subr.mxu0 0.0
  %669 = vmatpush1.xpose.msra.mxu0 0.0
  %670 = vmatprep.subr.mxu0 0.0
  %671 = vmatpush1.xpose.msra.mxu0 0.0
  %672 = vmatprep.subr.mxu0 0.0
  %673 = vmatpush1.xpose.msra.mxu0 0.0
  %674 = vmatprep.subr.mxu0 0.0
  %675 = vmatpush1.xpose.msra.mxu0 0.0
  %676 = vmatprep.subr.mxu0 0.0
  %677 = vmatpush1.xpose.msra.mxu0 0.0
  %678 = vmatprep.subr.mxu0 0.0
  %679 = vmatpush1.xpose.msra.mxu0 0.0
  %680 = vmatprep.subr.mxu0 0.0
  %681 = vmatpush1.xpose.msra.mxu0 0.0
  %682 = vmatprep.subr.mxu0 0.0
  %683 = vmatpush1.xpose.msra.mxu0 0.0
  %684 = vmatprep.subr.mxu0 0.0
  %685 = vmatpush1.xpose.msra.mxu0 0.0
  %686 = vmatprep.mubr.f32.mxu0 0.0
  %687 = vmatmul.mubr.f32.gmra.mrb[0].mxu0 %v22
  %v688 = vpop.f32.mrb[0].mxu0
  %v689 = vadd.f32 0.0, %v688
  %v690 = vpop.f32.mrb[0].mxu0
  %691 = vdwg.mxu0
  %692 = vmatprep.subr.mxu0 0.0
  %693 = vmatpush1.xpose.msra.mxu0 %v39
  %694 = vmatprep.subr.mxu0 0.0
  %695 = vmatpush1.xpose.msra.mxu0 0.0
  %696 = vmatprep.subr.mxu0 0.0
  %697 = vmatpush1.xpose.msra.mxu0 0.0
  %698 = vmatprep.subr.mxu0 0.0
  %699 = vmatpush1.xpose.msra.mxu0 0.0
  %700 = vmatprep.subr.mxu0 0.0
  %701 = vmatpush1.xpose.msra.mxu0 0.0
  %702 = vmatprep.subr.mxu0 0.0
  %703 = vmatpush1.xpose.msra.mxu0 0.0
  %704 = vmatprep.subr.mxu0 0.0
  %705 = vmatpush1.xpose.msra.mxu0 0.0
  %706 = vmatprep.subr.mxu0 0.0
  %707 = vmatpush1.xpose.msra.mxu0 0.0
  %708 = vmatprep.subr.mxu0 0.0
  %709 = vmatpush1.xpose.msra.mxu0 0.0
  %710 = vmatprep.subr.mxu0 0.0
  %711 = vmatpush1.xpose.msra.mxu0 0.0
  %712 = vmatprep.subr.mxu0 0.0
  %713 = vmatpush1.xpose.msra.mxu0 0.0
  %714 = vmatprep.subr.mxu0 0.0
  %715 = vmatpush1.xpose.msra.mxu0 0.0
  %716 = vmatprep.subr.mxu0 0.0
  %717 = vmatpush1.xpose.msra.mxu0 0.0
  %718 = vmatprep.subr.mxu0 0.0
  %719 = vmatpush1.xpose.msra.mxu0 0.0
  %720 = vmatprep.subr.mxu0 0.0
  %721 = vmatpush1.xpose.msra.mxu0 0.0
  %722 = vmatprep.subr.mxu0 0.0
  %723 = vmatpush1.xpose.msra.mxu0 0.0
  %724 = vmatprep.subr.mxu0 0.0
  %725 = vmatpush1.xpose.msra.mxu0 0.0
  %726 = vmatprep.subr.mxu0 0.0
  %727 = vmatpush1.xpose.msra.mxu0 0.0
  %728 = vmatprep.subr.mxu0 0.0
  %729 = vmatpush1.xpose.msra.mxu0 0.0
  %730 = vmatprep.subr.mxu0 0.0
  %731 = vmatpush1.xpose.msra.mxu0 0.0
  %732 = vmatprep.subr.mxu0 0.0
  %733 = vmatpush1.xpose.msra.mxu0 0.0
  %734 = vmatprep.subr.mxu0 0.0
  %735 = vmatpush1.xpose.msra.mxu0 0.0
  %736 = vmatprep.subr.mxu0 0.0
  %737 = vmatpush1.xpose.msra.mxu0 0.0
  %738 = vmatprep.subr.mxu0 0.0
  %739 = vmatpush1.xpose.msra.mxu0 0.0
  %740 = vmatprep.subr.mxu0 0.0
  %741 = vmatpush1.xpose.msra.mxu0 0.0
  %742 = vmatprep.subr.mxu0 0.0
  %743 = vmatpush1.xpose.msra.mxu0 0.0
  %744 = vmatprep.subr.mxu0 0.0
  %745 = vmatpush1.xpose.msra.mxu0 0.0
  %746 = vmatprep.subr.mxu0 0.0
  %747 = vmatpush1.xpose.msra.mxu0 0.0
  %748 = vmatprep.subr.mxu0 0.0
  %749 = vmatpush1.xpose.msra.mxu0 0.0
  %750 = vmatprep.subr.mxu0 0.0
  %751 = vmatpush1.xpose.msra.mxu0 0.0
  %752 = vmatprep.subr.mxu0 0.0
  %753 = vmatpush1.xpose.msra.mxu0 0.0
  %754 = vmatprep.subr.mxu0 0.0
  %755 = vmatpush1.xpose.msra.mxu0 0.0
  %756 = vmatprep.mubr.f32.mxu0 0.0
  %757 = vmatmul.mubr.f32.gmra.mrb[0].mxu0 %v23
  %v758 = vpop.f32.mrb[0].mxu0
  %v759 = vadd.f32 0.0, %v758
  %v760 = vpop.f32.mrb[0].mxu0
  %761 = vdwg.mxu0
  %762 = vmatprep.subr.mxu0 0.0
  %763 = vmatpush1.xpose.msra.mxu0 %v40
  %764 = vmatprep.subr.mxu0 0.0
  %765 = vmatpush1.xpose.msra.mxu0 0.0
  %766 = vmatprep.subr.mxu0 0.0
  %767 = vmatpush1.xpose.msra.mxu0 0.0
  %768 = vmatprep.subr.mxu0 0.0
  %769 = vmatpush1.xpose.msra.mxu0 0.0
  %770 = vmatprep.subr.mxu0 0.0
  %771 = vmatpush1.xpose.msra.mxu0 0.0
  %772 = vmatprep.subr.mxu0 0.0
  %773 = vmatpush1.xpose.msra.mxu0 0.0
  %774 = vmatprep.subr.mxu0 0.0
  %775 = vmatpush1.xpose.msra.mxu0 0.0
  %776 = vmatprep.subr.mxu0 0.0
  %777 = vmatpush1.xpose.msra.mxu0 0.0
  %778 = vmatprep.subr.mxu0 0.0
  %779 = vmatpush1.xpose.msra.mxu0 0.0
  %780 = vmatprep.subr.mxu0 0.0
  %781 = vmatpush1.xpose.msra.mxu0 0.0
  %782 = vmatprep.subr.mxu0 0.0
  %783 = vmatpush1.xpose.msra.mxu0 0.0
  %784 = vmatprep.subr.mxu0 0.0
  %785 = vmatpush1.xpose.msra.mxu0 0.0
  %786 = vmatprep.subr.mxu0 0.0
  %787 = vmatpush1.xpose.msra.mxu0 0.0
  %788 = vmatprep.subr.mxu0 0.0
  %789 = vmatpush1.xpose.msra.mxu0 0.0
  %790 = vmatprep.subr.mxu0 0.0
  %791 = vmatpush1.xpose.msra.mxu0 0.0
  %792 = vmatprep.subr.mxu0 0.0
  %793 = vmatpush1.xpose.msra.mxu0 0.0
  %794 = vmatprep.subr.mxu0 0.0
  %795 = vmatpush1.xpose.msra.mxu0 0.0
  %796 = vmatprep.subr.mxu0 0.0
  %797 = vmatpush1.xpose.msra.mxu0 0.0
  %798 = vmatprep.subr.mxu0 0.0
  %799 = vmatpush1.xpose.msra.mxu0 0.0
  %800 = vmatprep.subr.mxu0 0.0
  %801 = vmatpush1.xpose.msra.mxu0 0.0
  %802 = vmatprep.subr.mxu0 0.0
  %803 = vmatpush1.xpose.msra.mxu0 0.0
  %804 = vmatprep.subr.mxu0 0.0
  %805 = vmatpush1.xpose.msra.mxu0 0.0
  %806 = vmatprep.subr.mxu0 0.0
  %807 = vmatpush1.xpose.msra.mxu0 0.0
  %808 = vmatprep.subr.mxu0 0.0
  %809 = vmatpush1.xpose.msra.mxu0 0.0
  %810 = vmatprep.subr.mxu0 0.0
  %811 = vmatpush1.xpose.msra.mxu0 0.0
  %812 = vmatprep.subr.mxu0 0.0
  %813 = vmatpush1.xpose.msra.mxu0 0.0
  %814 = vmatprep.subr.mxu0 0.0
  %815 = vmatpush1.xpose.msra.mxu0 0.0
  %816 = vmatprep.subr.mxu0 0.0
  %817 = vmatpush1.xpose.msra.mxu0 0.0
  %818 = vmatprep.subr.mxu0 0.0
  %819 = vmatpush1.xpose.msra.mxu0 0.0
  %820 = vmatprep.subr.mxu0 0.0
  %821 = vmatpush1.xpose.msra.mxu0 0.0
  %822 = vmatprep.subr.mxu0 0.0
  %823 = vmatpush1.xpose.msra.mxu0 0.0
  %824 = vmatprep.subr.mxu0 0.0
  %825 = vmatpush1.xpose.msra.mxu0 0.0
  %826 = vmatprep.mubr.f32.mxu0 0.0
  %827 = vmatmul.mubr.f32.gmra.mrb[0].mxu0 %v24
  %v828 = vpop.f32.mrb[0].mxu0
  %v829 = vadd.f32 0.0, %v828
  %v830 = vpop.f32.mrb[0].mxu0
  %831 = vdwg.mxu0
  %832 = vmatprep.subr.mxu0 0.0
  %833 = vmatpush1.xpose.msra.mxu0 %v41
  %834 = vmatprep.subr.mxu0 0.0
  %835 = vmatpush1.xpose.msra.mxu0 0.0
  %836 = vmatprep.subr.mxu0 0.0
  %837 = vmatpush1.xpose.msra.mxu0 0.0
  %838 = vmatprep.subr.mxu0 0.0
  %839 = vmatpush1.xpose.msra.mxu0 0.0
  %840 = vmatprep.subr.mxu0 0.0
  %841 = vmatpush1.xpose.msra.mxu0 0.0
  %842 = vmatprep.subr.mxu0 0.0
  %843 = vmatpush1.xpose.msra.mxu0 0.0
  %844 = vmatprep.subr.mxu0 0.0
  %845 = vmatpush1.xpose.msra.mxu0 0.0
  %846 = vmatprep.subr.mxu0 0.0
  %847 = vmatpush1.xpose.msra.mxu0 0.0
  %848 = vmatprep.subr.mxu0 0.0
  %849 = vmatpush1.xpose.msra.mxu0 0.0
  %850 = vmatprep.subr.mxu0 0.0
  %851 = vmatpush1.xpose.msra.mxu0 0.0
  %852 = vmatprep.subr.mxu0 0.0
  %853 = vmatpush1.xpose.msra.mxu0 0.0
  %854 = vmatprep.subr.mxu0 0.0
  %855 = vmatpush1.xpose.msra.mxu0 0.0
  %856 = vmatprep.subr.mxu0 0.0
  %857 = vmatpush1.xpose.msra.mxu0 0.0
  %858 = vmatprep.subr.mxu0 0.0
  %859 = vmatpush1.xpose.msra.mxu0 0.0
  %860 = vmatprep.subr.mxu0 0.0
  %861 = vmatpush1.xpose.msra.mxu0 0.0
  %862 = vmatprep.subr.mxu0 0.0
  %863 = vmatpush1.xpose.msra.mxu0 0.0
  %864 = vmatprep.subr.mxu0 0.0
  %865 = vmatpush1.xpose.msra.mxu0 0.0
  %866 = vmatprep.subr.mxu0 0.0
  %867 = vmatpush1.xpose.msra.mxu0 0.0
  %868 = vmatprep.subr.mxu0 0.0
  %869 = vmatpush1.xpose.msra.mxu0 0.0
  %870 = vmatprep.subr.mxu0 0.0
  %871 = vmatpush1.xpose.msra.mxu0 0.0
  %872 = vmatprep.subr.mxu0 0.0
  %873 = vmatpush1.xpose.msra.mxu0 0.0
  %874 = vmatprep.subr.mxu0 0.0
  %875 = vmatpush1.xpose.msra.mxu0 0.0
  %876 = vmatprep.subr.mxu0 0.0
  %877 = vmatpush1.xpose.msra.mxu0 0.0
  %878 = vmatprep.subr.mxu0 0.0
  %879 = vmatpush1.xpose.msra.mxu0 0.0
  %880 = vmatprep.subr.mxu0 0.0
  %881 = vmatpush1.xpose.msra.mxu0 0.0
  %882 = vmatprep.subr.mxu0 0.0
  %883 = vmatpush1.xpose.msra.mxu0 0.0
  %884 = vmatprep.subr.mxu0 0.0
  %885 = vmatpush1.xpose.msra.mxu0 0.0
  %886 = vmatprep.subr.mxu0 0.0
  %887 = vmatpush1.xpose.msra.mxu0 0.0
  %888 = vmatprep.subr.mxu0 0.0
  %889 = vmatpush1.xpose.msra.mxu0 0.0
  %890 = vmatprep.subr.mxu0 0.0
  %891 = vmatpush1.xpose.msra.mxu0 0.0
  %892 = vmatprep.subr.mxu0 0.0
  %893 = vmatpush1.xpose.msra.mxu0 0.0
  %894 = vmatprep.subr.mxu0 0.0
  %895 = vmatpush1.xpose.msra.mxu0 0.0
  %896 = vmatprep.mubr.f32.mxu0 0.0
  %897 = vmatmul.mubr.f32.gmra.mrb[0].mxu0 %v25
  %v898 = vpop.f32.mrb[0].mxu0
  %v899 = vadd.f32 0.0, %v898
  %v900 = vpop.f32.mrb[0].mxu0
  %901 = vdwg.mxu0
  %902 = vmatprep.subr.mxu0 0.0
  %903 = vmatpush1.xpose.msra.mxu0 %v42
  %904 = vmatprep.subr.mxu0 0.0
  %905 = vmatpush1.xpose.msra.mxu0 0.0
  %906 = vmatprep.subr.mxu0 0.0
  %907 = vmatpush1.xpose.msra.mxu0 0.0
  %908 = vmatprep.subr.mxu0 0.0
  %909 = vmatpush1.xpose.msra.mxu0 0.0
  %910 = vmatprep.subr.mxu0 0.0
  %911 = vmatpush1.xpose.msra.mxu0 0.0
  %912 = vmatprep.subr.mxu0 0.0
  %913 = vmatpush1.xpose.msra.mxu0 0.0
  %914 = vmatprep.subr.mxu0 0.0
  %915 = vmatpush1.xpose.msra.mxu0 0.0
  %916 = vmatprep.subr.mxu0 0.0
  %917 = vmatpush1.xpose.msra.mxu0 0.0
  %918 = vmatprep.subr.mxu0 0.0
  %919 = vmatpush1.xpose.msra.mxu0 0.0
  %920 = vmatprep.subr.mxu0 0.0
  %921 = vmatpush1.xpose.msra.mxu0 0.0
  %922 = vmatprep.subr.mxu0 0.0
  %923 = vmatpush1.xpose.msra.mxu0 0.0
  %924 = vmatprep.subr.mxu0 0.0
  %925 = vmatpush1.xpose.msra.mxu0 0.0
  %926 = vmatprep.subr.mxu0 0.0
  %927 = vmatpush1.xpose.msra.mxu0 0.0
  %928 = vmatprep.subr.mxu0 0.0
  %929 = vmatpush1.xpose.msra.mxu0 0.0
  %930 = vmatprep.subr.mxu0 0.0
  %931 = vmatpush1.xpose.msra.mxu0 0.0
  %932 = vmatprep.subr.mxu0 0.0
  %933 = vmatpush1.xpose.msra.mxu0 0.0
  %934 = vmatprep.subr.mxu0 0.0
  %935 = vmatpush1.xpose.msra.mxu0 0.0
  %936 = vmatprep.subr.mxu0 0.0
  %937 = vmatpush1.xpose.msra.mxu0 0.0
  %938 = vmatprep.subr.mxu0 0.0
  %939 = vmatpush1.xpose.msra.mxu0 0.0
  %940 = vmatprep.subr.mxu0 0.0
  %941 = vmatpush1.xpose.msra.mxu0 0.0
  %942 = vmatprep.subr.mxu0 0.0
  %943 = vmatpush1.xpose.msra.mxu0 0.0
  %944 = vmatprep.subr.mxu0 0.0
  %945 = vmatpush1.xpose.msra.mxu0 0.0
  %946 = vmatprep.subr.mxu0 0.0
  %947 = vmatpush1.xpose.msra.mxu0 0.0
  %948 = vmatprep.subr.mxu0 0.0
  %949 = vmatpush1.xpose.msra.mxu0 0.0
  %950 = vmatprep.subr.mxu0 0.0
  %951 = vmatpush1.xpose.msra.mxu0 0.0
  %952 = vmatprep.subr.mxu0 0.0
  %953 = vmatpush1.xpose.msra.mxu0 0.0
  %954 = vmatprep.subr.mxu0 0.0
  %955 = vmatpush1.xpose.msra.mxu0 0.0
  %956 = vmatprep.subr.mxu0 0.0
  %957 = vmatpush1.xpose.msra.mxu0 0.0
  %958 = vmatprep.subr.mxu0 0.0
  %959 = vmatpush1.xpose.msra.mxu0 0.0
  %960 = vmatprep.subr.mxu0 0.0
  %961 = vmatpush1.xpose.msra.mxu0 0.0
  %962 = vmatprep.subr.mxu0 0.0
  %963 = vmatpush1.xpose.msra.mxu0 0.0
  %964 = vmatprep.subr.mxu0 0.0
  %965 = vmatpush1.xpose.msra.mxu0 0.0
  %966 = vmatprep.mubr.f32.mxu0 0.0
  %967 = vmatmul.mubr.f32.gmra.mrb[0].mxu0 %v26
  %v968 = vpop.f32.mrb[0].mxu0
  %v969 = vadd.f32 0.0, %v968
  %v970 = vpop.f32.mrb[0].mxu0
  %971 = vdwg.mxu0
  %972 = vmatprep.subr.mxu0 0.0
  %973 = vmatpush1.xpose.msra.mxu0 %v43
  %974 = vmatprep.subr.mxu0 0.0
  %975 = vmatpush1.xpose.msra.mxu0 0.0
  %976 = vmatprep.subr.mxu0 0.0
  %977 = vmatpush1.xpose.msra.mxu0 0.0
  %978 = vmatprep.subr.mxu0 0.0
  %979 = vmatpush1.xpose.msra.mxu0 0.0
  %980 = vmatprep.subr.mxu0 0.0
  %981 = vmatpush1.xpose.msra.mxu0 0.0
  %982 = vmatprep.subr.mxu0 0.0
  %983 = vmatpush1.xpose.msra.mxu0 0.0
  %984 = vmatprep.subr.mxu0 0.0
  %985 = vmatpush1.xpose.msra.mxu0 0.0
  %986 = vmatprep.subr.mxu0 0.0
  %987 = vmatpush1.xpose.msra.mxu0 0.0
  %988 = vmatprep.subr.mxu0 0.0
  %989 = vmatpush1.xpose.msra.mxu0 0.0
  %990 = vmatprep.subr.mxu0 0.0
  %991 = vmatpush1.xpose.msra.mxu0 0.0
  %992 = vmatprep.subr.mxu0 0.0
  %993 = vmatpush1.xpose.msra.mxu0 0.0
  %994 = vmatprep.subr.mxu0 0.0
  %995 = vmatpush1.xpose.msra.mxu0 0.0
  %996 = vmatprep.subr.mxu0 0.0
  %997 = vmatpush1.xpose.msra.mxu0 0.0
  %998 = vmatprep.subr.mxu0 0.0
  %999 = vmatpush1.xpose.msra.mxu0 0.0
  %1000 = vmatprep.subr.mxu0 0.0
  %1001 = vmatpush1.xpose.msra.mxu0 0.0
  %1002 = vmatprep.subr.mxu0 0.0
  %1003 = vmatpush1.xpose.msra.mxu0 0.0
  %1004 = vmatprep.subr.mxu0 0.0
  %1005 = vmatpush1.xpose.msra.mxu0 0.0
  %1006 = vmatprep.subr.mxu0 0.0
  %1007 = vmatpush1.xpose.msra.mxu0 0.0
  %1008 = vmatprep.subr.mxu0 0.0
  %1009 = vmatpush1.xpose.msra.mxu0 0.0
  %1010 = vmatprep.subr.mxu0 0.0
  %1011 = vmatpush1.xpose.msra.mxu0 0.0
  %1012 = vmatprep.subr.mxu0 0.0
  %1013 = vmatpush1.xpose.msra.mxu0 0.0
  %1014 = vmatprep.subr.mxu0 0.0
  %1015 = vmatpush1.xpose.msra.mxu0 0.0
  %1016 = vmatprep.subr.mxu0 0.0
  %1017 = vmatpush1.xpose.msra.mxu0 0.0
  %1018 = vmatprep.subr.mxu0 0.0
  %1019 = vmatpush1.xpose.msra.mxu0 0.0
  %1020 = vmatprep.subr.mxu0 0.0
  %1021 = vmatpush1.xpose.msra.mxu0 0.0
  %1022 = vmatprep.subr.mxu0 0.0
  %1023 = vmatpush1.xpose.msra.mxu0 0.0
  %1024 = vmatprep.subr.mxu0 0.0
  %1025 = vmatpush1.xpose.msra.mxu0 0.0
  %1026 = vmatprep.subr.mxu0 0.0
  %1027 = vmatpush1.xpose.msra.mxu0 0.0
  %1028 = vmatprep.subr.mxu0 0.0
  %1029 = vmatpush1.xpose.msra.mxu0 0.0
  %1030 = vmatprep.subr.mxu0 0.0
  %1031 = vmatpush1.xpose.msra.mxu0 0.0
  %1032 = vmatprep.subr.mxu0 0.0
  %1033 = vmatpush1.xpose.msra.mxu0 0.0
  %1034 = vmatprep.subr.mxu0 0.0
  %1035 = vmatpush1.xpose.msra.mxu0 0.0
  %1036 = vmatprep.mubr.f32.mxu0 0.0
  %1037 = vmatmul.mubr.f32.gmra.mrb[0].mxu0 %v27
  %v1038 = vpop.f32.mrb[0].mxu0
  %v1039 = vadd.f32 0.0, %v1038
  %v1040 = vpop.f32.mrb[0].mxu0
  %1041 = vdwg.mxu0
  %1042 = vmatprep.subr.mxu0 0.0
  %1043 = vmatpush1.xpose.msra.mxu0 %v44
  %1044 = vmatprep.subr.mxu0 0.0
  %1045 = vmatpush1.xpose.msra.mxu0 0.0
  %1046 = vmatprep.subr.mxu0 0.0
  %1047 = vmatpush1.xpose.msra.mxu0 0.0
  %1048 = vmatprep.subr.mxu0 0.0
  %1049 = vmatpush1.xpose.msra.mxu0 0.0
  %1050 = vmatprep.subr.mxu0 0.0
  %1051 = vmatpush1.xpose.msra.mxu0 0.0
  %1052 = vmatprep.subr.mxu0 0.0
  %1053 = vmatpush1.xpose.msra.mxu0 0.0
  %1054 = vmatprep.subr.mxu0 0.0
  %1055 = vmatpush1.xpose.msra.mxu0 0.0
  %1056 = vmatprep.subr.mxu0 0.0
  %1057 = vmatpush1.xpose.msra.mxu0 0.0
  %1058 = vmatprep.subr.mxu0 0.0
  %1059 = vmatpush1.xpose.msra.mxu0 0.0
  %1060 = vmatprep.subr.mxu0 0.0
  %1061 = vmatpush1.xpose.msra.mxu0 0.0
  %1062 = vmatprep.subr.mxu0 0.0
  %1063 = vmatpush1.xpose.msra.mxu0 0.0
  %1064 = vmatprep.subr.mxu0 0.0
  %1065 = vmatpush1.xpose.msra.mxu0 0.0
  %1066 = vmatprep.subr.mxu0 0.0
  %1067 = vmatpush1.xpose.msra.mxu0 0.0
  %1068 = vmatprep.subr.mxu0 0.0
  %1069 = vmatpush1.xpose.msra.mxu0 0.0
  %1070 = vmatprep.subr.mxu0 0.0
  %1071 = vmatpush1.xpose.msra.mxu0 0.0
  %1072 = vmatprep.subr.mxu0 0.0
  %1073 = vmatpush1.xpose.msra.mxu0 0.0
  %1074 = vmatprep.subr.mxu0 0.0
  %1075 = vmatpush1.xpose.msra.mxu0 0.0
  %1076 = vmatprep.subr.mxu0 0.0
  %1077 = vmatpush1.xpose.msra.mxu0 0.0
  %1078 = vmatprep.subr.mxu0 0.0
  %1079 = vmatpush1.xpose.msra.mxu0 0.0
  %1080 = vmatprep.subr.mxu0 0.0
  %1081 = vmatpush1.xpose.msra.mxu0 0.0
  %1082 = vmatprep.subr.mxu0 0.0
  %1083 = vmatpush1.xpose.msra.mxu0 0.0
  %1084 = vmatprep.subr.mxu0 0.0
  %1085 = vmatpush1.xpose.msra.mxu0 0.0
  %1086 = vmatprep.subr.mxu0 0.0
  %1087 = vmatpush1.xpose.msra.mxu0 0.0
  %1088 = vmatprep.subr.mxu0 0.0
  %1089 = vmatpush1.xpose.msra.mxu0 0.0
  %1090 = vmatprep.subr.mxu0 0.0
  %1091 = vmatpush1.xpose.msra.mxu0 0.0
  %1092 = vmatprep.subr.mxu0 0.0
  %1093 = vmatpush1.xpose.msra.mxu0 0.0
  %1094 = vmatprep.subr.mxu0 0.0
  %1095 = vmatpush1.xpose.msra.mxu0 0.0
  %1096 = vmatprep.subr.mxu0 0.0
  %1097 = vmatpush1.xpose.msra.mxu0 0.0
  %1098 = vmatprep.subr.mxu0 0.0
  %1099 = vmatpush1.xpose.msra.mxu0 0.0
  %1100 = vmatprep.subr.mxu0 0.0
  %1101 = vmatpush1.xpose.msra.mxu0 0.0
  %1102 = vmatprep.subr.mxu0 0.0
  %1103 = vmatpush1.xpose.msra.mxu0 0.0
  %1104 = vmatprep.subr.mxu0 0.0
  %1105 = vmatpush1.xpose.msra.mxu0 0.0
  %1106 = vmatprep.mubr.f32.mxu0 0.0
  %1107 = vmatmul.mubr.f32.gmra.mrb[0].mxu0 %v28
  %v1108 = vpop.f32.mrb[0].mxu0
  %v1109 = vadd.f32 0.0, %v1108
  %v1110 = vpop.f32.mrb[0].mxu0
  %1111 = vdwg.mxu0
  %1112 = vmatprep.subr.mxu0 0.0
  %1113 = vmatpush1.xpose.msra.mxu0 %v45
  %1114 = vmatprep.subr.mxu0 0.0
  %1115 = vmatpush1.xpose.msra.mxu0 0.0
  %1116 = vmatprep.subr.mxu0 0.0
  %1117 = vmatpush1.xpose.msra.mxu0 0.0
  %1118 = vmatprep.subr.mxu0 0.0
  %1119 = vmatpush1.xpose.msra.mxu0 0.0
  %1120 = vmatprep.subr.mxu0 0.0
  %1121 = vmatpush1.xpose.msra.mxu0 0.0
  %1122 = vmatprep.subr.mxu0 0.0
  %1123 = vmatpush1.xpose.msra.mxu0 0.0
  %1124 = vmatprep.subr.mxu0 0.0
  %1125 = vmatpush1.xpose.msra.mxu0 0.0
  %1126 = vmatprep.subr.mxu0 0.0
  %1127 = vmatpush1.xpose.msra.mxu0 0.0
  %1128 = vmatprep.subr.mxu0 0.0
  %1129 = vmatpush1.xpose.msra.mxu0 0.0
  %1130 = vmatprep.subr.mxu0 0.0
  %1131 = vmatpush1.xpose.msra.mxu0 0.0
  %1132 = vmatprep.subr.mxu0 0.0
  %1133 = vmatpush1.xpose.msra.mxu0 0.0
  %1134 = vmatprep.subr.mxu0 0.0
  %1135 = vmatpush1.xpose.msra.mxu0 0.0
  %1136 = vmatprep.subr.mxu0 0.0
  %1137 = vmatpush1.xpose.msra.mxu0 0.0
  %1138 = vmatprep.subr.mxu0 0.0
  %1139 = vmatpush1.xpose.msra.mxu0 0.0
  %1140 = vmatprep.subr.mxu0 0.0
  %1141 = vmatpush1.xpose.msra.mxu0 0.0
  %1142 = vmatprep.subr.mxu0 0.0
  %1143 = vmatpush1.xpose.msra.mxu0 0.0
  %1144 = vmatprep.subr.mxu0 0.0
  %1145 = vmatpush1.xpose.msra.mxu0 0.0
  %1146 = vmatprep.subr.mxu0 0.0
  %1147 = vmatpush1.xpose.msra.mxu0 0.0
  %1148 = vmatprep.subr.mxu0 0.0
  %1149 = vmatpush1.xpose.msra.mxu0 0.0
  %1150 = vmatprep.subr.mxu0 0.0
  %1151 = vmatpush1.xpose.msra.mxu0 0.0
  %1152 = vmatprep.subr.mxu0 0.0
  %1153 = vmatpush1.xpose.msra.mxu0 0.0
  %1154 = vmatprep.subr.mxu0 0.0
  %1155 = vmatpush1.xpose.msra.mxu0 0.0
  %1156 = vmatprep.subr.mxu0 0.0
  %1157 = vmatpush1.xpose.msra.mxu0 0.0
  %1158 = vmatprep.subr.mxu0 0.0
  %1159 = vmatpush1.xpose.msra.mxu0 0.0
  %1160 = vmatprep.subr.mxu0 0.0
  %1161 = vmatpush1.xpose.msra.mxu0 0.0
  %1162 = vmatprep.subr.mxu0 0.0
  %1163 = vmatpush1.xpose.msra.mxu0 0.0
  %1164 = vmatprep.subr.mxu0 0.0
  %1165 = vmatpush1.xpose.msra.mxu0 0.0
  %1166 = vmatprep.subr.mxu0 0.0
  %1167 = vmatpush1.xpose.msra.mxu0 0.0
  %1168 = vmatprep.subr.mxu0 0.0
  %1169 = vmatpush1.xpose.msra.mxu0 0.0
  %1170 = vmatprep.subr.mxu0 0.0
  %1171 = vmatpush1.xpose.msra.mxu0 0.0
  %1172 = vmatprep.subr.mxu0 0.0
  %1173 = vmatpush1.xpose.msra.mxu0 0.0
  %1174 = vmatprep.subr.mxu0 0.0
  %1175 = vmatpush1.xpose.msra.mxu0 0.0
  %1176 = vmatprep.mubr.f32.mxu0 0.0
  %1177 = vmatmul.mubr.f32.gmra.mrb[0].mxu0 %v29
  %v1178 = vpop.f32.mrb[0].mxu0
  %v1179 = vadd.f32 0.0, %v1178
  %v1180 = vpop.f32.mrb[0].mxu0
  %1181 = vdwg.mxu0
  %v1182 = vmul.f32 %v129, 0.25
  %v1183 = vmul.f32 %v199, 0.25
  %v1184 = vmul.f32 %v269, 0.25
  %v1185 = vmul.f32 %v339, 0.25
  %v1186 = vmul.f32 %v409, 0.25
  %v1187 = vmul.f32 %v479, 0.25
  %v1188 = vmul.f32 %v549, 0.25
  %v1189 = vmul.f32 %v619, 0.25
  %v1190 = vmul.f32 %v689, 0.25
  %v1191 = vmul.f32 %v759, 0.25
  %v1192 = vmul.f32 %v829, 0.25
  %v1193 = vmul.f32 %v899, 0.25
  %v1194 = vmul.f32 %v969, 0.25
  %v1195 = vmul.f32 %v1039, 0.25
  %v1196 = vmul.f32 %v1109, 0.25
  %v1197 = vmul.f32 %v1179, 0.25
  %v1198 = vlaneseq
  %v1199 = vand.u32 %v1198, 127
  %vm1200 = vcmp.lt.s32.totalorder %v1199, 8
  %v1201 = vsel %vm1200, %v1182, -1e+30
  %v1202 = vsel %vm1200, %v1183, -1e+30
  %v1203 = vsel %vm1200, %v1184, -1e+30
  %v1204 = vsel %vm1200, %v1185, -1e+30
  %v1205 = vsel %vm1200, %v1186, -1e+30
  %v1206 = vsel %vm1200, %v1187, -1e+30
  %v1207 = vsel %vm1200, %v1188, -1e+30
  %v1208 = vsel %vm1200, %v1189, -1e+30
  %v1209 = vsel %vm1200, %v1190, -1e+30
  %v1210 = vsel %vm1200, %v1191, -1e+30
  %v1211 = vsel %vm1200, %v1192, -1e+30
  %v1212 = vsel %vm1200, %v1193, -1e+30
  %v1213 = vsel %vm1200, %v1194, -1e+30
  %v1214 = vsel %vm1200, %v1195, -1e+30
  %v1215 = vsel %vm1200, %v1196, -1e+30
  %v1216 = vsel %vm1200, %v1197, -1e+30
  %vm1217 = vcmask 64512
  %v1218 = vsel %vm1217, %v1201, -inf
  %1219 = vmax.xlane.f32.xlu0 %v1218
  %v1220 = vpop.xlane.xlu0 %1219
  %v1221 = vsel %vm1217, %v1202, -inf
  %1222 = vmax.xlane.f32.xlu0 %v1221
  %v1223 = vpop.xlane.xlu0 %1222
  %v1224 = vsel %vm1217, %v1203, -inf
  %1225 = vmax.xlane.f32.xlu0 %v1224
  %v1226 = vpop.xlane.xlu0 %1225
  %v1227 = vsel %vm1217, %v1204, -inf
  %1228 = vmax.xlane.f32.xlu0 %v1227
  %v1229 = vpop.xlane.xlu0 %1228
  %v1230 = vsel %vm1217, %v1205, -inf
  %1231 = vmax.xlane.f32.xlu0 %v1230
  %v1232 = vpop.xlane.xlu0 %1231
  %v1233 = vsel %vm1217, %v1206, -inf
  %1234 = vmax.xlane.f32.xlu0 %v1233
  %v1235 = vpop.xlane.xlu0 %1234
  %v1236 = vsel %vm1217, %v1207, -inf
  %1237 = vmax.xlane.f32.xlu0 %v1236
  %v1238 = vpop.xlane.xlu0 %1237
  %v1239 = vsel %vm1217, %v1208, -inf
  %1240 = vmax.xlane.f32.xlu0 %v1239
  %v1241 = vpop.xlane.xlu0 %1240
  %v1242 = vsel %vm1217, %v1209, -inf
  %1243 = vmax.xlane.f32.xlu0 %v1242
  %v1244 = vpop.xlane.xlu0 %1243
  %v1245 = vsel %vm1217, %v1210, -inf
  %1246 = vmax.xlane.f32.xlu0 %v1245
  %v1247 = vpop.xlane.xlu0 %1246
  %v1248 = vsel %vm1217, %v1211, -inf
  %1249 = vmax.xlane.f32.xlu0 %v1248
  %v1250 = vpop.xlane.xlu0 %1249
  %v1251 = vsel %vm1217, %v1212, -inf
  %1252 = vmax.xlane.f32.xlu0 %v1251
  %v1253 = vpop.xlane.xlu0 %1252
  %v1254 = vsel %vm1217, %v1213, -inf
  %1255 = vmax.xlane.f32.xlu0 %v1254
  %v1256 = vpop.xlane.xlu0 %1255
  %v1257 = vsel %vm1217, %v1214, -inf
  %1258 = vmax.xlane.f32.xlu0 %v1257
  %v1259 = vpop.xlane.xlu0 %1258
  %v1260 = vsel %vm1217, %v1215, -inf
  %1261 = vmax.xlane.f32.xlu0 %v1260
  %v1262 = vpop.xlane.xlu0 %1261
  %v1263 = vsel %vm1217, %v1216, -inf
  %1264 = vmax.xlane.f32.xlu0 %v1263
  %v1265 = vpop.xlane.xlu0 %1264
  %v1266 = vsub.f32 %v1201, %v1220
  %v1267 = vsub.f32 %v1202, %v1223
  %v1268 = vsub.f32 %v1203, %v1226
  %v1269 = vsub.f32 %v1204, %v1229
  %v1270 = vsub.f32 %v1205, %v1232
  %v1271 = vsub.f32 %v1206, %v1235
  %v1272 = vsub.f32 %v1207, %v1238
  %v1273 = vsub.f32 %v1208, %v1241
  %v1274 = vsub.f32 %v1209, %v1244
  %v1275 = vsub.f32 %v1210, %v1247
  %v1276 = vsub.f32 %v1211, %v1250
  %v1277 = vsub.f32 %v1212, %v1253
  %v1278 = vsub.f32 %v1213, %v1256
  %v1279 = vsub.f32 %v1214, %v1259
  %v1280 = vsub.f32 %v1215, %v1262
  %v1281 = vsub.f32 %v1216, %v1265
  %v1282 = vmul.f32 %v1266, 1.442695
  %v1283 = vpow.pop %v1282
  %v1284 = vmul.f32 %v1267, 1.442695
  %v1285 = vpow.pop %v1284
  %v1286 = vmul.f32 %v1268, 1.442695
  %v1287 = vpow.pop %v1286
  %v1288 = vmul.f32 %v1269, 1.442695
  %v1289 = vpow.pop %v1288
  %v1290 = vmul.f32 %v1270, 1.442695
  %v1291 = vpow.pop %v1290
  %v1292 = vmul.f32 %v1271, 1.442695
  %v1293 = vpow.pop %v1292
  %v1294 = vmul.f32 %v1272, 1.442695
  %v1295 = vpow.pop %v1294
  %v1296 = vmul.f32 %v1273, 1.442695
  %v1297 = vpow.pop %v1296
  %v1298 = vmul.f32 %v1274, 1.442695
  %v1299 = vpow.pop %v1298
  %v1300 = vmul.f32 %v1275, 1.442695
  %v1301 = vpow.pop %v1300
  %v1302 = vmul.f32 %v1276, 1.442695
  %v1303 = vpow.pop %v1302
  %v1304 = vmul.f32 %v1277, 1.442695
  %v1305 = vpow.pop %v1304
  %v1306 = vmul.f32 %v1278, 1.442695
  %v1307 = vpow.pop %v1306
  %v1308 = vmul.f32 %v1279, 1.442695
  %v1309 = vpow.pop %v1308
  %v1310 = vmul.f32 %v1280, 1.442695
  %v1311 = vpow.pop %v1310
  %v1312 = vmul.f32 %v1281, 1.442695
  %v1313 = vpow.pop %v1312
  %v1314 = vsel %vm1217, %v1283, 0.0
  %1315 = vadd.xlane.f32.xlu0 %v1314
  %v1316 = vpop.xlane.xlu0 %1315
  %v1317 = vsel %vm1217, %v1285, 0.0
  %1318 = vadd.xlane.f32.xlu0 %v1317
  %v1319 = vpop.xlane.xlu0 %1318
  %v1320 = vsel %vm1217, %v1287, 0.0
  %1321 = vadd.xlane.f32.xlu0 %v1320
  %v1322 = vpop.xlane.xlu0 %1321
  %v1323 = vsel %vm1217, %v1289, 0.0
  %1324 = vadd.xlane.f32.xlu0 %v1323
  %v1325 = vpop.xlane.xlu0 %1324
  %v1326 = vsel %vm1217, %v1291, 0.0
  %1327 = vadd.xlane.f32.xlu0 %v1326
  %v1328 = vpop.xlane.xlu0 %1327
  %v1329 = vsel %vm1217, %v1293, 0.0
  %1330 = vadd.xlane.f32.xlu0 %v1329
  %v1331 = vpop.xlane.xlu0 %1330
  %v1332 = vsel %vm1217, %v1295, 0.0
  %1333 = vadd.xlane.f32.xlu0 %v1332
  %v1334 = vpop.xlane.xlu0 %1333
  %v1335 = vsel %vm1217, %v1297, 0.0
  %1336 = vadd.xlane.f32.xlu0 %v1335
  %v1337 = vpop.xlane.xlu0 %1336
  %v1338 = vsel %vm1217, %v1299, 0.0
  %1339 = vadd.xlane.f32.xlu0 %v1338
  %v1340 = vpop.xlane.xlu0 %1339
  %v1341 = vsel %vm1217, %v1301, 0.0
  %1342 = vadd.xlane.f32.xlu0 %v1341
  %v1343 = vpop.xlane.xlu0 %1342
  %v1344 = vsel %vm1217, %v1303, 0.0
  %1345 = vadd.xlane.f32.xlu0 %v1344
  %v1346 = vpop.xlane.xlu0 %1345
  %v1347 = vsel %vm1217, %v1305, 0.0
  %1348 = vadd.xlane.f32.xlu0 %v1347
  %v1349 = vpop.xlane.xlu0 %1348
  %v1350 = vsel %vm1217, %v1307, 0.0
  %1351 = vadd.xlane.f32.xlu0 %v1350
  %v1352 = vpop.xlane.xlu0 %1351
  %v1353 = vsel %vm1217, %v1309, 0.0
  %1354 = vadd.xlane.f32.xlu0 %v1353
  %v1355 = vpop.xlane.xlu0 %1354
  %v1356 = vsel %vm1217, %v1311, 0.0
  %1357 = vadd.xlane.f32.xlu0 %v1356
  %v1358 = vpop.xlane.xlu0 %1357
  %v1359 = vsel %vm1217, %v1313, 0.0
  %1360 = vadd.xlane.f32.xlu0 %v1359
  %v1361 = vpop.xlane.xlu0 %1360
  %v1362 = vrcp.pop %v1316
  %v1363 = vrcp.pop %v1319
  %v1364 = vrcp.pop %v1322
  %v1365 = vrcp.pop %v1325
  %v1366 = vrcp.pop %v1328
  %v1367 = vrcp.pop %v1331
  %v1368 = vrcp.pop %v1334
  %v1369 = vrcp.pop %v1337
  %v1370 = vrcp.pop %v1340
  %v1371 = vrcp.pop %v1343
  %v1372 = vrcp.pop %v1346
  %v1373 = vrcp.pop %v1349
  %v1374 = vrcp.pop %v1352
  %v1375 = vrcp.pop %v1355
  %v1376 = vrcp.pop %v1358
  %v1377 = vrcp.pop %v1361
  %v1378 = vmul.f32 %v1283, %v1362
  %v1379 = vmul.f32 %v1285, %v1363
  %v1380 = vmul.f32 %v1287, %v1364
  %v1381 = vmul.f32 %v1289, %v1365
  %v1382 = vmul.f32 %v1291, %v1366
  %v1383 = vmul.f32 %v1293, %v1367
  %v1384 = vmul.f32 %v1295, %v1368
  %v1385 = vmul.f32 %v1297, %v1369
  %v1386 = vmul.f32 %v1299, %v1370
  %v1387 = vmul.f32 %v1301, %v1371
  %v1388 = vmul.f32 %v1303, %v1372
  %v1389 = vmul.f32 %v1305, %v1373
  %v1390 = vmul.f32 %v1307, %v1374
  %v1391 = vmul.f32 %v1309, %v1375
  %v1392 = vmul.f32 %v1311, %v1376
  %v1393 = vmul.f32 %v1313, %v1377
  %v1395 = vsel %vm1217, %v1378, 0
  %1397 = vmatprep.subr.mxu0 0.0
  %1398 = vmatpush1.msra.mxu0 %v46
  %1399 = vmatprep.subr.mxu0 0.0
  %1400 = vmatpush1.msra.mxu0 0.0
  %1401 = vmatprep.subr.mxu0 0.0
  %1402 = vmatpush1.msra.mxu0 0.0
  %1403 = vmatprep.subr.mxu0 0.0
  %1404 = vmatpush1.msra.mxu0 0.0
  %1405 = vmatprep.subr.mxu0 0.0
  %1406 = vmatpush1.msra.mxu0 0.0
  %1407 = vmatprep.subr.mxu0 0.0
  %1408 = vmatpush1.msra.mxu0 0.0
  %1409 = vmatprep.subr.mxu0 0.0
  %1410 = vmatpush1.msra.mxu0 0.0
  %1411 = vmatprep.subr.mxu0 0.0
  %1412 = vmatpush1.msra.mxu0 0.0
  %1413 = vmatprep.subr.mxu0 0.0
  %1414 = vmatpush1.msra.mxu0 0.0
  %1415 = vmatprep.subr.mxu0 0.0
  %1416 = vmatpush1.msra.mxu0 0.0
  %1417 = vmatprep.subr.mxu0 0.0
  %1418 = vmatpush1.msra.mxu0 0.0
  %1419 = vmatprep.subr.mxu0 0.0
  %1420 = vmatpush1.msra.mxu0 0.0
  %1421 = vmatprep.subr.mxu0 0.0
  %1422 = vmatpush1.msra.mxu0 0.0
  %1423 = vmatprep.subr.mxu0 0.0
  %1424 = vmatpush1.msra.mxu0 0.0
  %1425 = vmatprep.subr.mxu0 0.0
  %1426 = vmatpush1.msra.mxu0 0.0
  %1427 = vmatprep.subr.mxu0 0.0
  %1428 = vmatpush1.msra.mxu0 0.0
  %1429 = vmatprep.subr.mxu0 0.0
  %1430 = vmatpush1.msra.mxu0 0.0
  %1431 = vmatprep.subr.mxu0 0.0
  %1432 = vmatpush1.msra.mxu0 0.0
  %1433 = vmatprep.subr.mxu0 0.0
  %1434 = vmatpush1.msra.mxu0 0.0
  %1435 = vmatprep.subr.mxu0 0.0
  %1436 = vmatpush1.msra.mxu0 0.0
  %1437 = vmatprep.subr.mxu0 0.0
  %1438 = vmatpush1.msra.mxu0 0.0
  %1439 = vmatprep.subr.mxu0 0.0
  %1440 = vmatpush1.msra.mxu0 0.0
  %1441 = vmatprep.subr.mxu0 0.0
  %1442 = vmatpush1.msra.mxu0 0.0
  %1443 = vmatprep.subr.mxu0 0.0
  %1444 = vmatpush1.msra.mxu0 0.0
  %1445 = vmatprep.subr.mxu0 0.0
  %1446 = vmatpush1.msra.mxu0 0.0
  %1447 = vmatprep.subr.mxu0 0.0
  %1448 = vmatpush1.msra.mxu0 0.0
  %1449 = vmatprep.subr.mxu0 0.0
  %1450 = vmatpush1.msra.mxu0 0.0
  %1451 = vmatprep.subr.mxu0 0.0
  %1452 = vmatpush1.msra.mxu0 0.0
  %1453 = vmatprep.subr.mxu0 0.0
  %1454 = vmatpush1.msra.mxu0 0.0
  %1455 = vmatprep.subr.mxu0 0.0
  %1456 = vmatpush1.msra.mxu0 0.0
  %1457 = vmatprep.subr.mxu0 0.0
  %1458 = vmatpush1.msra.mxu0 0.0
  %1459 = vmatprep.subr.mxu0 0.0
  %1460 = vmatpush1.msra.mxu0 0.0
  %1461 = vmatprep.mubr.f32.mxu0 0.0
  %1462 = vmatmul.mubr.f32.gmra.mrb[0].mxu0 %v1395
  %v1463 = vpop.f32.mrb[0].mxu0
  %v1464 = vadd.f32 0.0, %v1463
  %v1465 = vpop.f32.mrb[0].mxu0
  %1466 = vdwg.mxu0
  %v1468 = vsel %vm1217, %v1379, 0
  %1470 = vmatprep.subr.mxu0 0.0
  %1471 = vmatpush1.msra.mxu0 %v47
  %1472 = vmatprep.subr.mxu0 0.0
  %1473 = vmatpush1.msra.mxu0 0.0
  %1474 = vmatprep.subr.mxu0 0.0
  %1475 = vmatpush1.msra.mxu0 0.0
  %1476 = vmatprep.subr.mxu0 0.0
  %1477 = vmatpush1.msra.mxu0 0.0
  %1478 = vmatprep.subr.mxu0 0.0
  %1479 = vmatpush1.msra.mxu0 0.0
  %1480 = vmatprep.subr.mxu0 0.0
  %1481 = vmatpush1.msra.mxu0 0.0
  %1482 = vmatprep.subr.mxu0 0.0
  %1483 = vmatpush1.msra.mxu0 0.0
  %1484 = vmatprep.subr.mxu0 0.0
  %1485 = vmatpush1.msra.mxu0 0.0
  %1486 = vmatprep.subr.mxu0 0.0
  %1487 = vmatpush1.msra.mxu0 0.0
  %1488 = vmatprep.subr.mxu0 0.0
  %1489 = vmatpush1.msra.mxu0 0.0
  %1490 = vmatprep.subr.mxu0 0.0
  %1491 = vmatpush1.msra.mxu0 0.0
  %1492 = vmatprep.subr.mxu0 0.0
  %1493 = vmatpush1.msra.mxu0 0.0
  %1494 = vmatprep.subr.mxu0 0.0
  %1495 = vmatpush1.msra.mxu0 0.0
  %1496 = vmatprep.subr.mxu0 0.0
  %1497 = vmatpush1.msra.mxu0 0.0
  %1498 = vmatprep.subr.mxu0 0.0
  %1499 = vmatpush1.msra.mxu0 0.0
  %1500 = vmatprep.subr.mxu0 0.0
  %1501 = vmatpush1.msra.mxu0 0.0
  %1502 = vmatprep.subr.mxu0 0.0
  %1503 = vmatpush1.msra.mxu0 0.0
  %1504 = vmatprep.subr.mxu0 0.0
  %1505 = vmatpush1.msra.mxu0 0.0
  %1506 = vmatprep.subr.mxu0 0.0
  %1507 = vmatpush1.msra.mxu0 0.0
  %1508 = vmatprep.subr.mxu0 0.0
  %1509 = vmatpush1.msra.mxu0 0.0
  %1510 = vmatprep.subr.mxu0 0.0
  %1511 = vmatpush1.msra.mxu0 0.0
  %1512 = vmatprep.subr.mxu0 0.0
  %1513 = vmatpush1.msra.mxu0 0.0
  %1514 = vmatprep.subr.mxu0 0.0
  %1515 = vmatpush1.msra.mxu0 0.0
  %1516 = vmatprep.subr.mxu0 0.0
  %1517 = vmatpush1.msra.mxu0 0.0
  %1518 = vmatprep.subr.mxu0 0.0
  %1519 = vmatpush1.msra.mxu0 0.0
  %1520 = vmatprep.subr.mxu0 0.0
  %1521 = vmatpush1.msra.mxu0 0.0
  %1522 = vmatprep.subr.mxu0 0.0
  %1523 = vmatpush1.msra.mxu0 0.0
  %1524 = vmatprep.subr.mxu0 0.0
  %1525 = vmatpush1.msra.mxu0 0.0
  %1526 = vmatprep.subr.mxu0 0.0
  %1527 = vmatpush1.msra.mxu0 0.0
  %1528 = vmatprep.subr.mxu0 0.0
  %1529 = vmatpush1.msra.mxu0 0.0
  %1530 = vmatprep.subr.mxu0 0.0
  %1531 = vmatpush1.msra.mxu0 0.0
  %1532 = vmatprep.subr.mxu0 0.0
  %1533 = vmatpush1.msra.mxu0 0.0
  %1534 = vmatprep.mubr.f32.mxu0 0.0
  %1535 = vmatmul.mubr.f32.gmra.mrb[0].mxu0 %v1468
  %v1536 = vpop.f32.mrb[0].mxu0
  %v1537 = vadd.f32 0.0, %v1536
  %v1538 = vpop.f32.mrb[0].mxu0
  %1539 = vdwg.mxu0
  %v1541 = vsel %vm1217, %v1380, 0
  %1543 = vmatprep.subr.mxu0 0.0
  %1544 = vmatpush1.msra.mxu0 %v48
  %1545 = vmatprep.subr.mxu0 0.0
  %1546 = vmatpush1.msra.mxu0 0.0
  %1547 = vmatprep.subr.mxu0 0.0
  %1548 = vmatpush1.msra.mxu0 0.0
  %1549 = vmatprep.subr.mxu0 0.0
  %1550 = vmatpush1.msra.mxu0 0.0
  %1551 = vmatprep.subr.mxu0 0.0
  %1552 = vmatpush1.msra.mxu0 0.0
  %1553 = vmatprep.subr.mxu0 0.0
  %1554 = vmatpush1.msra.mxu0 0.0
  %1555 = vmatprep.subr.mxu0 0.0
  %1556 = vmatpush1.msra.mxu0 0.0
  %1557 = vmatprep.subr.mxu0 0.0
  %1558 = vmatpush1.msra.mxu0 0.0
  %1559 = vmatprep.subr.mxu0 0.0
  %1560 = vmatpush1.msra.mxu0 0.0
  %1561 = vmatprep.subr.mxu0 0.0
  %1562 = vmatpush1.msra.mxu0 0.0
  %1563 = vmatprep.subr.mxu0 0.0
  %1564 = vmatpush1.msra.mxu0 0.0
  %1565 = vmatprep.subr.mxu0 0.0
  %1566 = vmatpush1.msra.mxu0 0.0
  %1567 = vmatprep.subr.mxu0 0.0
  %1568 = vmatpush1.msra.mxu0 0.0
  %1569 = vmatprep.subr.mxu0 0.0
  %1570 = vmatpush1.msra.mxu0 0.0
  %1571 = vmatprep.subr.mxu0 0.0
  %1572 = vmatpush1.msra.mxu0 0.0
  %1573 = vmatprep.subr.mxu0 0.0
  %1574 = vmatpush1.msra.mxu0 0.0
  %1575 = vmatprep.subr.mxu0 0.0
  %1576 = vmatpush1.msra.mxu0 0.0
  %1577 = vmatprep.subr.mxu0 0.0
  %1578 = vmatpush1.msra.mxu0 0.0
  %1579 = vmatprep.subr.mxu0 0.0
  %1580 = vmatpush1.msra.mxu0 0.0
  %1581 = vmatprep.subr.mxu0 0.0
  %1582 = vmatpush1.msra.mxu0 0.0
  %1583 = vmatprep.subr.mxu0 0.0
  %1584 = vmatpush1.msra.mxu0 0.0
  %1585 = vmatprep.subr.mxu0 0.0
  %1586 = vmatpush1.msra.mxu0 0.0
  %1587 = vmatprep.subr.mxu0 0.0
  %1588 = vmatpush1.msra.mxu0 0.0
  %1589 = vmatprep.subr.mxu0 0.0
  %1590 = vmatpush1.msra.mxu0 0.0
  %1591 = vmatprep.subr.mxu0 0.0
  %1592 = vmatpush1.msra.mxu0 0.0
  %1593 = vmatprep.subr.mxu0 0.0
  %1594 = vmatpush1.msra.mxu0 0.0
  %1595 = vmatprep.subr.mxu0 0.0
  %1596 = vmatpush1.msra.mxu0 0.0
  %1597 = vmatprep.subr.mxu0 0.0
  %1598 = vmatpush1.msra.mxu0 0.0
  %1599 = vmatprep.subr.mxu0 0.0
  %1600 = vmatpush1.msra.mxu0 0.0
  %1601 = vmatprep.subr.mxu0 0.0
  %1602 = vmatpush1.msra.mxu0 0.0
  %1603 = vmatprep.subr.mxu0 0.0
  %1604 = vmatpush1.msra.mxu0 0.0
  %1605 = vmatprep.subr.mxu0 0.0
  %1606 = vmatpush1.msra.mxu0 0.0
  %1607 = vmatprep.mubr.f32.mxu0 0.0
  %1608 = vmatmul.mubr.f32.gmra.mrb[0].mxu0 %v1541
  %v1609 = vpop.f32.mrb[0].mxu0
  %v1610 = vadd.f32 0.0, %v1609
  %v1611 = vpop.f32.mrb[0].mxu0
  %1612 = vdwg.mxu0
  %v1614 = vsel %vm1217, %v1381, 0
  %1616 = vmatprep.subr.mxu0 0.0
  %1617 = vmatpush1.msra.mxu0 %v49
  %1618 = vmatprep.subr.mxu0 0.0
  %1619 = vmatpush1.msra.mxu0 0.0
  %1620 = vmatprep.subr.mxu0 0.0
  %1621 = vmatpush1.msra.mxu0 0.0
  %1622 = vmatprep.subr.mxu0 0.0
  %1623 = vmatpush1.msra.mxu0 0.0
  %1624 = vmatprep.subr.mxu0 0.0
  %1625 = vmatpush1.msra.mxu0 0.0
  %1626 = vmatprep.subr.mxu0 0.0
  %1627 = vmatpush1.msra.mxu0 0.0
  %1628 = vmatprep.subr.mxu0 0.0
  %1629 = vmatpush1.msra.mxu0 0.0
  %1630 = vmatprep.subr.mxu0 0.0
  %1631 = vmatpush1.msra.mxu0 0.0
  %1632 = vmatprep.subr.mxu0 0.0
  %1633 = vmatpush1.msra.mxu0 0.0
  %1634 = vmatprep.subr.mxu0 0.0
  %1635 = vmatpush1.msra.mxu0 0.0
  %1636 = vmatprep.subr.mxu0 0.0
  %1637 = vmatpush1.msra.mxu0 0.0
  %1638 = vmatprep.subr.mxu0 0.0
  %1639 = vmatpush1.msra.mxu0 0.0
  %1640 = vmatprep.subr.mxu0 0.0
  %1641 = vmatpush1.msra.mxu0 0.0
  %1642 = vmatprep.subr.mxu0 0.0
  %1643 = vmatpush1.msra.mxu0 0.0
  %1644 = vmatprep.subr.mxu0 0.0
  %1645 = vmatpush1.msra.mxu0 0.0
  %1646 = vmatprep.subr.mxu0 0.0
  %1647 = vmatpush1.msra.mxu0 0.0
  %1648 = vmatprep.subr.mxu0 0.0
  %1649 = vmatpush1.msra.mxu0 0.0
  %1650 = vmatprep.subr.mxu0 0.0
  %1651 = vmatpush1.msra.mxu0 0.0
  %1652 = vmatprep.subr.mxu0 0.0
  %1653 = vmatpush1.msra.mxu0 0.0
  %1654 = vmatprep.subr.mxu0 0.0
  %1655 = vmatpush1.msra.mxu0 0.0
  %1656 = vmatprep.subr.mxu0 0.0
  %1657 = vmatpush1.msra.mxu0 0.0
  %1658 = vmatprep.subr.mxu0 0.0
  %1659 = vmatpush1.msra.mxu0 0.0
  %1660 = vmatprep.subr.mxu0 0.0
  %1661 = vmatpush1.msra.mxu0 0.0
  %1662 = vmatprep.subr.mxu0 0.0
  %1663 = vmatpush1.msra.mxu0 0.0
  %1664 = vmatprep.subr.mxu0 0.0
  %1665 = vmatpush1.msra.mxu0 0.0
  %1666 = vmatprep.subr.mxu0 0.0
  %1667 = vmatpush1.msra.mxu0 0.0
  %1668 = vmatprep.subr.mxu0 0.0
  %1669 = vmatpush1.msra.mxu0 0.0
  %1670 = vmatprep.subr.mxu0 0.0
  %1671 = vmatpush1.msra.mxu0 0.0
  %1672 = vmatprep.subr.mxu0 0.0
  %1673 = vmatpush1.msra.mxu0 0.0
  %1674 = vmatprep.subr.mxu0 0.0
  %1675 = vmatpush1.msra.mxu0 0.0
  %1676 = vmatprep.subr.mxu0 0.0
  %1677 = vmatpush1.msra.mxu0 0.0
  %1678 = vmatprep.subr.mxu0 0.0
  %1679 = vmatpush1.msra.mxu0 0.0
  %1680 = vmatprep.mubr.f32.mxu0 0.0
  %1681 = vmatmul.mubr.f32.gmra.mrb[0].mxu0 %v1614
  %v1682 = vpop.f32.mrb[0].mxu0
  %v1683 = vadd.f32 0.0, %v1682
  %v1684 = vpop.f32.mrb[0].mxu0
  %1685 = vdwg.mxu0
  %v1687 = vsel %vm1217, %v1382, 0
  %1689 = vmatprep.subr.mxu0 0.0
  %1690 = vmatpush1.msra.mxu0 %v50
  %1691 = vmatprep.subr.mxu0 0.0
  %1692 = vmatpush1.msra.mxu0 0.0
  %1693 = vmatprep.subr.mxu0 0.0
  %1694 = vmatpush1.msra.mxu0 0.0
  %1695 = vmatprep.subr.mxu0 0.0
  %1696 = vmatpush1.msra.mxu0 0.0
  %1697 = vmatprep.subr.mxu0 0.0
  %1698 = vmatpush1.msra.mxu0 0.0
  %1699 = vmatprep.subr.mxu0 0.0
  %1700 = vmatpush1.msra.mxu0 0.0
  %1701 = vmatprep.subr.mxu0 0.0
  %1702 = vmatpush1.msra.mxu0 0.0
  %1703 = vmatprep.subr.mxu0 0.0
  %1704 = vmatpush1.msra.mxu0 0.0
  %1705 = vmatprep.subr.mxu0 0.0
  %1706 = vmatpush1.msra.mxu0 0.0
  %1707 = vmatprep.subr.mxu0 0.0
  %1708 = vmatpush1.msra.mxu0 0.0
  %1709 = vmatprep.subr.mxu0 0.0
  %1710 = vmatpush1.msra.mxu0 0.0
  %1711 = vmatprep.subr.mxu0 0.0
  %1712 = vmatpush1.msra.mxu0 0.0
  %1713 = vmatprep.subr.mxu0 0.0
  %1714 = vmatpush1.msra.mxu0 0.0
  %1715 = vmatprep.subr.mxu0 0.0
  %1716 = vmatpush1.msra.mxu0 0.0
  %1717 = vmatprep.subr.mxu0 0.0
  %1718 = vmatpush1.msra.mxu0 0.0
  %1719 = vmatprep.subr.mxu0 0.0
  %1720 = vmatpush1.msra.mxu0 0.0
  %1721 = vmatprep.subr.mxu0 0.0
  %1722 = vmatpush1.msra.mxu0 0.0
  %1723 = vmatprep.subr.mxu0 0.0
  %1724 = vmatpush1.msra.mxu0 0.0
  %1725 = vmatprep.subr.mxu0 0.0
  %1726 = vmatpush1.msra.mxu0 0.0
  %1727 = vmatprep.subr.mxu0 0.0
  %1728 = vmatpush1.msra.mxu0 0.0
  %1729 = vmatprep.subr.mxu0 0.0
  %1730 = vmatpush1.msra.mxu0 0.0
  %1731 = vmatprep.subr.mxu0 0.0
  %1732 = vmatpush1.msra.mxu0 0.0
  %1733 = vmatprep.subr.mxu0 0.0
  %1734 = vmatpush1.msra.mxu0 0.0
  %1735 = vmatprep.subr.mxu0 0.0
  %1736 = vmatpush1.msra.mxu0 0.0
  %1737 = vmatprep.subr.mxu0 0.0
  %1738 = vmatpush1.msra.mxu0 0.0
  %1739 = vmatprep.subr.mxu0 0.0
  %1740 = vmatpush1.msra.mxu0 0.0
  %1741 = vmatprep.subr.mxu0 0.0
  %1742 = vmatpush1.msra.mxu0 0.0
  %1743 = vmatprep.subr.mxu0 0.0
  %1744 = vmatpush1.msra.mxu0 0.0
  %1745 = vmatprep.subr.mxu0 0.0
  %1746 = vmatpush1.msra.mxu0 0.0
  %1747 = vmatprep.subr.mxu0 0.0
  %1748 = vmatpush1.msra.mxu0 0.0
  %1749 = vmatprep.subr.mxu0 0.0
  %1750 = vmatpush1.msra.mxu0 0.0
  %1751 = vmatprep.subr.mxu0 0.0
  %1752 = vmatpush1.msra.mxu0 0.0
  %1753 = vmatprep.mubr.f32.mxu0 0.0
  %1754 = vmatmul.mubr.f32.gmra.mrb[0].mxu0 %v1687
  %v1755 = vpop.f32.mrb[0].mxu0
  %v1756 = vadd.f32 0.0, %v1755
  %v1757 = vpop.f32.mrb[0].mxu0
  %1758 = vdwg.mxu0
  %v1760 = vsel %vm1217, %v1383, 0
  %1762 = vmatprep.subr.mxu0 0.0
  %1763 = vmatpush1.msra.mxu0 %v51
  %1764 = vmatprep.subr.mxu0 0.0
  %1765 = vmatpush1.msra.mxu0 0.0
  %1766 = vmatprep.subr.mxu0 0.0
  %1767 = vmatpush1.msra.mxu0 0.0
  %1768 = vmatprep.subr.mxu0 0.0
  %1769 = vmatpush1.msra.mxu0 0.0
  %1770 = vmatprep.subr.mxu0 0.0
  %1771 = vmatpush1.msra.mxu0 0.0
  %1772 = vmatprep.subr.mxu0 0.0
  %1773 = vmatpush1.msra.mxu0 0.0
  %1774 = vmatprep.subr.mxu0 0.0
  %1775 = vmatpush1.msra.mxu0 0.0
  %1776 = vmatprep.subr.mxu0 0.0
  %1777 = vmatpush1.msra.mxu0 0.0
  %1778 = vmatprep.subr.mxu0 0.0
  %1779 = vmatpush1.msra.mxu0 0.0
  %1780 = vmatprep.subr.mxu0 0.0
  %1781 = vmatpush1.msra.mxu0 0.0
  %1782 = vmatprep.subr.mxu0 0.0
  %1783 = vmatpush1.msra.mxu0 0.0
  %1784 = vmatprep.subr.mxu0 0.0
  %1785 = vmatpush1.msra.mxu0 0.0
  %1786 = vmatprep.subr.mxu0 0.0
  %1787 = vmatpush1.msra.mxu0 0.0
  %1788 = vmatprep.subr.mxu0 0.0
  %1789 = vmatpush1.msra.mxu0 0.0
  %1790 = vmatprep.subr.mxu0 0.0
  %1791 = vmatpush1.msra.mxu0 0.0
  %1792 = vmatprep.subr.mxu0 0.0
  %1793 = vmatpush1.msra.mxu0 0.0
  %1794 = vmatprep.subr.mxu0 0.0
  %1795 = vmatpush1.msra.mxu0 0.0
  %1796 = vmatprep.subr.mxu0 0.0
  %1797 = vmatpush1.msra.mxu0 0.0
  %1798 = vmatprep.subr.mxu0 0.0
  %1799 = vmatpush1.msra.mxu0 0.0
  %1800 = vmatprep.subr.mxu0 0.0
  %1801 = vmatpush1.msra.mxu0 0.0
  %1802 = vmatprep.subr.mxu0 0.0
  %1803 = vmatpush1.msra.mxu0 0.0
  %1804 = vmatprep.subr.mxu0 0.0
  %1805 = vmatpush1.msra.mxu0 0.0
  %1806 = vmatprep.subr.mxu0 0.0
  %1807 = vmatpush1.msra.mxu0 0.0
  %1808 = vmatprep.subr.mxu0 0.0
  %1809 = vmatpush1.msra.mxu0 0.0
  %1810 = vmatprep.subr.mxu0 0.0
  %1811 = vmatpush1.msra.mxu0 0.0
  %1812 = vmatprep.subr.mxu0 0.0
  %1813 = vmatpush1.msra.mxu0 0.0
  %1814 = vmatprep.subr.mxu0 0.0
  %1815 = vmatpush1.msra.mxu0 0.0
  %1816 = vmatprep.subr.mxu0 0.0
  %1817 = vmatpush1.msra.mxu0 0.0
  %1818 = vmatprep.subr.mxu0 0.0
  %1819 = vmatpush1.msra.mxu0 0.0
  %1820 = vmatprep.subr.mxu0 0.0
  %1821 = vmatpush1.msra.mxu0 0.0
  %1822 = vmatprep.subr.mxu0 0.0
  %1823 = vmatpush1.msra.mxu0 0.0
  %1824 = vmatprep.subr.mxu0 0.0
  %1825 = vmatpush1.msra.mxu0 0.0
  %1826 = vmatprep.mubr.f32.mxu0 0.0
  %1827 = vmatmul.mubr.f32.gmra.mrb[0].mxu0 %v1760
  %v1828 = vpop.f32.mrb[0].mxu0
  %v1829 = vadd.f32 0.0, %v1828
  %v1830 = vpop.f32.mrb[0].mxu0
  %1831 = vdwg.mxu0
  %v1833 = vsel %vm1217, %v1384, 0
  %1835 = vmatprep.subr.mxu0 0.0
  %1836 = vmatpush1.msra.mxu0 %v52
  %1837 = vmatprep.subr.mxu0 0.0
  %1838 = vmatpush1.msra.mxu0 0.0
  %1839 = vmatprep.subr.mxu0 0.0
  %1840 = vmatpush1.msra.mxu0 0.0
  %1841 = vmatprep.subr.mxu0 0.0
  %1842 = vmatpush1.msra.mxu0 0.0
  %1843 = vmatprep.subr.mxu0 0.0
  %1844 = vmatpush1.msra.mxu0 0.0
  %1845 = vmatprep.subr.mxu0 0.0
  %1846 = vmatpush1.msra.mxu0 0.0
  %1847 = vmatprep.subr.mxu0 0.0
  %1848 = vmatpush1.msra.mxu0 0.0
  %1849 = vmatprep.subr.mxu0 0.0
  %1850 = vmatpush1.msra.mxu0 0.0
  %1851 = vmatprep.subr.mxu0 0.0
  %1852 = vmatpush1.msra.mxu0 0.0
  %1853 = vmatprep.subr.mxu0 0.0
  %1854 = vmatpush1.msra.mxu0 0.0
  %1855 = vmatprep.subr.mxu0 0.0
  %1856 = vmatpush1.msra.mxu0 0.0
  %1857 = vmatprep.subr.mxu0 0.0
  %1858 = vmatpush1.msra.mxu0 0.0
  %1859 = vmatprep.subr.mxu0 0.0
  %1860 = vmatpush1.msra.mxu0 0.0
  %1861 = vmatprep.subr.mxu0 0.0
  %1862 = vmatpush1.msra.mxu0 0.0
  %1863 = vmatprep.subr.mxu0 0.0
  %1864 = vmatpush1.msra.mxu0 0.0
  %1865 = vmatprep.subr.mxu0 0.0
  %1866 = vmatpush1.msra.mxu0 0.0
  %1867 = vmatprep.subr.mxu0 0.0
  %1868 = vmatpush1.msra.mxu0 0.0
  %1869 = vmatprep.subr.mxu0 0.0
  %1870 = vmatpush1.msra.mxu0 0.0
  %1871 = vmatprep.subr.mxu0 0.0
  %1872 = vmatpush1.msra.mxu0 0.0
  %1873 = vmatprep.subr.mxu0 0.0
  %1874 = vmatpush1.msra.mxu0 0.0
  %1875 = vmatprep.subr.mxu0 0.0
  %1876 = vmatpush1.msra.mxu0 0.0
  %1877 = vmatprep.subr.mxu0 0.0
  %1878 = vmatpush1.msra.mxu0 0.0
  %1879 = vmatprep.subr.mxu0 0.0
  %1880 = vmatpush1.msra.mxu0 0.0
  %1881 = vmatprep.subr.mxu0 0.0
  %1882 = vmatpush1.msra.mxu0 0.0
  %1883 = vmatprep.subr.mxu0 0.0
  %1884 = vmatpush1.msra.mxu0 0.0
  %1885 = vmatprep.subr.mxu0 0.0
  %1886 = vmatpush1.msra.mxu0 0.0
  %1887 = vmatprep.subr.mxu0 0.0
  %1888 = vmatpush1.msra.mxu0 0.0
  %1889 = vmatprep.subr.mxu0 0.0
  %1890 = vmatpush1.msra.mxu0 0.0
  %1891 = vmatprep.subr.mxu0 0.0
  %1892 = vmatpush1.msra.mxu0 0.0
  %1893 = vmatprep.subr.mxu0 0.0
  %1894 = vmatpush1.msra.mxu0 0.0
  %1895 = vmatprep.subr.mxu0 0.0
  %1896 = vmatpush1.msra.mxu0 0.0
  %1897 = vmatprep.subr.mxu0 0.0
  %1898 = vmatpush1.msra.mxu0 0.0
  %1899 = vmatprep.mubr.f32.mxu0 0.0
  %1900 = vmatmul.mubr.f32.gmra.mrb[0].mxu0 %v1833
  %v1901 = vpop.f32.mrb[0].mxu0
  %v1902 = vadd.f32 0.0, %v1901
  %v1903 = vpop.f32.mrb[0].mxu0
  %1904 = vdwg.mxu0
  %v1906 = vsel %vm1217, %v1385, 0
  %1908 = vmatprep.subr.mxu0 0.0
  %1909 = vmatpush1.msra.mxu0 %v53
  %1910 = vmatprep.subr.mxu0 0.0
  %1911 = vmatpush1.msra.mxu0 0.0
  %1912 = vmatprep.subr.mxu0 0.0
  %1913 = vmatpush1.msra.mxu0 0.0
  %1914 = vmatprep.subr.mxu0 0.0
  %1915 = vmatpush1.msra.mxu0 0.0
  %1916 = vmatprep.subr.mxu0 0.0
  %1917 = vmatpush1.msra.mxu0 0.0
  %1918 = vmatprep.subr.mxu0 0.0
  %1919 = vmatpush1.msra.mxu0 0.0
  %1920 = vmatprep.subr.mxu0 0.0
  %1921 = vmatpush1.msra.mxu0 0.0
  %1922 = vmatprep.subr.mxu0 0.0
  %1923 = vmatpush1.msra.mxu0 0.0
  %1924 = vmatprep.subr.mxu0 0.0
  %1925 = vmatpush1.msra.mxu0 0.0
  %1926 = vmatprep.subr.mxu0 0.0
  %1927 = vmatpush1.msra.mxu0 0.0
  %1928 = vmatprep.subr.mxu0 0.0
  %1929 = vmatpush1.msra.mxu0 0.0
  %1930 = vmatprep.subr.mxu0 0.0
  %1931 = vmatpush1.msra.mxu0 0.0
  %1932 = vmatprep.subr.mxu0 0.0
  %1933 = vmatpush1.msra.mxu0 0.0
  %1934 = vmatprep.subr.mxu0 0.0
  %1935 = vmatpush1.msra.mxu0 0.0
  %1936 = vmatprep.subr.mxu0 0.0
  %1937 = vmatpush1.msra.mxu0 0.0
  %1938 = vmatprep.subr.mxu0 0.0
  %1939 = vmatpush1.msra.mxu0 0.0
  %1940 = vmatprep.subr.mxu0 0.0
  %1941 = vmatpush1.msra.mxu0 0.0
  %1942 = vmatprep.subr.mxu0 0.0
  %1943 = vmatpush1.msra.mxu0 0.0
  %1944 = vmatprep.subr.mxu0 0.0
  %1945 = vmatpush1.msra.mxu0 0.0
  %1946 = vmatprep.subr.mxu0 0.0
  %1947 = vmatpush1.msra.mxu0 0.0
  %1948 = vmatprep.subr.mxu0 0.0
  %1949 = vmatpush1.msra.mxu0 0.0
  %1950 = vmatprep.subr.mxu0 0.0
  %1951 = vmatpush1.msra.mxu0 0.0
  %1952 = vmatprep.subr.mxu0 0.0
  %1953 = vmatpush1.msra.mxu0 0.0
  %1954 = vmatprep.subr.mxu0 0.0
  %1955 = vmatpush1.msra.mxu0 0.0
  %1956 = vmatprep.subr.mxu0 0.0
  %1957 = vmatpush1.msra.mxu0 0.0
  %1958 = vmatprep.subr.mxu0 0.0
  %1959 = vmatpush1.msra.mxu0 0.0
  %1960 = vmatprep.subr.mxu0 0.0
  %1961 = vmatpush1.msra.mxu0 0.0
  %1962 = vmatprep.subr.mxu0 0.0
  %1963 = vmatpush1.msra.mxu0 0.0
  %1964 = vmatprep.subr.mxu0 0.0
  %1965 = vmatpush1.msra.mxu0 0.0
  %1966 = vmatprep.subr.mxu0 0.0
  %1967 = vmatpush1.msra.mxu0 0.0
  %1968 = vmatprep.subr.mxu0 0.0
  %1969 = vmatpush1.msra.mxu0 0.0
  %1970 = vmatprep.subr.mxu0 0.0
  %1971 = vmatpush1.msra.mxu0 0.0
  %1972 = vmatprep.mubr.f32.mxu0 0.0
  %1973 = vmatmul.mubr.f32.gmra.mrb[0].mxu0 %v1906
  %v1974 = vpop.f32.mrb[0].mxu0
  %v1975 = vadd.f32 0.0, %v1974
  %v1976 = vpop.f32.mrb[0].mxu0
  %1977 = vdwg.mxu0
  %v1979 = vsel %vm1217, %v1386, 0
  %1981 = vmatprep.subr.mxu0 0.0
  %1982 = vmatpush1.msra.mxu0 %v54
  %1983 = vmatprep.subr.mxu0 0.0
  %1984 = vmatpush1.msra.mxu0 0.0
  %1985 = vmatprep.subr.mxu0 0.0
  %1986 = vmatpush1.msra.mxu0 0.0
  %1987 = vmatprep.subr.mxu0 0.0
  %1988 = vmatpush1.msra.mxu0 0.0
  %1989 = vmatprep.subr.mxu0 0.0
  %1990 = vmatpush1.msra.mxu0 0.0
  %1991 = vmatprep.subr.mxu0 0.0
  %1992 = vmatpush1.msra.mxu0 0.0
  %1993 = vmatprep.subr.mxu0 0.0
  %1994 = vmatpush1.msra.mxu0 0.0
  %1995 = vmatprep.subr.mxu0 0.0
  %1996 = vmatpush1.msra.mxu0 0.0
  %1997 = vmatprep.subr.mxu0 0.0
  %1998 = vmatpush1.msra.mxu0 0.0
  %1999 = vmatprep.subr.mxu0 0.0
  %2000 = vmatpush1.msra.mxu0 0.0
  %2001 = vmatprep.subr.mxu0 0.0
  %2002 = vmatpush1.msra.mxu0 0.0
  %2003 = vmatprep.subr.mxu0 0.0
  %2004 = vmatpush1.msra.mxu0 0.0
  %2005 = vmatprep.subr.mxu0 0.0
  %2006 = vmatpush1.msra.mxu0 0.0
  %2007 = vmatprep.subr.mxu0 0.0
  %2008 = vmatpush1.msra.mxu0 0.0
  %2009 = vmatprep.subr.mxu0 0.0
  %2010 = vmatpush1.msra.mxu0 0.0
  %2011 = vmatprep.subr.mxu0 0.0
  %2012 = vmatpush1.msra.mxu0 0.0
  %2013 = vmatprep.subr.mxu0 0.0
  %2014 = vmatpush1.msra.mxu0 0.0
  %2015 = vmatprep.subr.mxu0 0.0
  %2016 = vmatpush1.msra.mxu0 0.0
  %2017 = vmatprep.subr.mxu0 0.0
  %2018 = vmatpush1.msra.mxu0 0.0
  %2019 = vmatprep.subr.mxu0 0.0
  %2020 = vmatpush1.msra.mxu0 0.0
  %2021 = vmatprep.subr.mxu0 0.0
  %2022 = vmatpush1.msra.mxu0 0.0
  %2023 = vmatprep.subr.mxu0 0.0
  %2024 = vmatpush1.msra.mxu0 0.0
  %2025 = vmatprep.subr.mxu0 0.0
  %2026 = vmatpush1.msra.mxu0 0.0
  %2027 = vmatprep.subr.mxu0 0.0
  %2028 = vmatpush1.msra.mxu0 0.0
  %2029 = vmatprep.subr.mxu0 0.0
  %2030 = vmatpush1.msra.mxu0 0.0
  %2031 = vmatprep.subr.mxu0 0.0
  %2032 = vmatpush1.msra.mxu0 0.0
  %2033 = vmatprep.subr.mxu0 0.0
  %2034 = vmatpush1.msra.mxu0 0.0
  %2035 = vmatprep.subr.mxu0 0.0
  %2036 = vmatpush1.msra.mxu0 0.0
  %2037 = vmatprep.subr.mxu0 0.0
  %2038 = vmatpush1.msra.mxu0 0.0
  %2039 = vmatprep.subr.mxu0 0.0
  %2040 = vmatpush1.msra.mxu0 0.0
  %2041 = vmatprep.subr.mxu0 0.0
  %2042 = vmatpush1.msra.mxu0 0.0
  %2043 = vmatprep.subr.mxu0 0.0
  %2044 = vmatpush1.msra.mxu0 0.0
  %2045 = vmatprep.mubr.f32.mxu0 0.0
  %2046 = vmatmul.mubr.f32.gmra.mrb[0].mxu0 %v1979
  %v2047 = vpop.f32.mrb[0].mxu0
  %v2048 = vadd.f32 0.0, %v2047
  %v2049 = vpop.f32.mrb[0].mxu0
  %2050 = vdwg.mxu0
  %v2052 = vsel %vm1217, %v1387, 0
  %2054 = vmatprep.subr.mxu0 0.0
  %2055 = vmatpush1.msra.mxu0 %v55
  %2056 = vmatprep.subr.mxu0 0.0
  %2057 = vmatpush1.msra.mxu0 0.0
  %2058 = vmatprep.subr.mxu0 0.0
  %2059 = vmatpush1.msra.mxu0 0.0
  %2060 = vmatprep.subr.mxu0 0.0
  %2061 = vmatpush1.msra.mxu0 0.0
  %2062 = vmatprep.subr.mxu0 0.0
  %2063 = vmatpush1.msra.mxu0 0.0
  %2064 = vmatprep.subr.mxu0 0.0
  %2065 = vmatpush1.msra.mxu0 0.0
  %2066 = vmatprep.subr.mxu0 0.0
  %2067 = vmatpush1.msra.mxu0 0.0
  %2068 = vmatprep.subr.mxu0 0.0
  %2069 = vmatpush1.msra.mxu0 0.0
  %2070 = vmatprep.subr.mxu0 0.0
  %2071 = vmatpush1.msra.mxu0 0.0
  %2072 = vmatprep.subr.mxu0 0.0
  %2073 = vmatpush1.msra.mxu0 0.0
  %2074 = vmatprep.subr.mxu0 0.0
  %2075 = vmatpush1.msra.mxu0 0.0
  %2076 = vmatprep.subr.mxu0 0.0
  %2077 = vmatpush1.msra.mxu0 0.0
  %2078 = vmatprep.subr.mxu0 0.0
  %2079 = vmatpush1.msra.mxu0 0.0
  %2080 = vmatprep.subr.mxu0 0.0
  %2081 = vmatpush1.msra.mxu0 0.0
  %2082 = vmatprep.subr.mxu0 0.0
  %2083 = vmatpush1.msra.mxu0 0.0
  %2084 = vmatprep.subr.mxu0 0.0
  %2085 = vmatpush1.msra.mxu0 0.0
  %2086 = vmatprep.subr.mxu0 0.0
  %2087 = vmatpush1.msra.mxu0 0.0
  %2088 = vmatprep.subr.mxu0 0.0
  %2089 = vmatpush1.msra.mxu0 0.0
  %2090 = vmatprep.subr.mxu0 0.0
  %2091 = vmatpush1.msra.mxu0 0.0
  %2092 = vmatprep.subr.mxu0 0.0
  %2093 = vmatpush1.msra.mxu0 0.0
  %2094 = vmatprep.subr.mxu0 0.0
  %2095 = vmatpush1.msra.mxu0 0.0
  %2096 = vmatprep.subr.mxu0 0.0
  %2097 = vmatpush1.msra.mxu0 0.0
  %2098 = vmatprep.subr.mxu0 0.0
  %2099 = vmatpush1.msra.mxu0 0.0
  %2100 = vmatprep.subr.mxu0 0.0
  %2101 = vmatpush1.msra.mxu0 0.0
  %2102 = vmatprep.subr.mxu0 0.0
  %2103 = vmatpush1.msra.mxu0 0.0
  %2104 = vmatprep.subr.mxu0 0.0
  %2105 = vmatpush1.msra.mxu0 0.0
  %2106 = vmatprep.subr.mxu0 0.0
  %2107 = vmatpush1.msra.mxu0 0.0
  %2108 = vmatprep.subr.mxu0 0.0
  %2109 = vmatpush1.msra.mxu0 0.0
  %2110 = vmatprep.subr.mxu0 0.0
  %2111 = vmatpush1.msra.mxu0 0.0
  %2112 = vmatprep.subr.mxu0 0.0
  %2113 = vmatpush1.msra.mxu0 0.0
  %2114 = vmatprep.subr.mxu0 0.0
  %2115 = vmatpush1.msra.mxu0 0.0
  %2116 = vmatprep.subr.mxu0 0.0
  %2117 = vmatpush1.msra.mxu0 0.0
  %2118 = vmatprep.mubr.f32.mxu0 0.0
  %2119 = vmatmul.mubr.f32.gmra.mrb[0].mxu0 %v2052
  %v2120 = vpop.f32.mrb[0].mxu0
  %v2121 = vadd.f32 0.0, %v2120
  %v2122 = vpop.f32.mrb[0].mxu0
  %2123 = vdwg.mxu0
  %v2125 = vsel %vm1217, %v1388, 0
  %2127 = vmatprep.subr.mxu0 0.0
  %2128 = vmatpush1.msra.mxu0 %v56
  %2129 = vmatprep.subr.mxu0 0.0
  %2130 = vmatpush1.msra.mxu0 0.0
  %2131 = vmatprep.subr.mxu0 0.0
  %2132 = vmatpush1.msra.mxu0 0.0
  %2133 = vmatprep.subr.mxu0 0.0
  %2134 = vmatpush1.msra.mxu0 0.0
  %2135 = vmatprep.subr.mxu0 0.0
  %2136 = vmatpush1.msra.mxu0 0.0
  %2137 = vmatprep.subr.mxu0 0.0
  %2138 = vmatpush1.msra.mxu0 0.0
  %2139 = vmatprep.subr.mxu0 0.0
  %2140 = vmatpush1.msra.mxu0 0.0
  %2141 = vmatprep.subr.mxu0 0.0
  %2142 = vmatpush1.msra.mxu0 0.0
  %2143 = vmatprep.subr.mxu0 0.0
  %2144 = vmatpush1.msra.mxu0 0.0
  %2145 = vmatprep.subr.mxu0 0.0
  %2146 = vmatpush1.msra.mxu0 0.0
  %2147 = vmatprep.subr.mxu0 0.0
  %2148 = vmatpush1.msra.mxu0 0.0
  %2149 = vmatprep.subr.mxu0 0.0
  %2150 = vmatpush1.msra.mxu0 0.0
  %2151 = vmatprep.subr.mxu0 0.0
  %2152 = vmatpush1.msra.mxu0 0.0
  %2153 = vmatprep.subr.mxu0 0.0
  %2154 = vmatpush1.msra.mxu0 0.0
  %2155 = vmatprep.subr.mxu0 0.0
  %2156 = vmatpush1.msra.mxu0 0.0
  %2157 = vmatprep.subr.mxu0 0.0
  %2158 = vmatpush1.msra.mxu0 0.0
  %2159 = vmatprep.subr.mxu0 0.0
  %2160 = vmatpush1.msra.mxu0 0.0
  %2161 = vmatprep.subr.mxu0 0.0
  %2162 = vmatpush1.msra.mxu0 0.0
  %2163 = vmatprep.subr.mxu0 0.0
  %2164 = vmatpush1.msra.mxu0 0.0
  %2165 = vmatprep.subr.mxu0 0.0
  %2166 = vmatpush1.msra.mxu0 0.0
  %2167 = vmatprep.subr.mxu0 0.0
  %2168 = vmatpush1.msra.mxu0 0.0
  %2169 = vmatprep.subr.mxu0 0.0
  %2170 = vmatpush1.msra.mxu0 0.0
  %2171 = vmatprep.subr.mxu0 0.0
  %2172 = vmatpush1.msra.mxu0 0.0
  %2173 = vmatprep.subr.mxu0 0.0
  %2174 = vmatpush1.msra.mxu0 0.0
  %2175 = vmatprep.subr.mxu0 0.0
  %2176 = vmatpush1.msra.mxu0 0.0
  %2177 = vmatprep.subr.mxu0 0.0
  %2178 = vmatpush1.msra.mxu0 0.0
  %2179 = vmatprep.subr.mxu0 0.0
  %2180 = vmatpush1.msra.mxu0 0.0
  %2181 = vmatprep.subr.mxu0 0.0
  %2182 = vmatpush1.msra.mxu0 0.0
  %2183 = vmatprep.subr.mxu0 0.0
  %2184 = vmatpush1.msra.mxu0 0.0
  %2185 = vmatprep.subr.mxu0 0.0
  %2186 = vmatpush1.msra.mxu0 0.0
  %2187 = vmatprep.subr.mxu0 0.0
  %2188 = vmatpush1.msra.mxu0 0.0
  %2189 = vmatprep.subr.mxu0 0.0
  %2190 = vmatpush1.msra.mxu0 0.0
  %2191 = vmatprep.mubr.f32.mxu0 0.0
  %2192 = vmatmul.mubr.f32.gmra.mrb[0].mxu0 %v2125
  %v2193 = vpop.f32.mrb[0].mxu0
  %v2194 = vadd.f32 0.0, %v2193
  %v2195 = vpop.f32.mrb[0].mxu0
  %2196 = vdwg.mxu0
  %v2198 = vsel %vm1217, %v1389, 0
  %2200 = vmatprep.subr.mxu0 0.0
  %2201 = vmatpush1.msra.mxu0 %v57
  %2202 = vmatprep.subr.mxu0 0.0
  %2203 = vmatpush1.msra.mxu0 0.0
  %2204 = vmatprep.subr.mxu0 0.0
  %2205 = vmatpush1.msra.mxu0 0.0
  %2206 = vmatprep.subr.mxu0 0.0
  %2207 = vmatpush1.msra.mxu0 0.0
  %2208 = vmatprep.subr.mxu0 0.0
  %2209 = vmatpush1.msra.mxu0 0.0
  %2210 = vmatprep.subr.mxu0 0.0
  %2211 = vmatpush1.msra.mxu0 0.0
  %2212 = vmatprep.subr.mxu0 0.0
  %2213 = vmatpush1.msra.mxu0 0.0
  %2214 = vmatprep.subr.mxu0 0.0
  %2215 = vmatpush1.msra.mxu0 0.0
  %2216 = vmatprep.subr.mxu0 0.0
  %2217 = vmatpush1.msra.mxu0 0.0
  %2218 = vmatprep.subr.mxu0 0.0
  %2219 = vmatpush1.msra.mxu0 0.0
  %2220 = vmatprep.subr.mxu0 0.0
  %2221 = vmatpush1.msra.mxu0 0.0
  %2222 = vmatprep.subr.mxu0 0.0
  %2223 = vmatpush1.msra.mxu0 0.0
  %2224 = vmatprep.subr.mxu0 0.0
  %2225 = vmatpush1.msra.mxu0 0.0
  %2226 = vmatprep.subr.mxu0 0.0
  %2227 = vmatpush1.msra.mxu0 0.0
  %2228 = vmatprep.subr.mxu0 0.0
  %2229 = vmatpush1.msra.mxu0 0.0
  %2230 = vmatprep.subr.mxu0 0.0
  %2231 = vmatpush1.msra.mxu0 0.0
  %2232 = vmatprep.subr.mxu0 0.0
  %2233 = vmatpush1.msra.mxu0 0.0
  %2234 = vmatprep.subr.mxu0 0.0
  %2235 = vmatpush1.msra.mxu0 0.0
  %2236 = vmatprep.subr.mxu0 0.0
  %2237 = vmatpush1.msra.mxu0 0.0
  %2238 = vmatprep.subr.mxu0 0.0
  %2239 = vmatpush1.msra.mxu0 0.0
  %2240 = vmatprep.subr.mxu0 0.0
  %2241 = vmatpush1.msra.mxu0 0.0
  %2242 = vmatprep.subr.mxu0 0.0
  %2243 = vmatpush1.msra.mxu0 0.0
  %2244 = vmatprep.subr.mxu0 0.0
  %2245 = vmatpush1.msra.mxu0 0.0
  %2246 = vmatprep.subr.mxu0 0.0
  %2247 = vmatpush1.msra.mxu0 0.0
  %2248 = vmatprep.subr.mxu0 0.0
  %2249 = vmatpush1.msra.mxu0 0.0
  %2250 = vmatprep.subr.mxu0 0.0
  %2251 = vmatpush1.msra.mxu0 0.0
  %2252 = vmatprep.subr.mxu0 0.0
  %2253 = vmatpush1.msra.mxu0 0.0
  %2254 = vmatprep.subr.mxu0 0.0
  %2255 = vmatpush1.msra.mxu0 0.0
  %2256 = vmatprep.subr.mxu0 0.0
  %2257 = vmatpush1.msra.mxu0 0.0
  %2258 = vmatprep.subr.mxu0 0.0
  %2259 = vmatpush1.msra.mxu0 0.0
  %2260 = vmatprep.subr.mxu0 0.0
  %2261 = vmatpush1.msra.mxu0 0.0
  %2262 = vmatprep.subr.mxu0 0.0
  %2263 = vmatpush1.msra.mxu0 0.0
  %2264 = vmatprep.mubr.f32.mxu0 0.0
  %2265 = vmatmul.mubr.f32.gmra.mrb[0].mxu0 %v2198
  %v2266 = vpop.f32.mrb[0].mxu0
  %v2267 = vadd.f32 0.0, %v2266
  %v2268 = vpop.f32.mrb[0].mxu0
  %2269 = vdwg.mxu0
  %v2271 = vsel %vm1217, %v1390, 0
  %2273 = vmatprep.subr.mxu0 0.0
  %2274 = vmatpush1.msra.mxu0 %v58
  %2275 = vmatprep.subr.mxu0 0.0
  %2276 = vmatpush1.msra.mxu0 0.0
  %2277 = vmatprep.subr.mxu0 0.0
  %2278 = vmatpush1.msra.mxu0 0.0
  %2279 = vmatprep.subr.mxu0 0.0
  %2280 = vmatpush1.msra.mxu0 0.0
  %2281 = vmatprep.subr.mxu0 0.0
  %2282 = vmatpush1.msra.mxu0 0.0
  %2283 = vmatprep.subr.mxu0 0.0
  %2284 = vmatpush1.msra.mxu0 0.0
  %2285 = vmatprep.subr.mxu0 0.0
  %2286 = vmatpush1.msra.mxu0 0.0
  %2287 = vmatprep.subr.mxu0 0.0
  %2288 = vmatpush1.msra.mxu0 0.0
  %2289 = vmatprep.subr.mxu0 0.0
  %2290 = vmatpush1.msra.mxu0 0.0
  %2291 = vmatprep.subr.mxu0 0.0
  %2292 = vmatpush1.msra.mxu0 0.0
  %2293 = vmatprep.subr.mxu0 0.0
  %2294 = vmatpush1.msra.mxu0 0.0
  %2295 = vmatprep.subr.mxu0 0.0
  %2296 = vmatpush1.msra.mxu0 0.0
  %2297 = vmatprep.subr.mxu0 0.0
  %2298 = vmatpush1.msra.mxu0 0.0
  %2299 = vmatprep.subr.mxu0 0.0
  %2300 = vmatpush1.msra.mxu0 0.0
  %2301 = vmatprep.subr.mxu0 0.0
  %2302 = vmatpush1.msra.mxu0 0.0
  %2303 = vmatprep.subr.mxu0 0.0
  %2304 = vmatpush1.msra.mxu0 0.0
  %2305 = vmatprep.subr.mxu0 0.0
  %2306 = vmatpush1.msra.mxu0 0.0
  %2307 = vmatprep.subr.mxu0 0.0
  %2308 = vmatpush1.msra.mxu0 0.0
  %2309 = vmatprep.subr.mxu0 0.0
  %2310 = vmatpush1.msra.mxu0 0.0
  %2311 = vmatprep.subr.mxu0 0.0
  %2312 = vmatpush1.msra.mxu0 0.0
  %2313 = vmatprep.subr.mxu0 0.0
  %2314 = vmatpush1.msra.mxu0 0.0
  %2315 = vmatprep.subr.mxu0 0.0
  %2316 = vmatpush1.msra.mxu0 0.0
  %2317 = vmatprep.subr.mxu0 0.0
  %2318 = vmatpush1.msra.mxu0 0.0
  %2319 = vmatprep.subr.mxu0 0.0
  %2320 = vmatpush1.msra.mxu0 0.0
  %2321 = vmatprep.subr.mxu0 0.0
  %2322 = vmatpush1.msra.mxu0 0.0
  %2323 = vmatprep.subr.mxu0 0.0
  %2324 = vmatpush1.msra.mxu0 0.0
  %2325 = vmatprep.subr.mxu0 0.0
  %2326 = vmatpush1.msra.mxu0 0.0
  %2327 = vmatprep.subr.mxu0 0.0
  %2328 = vmatpush1.msra.mxu0 0.0
  %2329 = vmatprep.subr.mxu0 0.0
  %2330 = vmatpush1.msra.mxu0 0.0
  %2331 = vmatprep.subr.mxu0 0.0
  %2332 = vmatpush1.msra.mxu0 0.0
  %2333 = vmatprep.subr.mxu0 0.0
  %2334 = vmatpush1.msra.mxu0 0.0
  %2335 = vmatprep.subr.mxu0 0.0
  %2336 = vmatpush1.msra.mxu0 0.0
  %2337 = vmatprep.mubr.f32.mxu0 0.0
  %2338 = vmatmul.mubr.f32.gmra.mrb[0].mxu0 %v2271
  %v2339 = vpop.f32.mrb[0].mxu0
  %v2340 = vadd.f32 0.0, %v2339
  %v2341 = vpop.f32.mrb[0].mxu0
  %2342 = vdwg.mxu0
  %v2344 = vsel %vm1217, %v1391, 0
  %2346 = vmatprep.subr.mxu0 0.0
  %2347 = vmatpush1.msra.mxu0 %v59
  %2348 = vmatprep.subr.mxu0 0.0
  %2349 = vmatpush1.msra.mxu0 0.0
  %2350 = vmatprep.subr.mxu0 0.0
  %2351 = vmatpush1.msra.mxu0 0.0
  %2352 = vmatprep.subr.mxu0 0.0
  %2353 = vmatpush1.msra.mxu0 0.0
  %2354 = vmatprep.subr.mxu0 0.0
  %2355 = vmatpush1.msra.mxu0 0.0
  %2356 = vmatprep.subr.mxu0 0.0
  %2357 = vmatpush1.msra.mxu0 0.0
  %2358 = vmatprep.subr.mxu0 0.0
  %2359 = vmatpush1.msra.mxu0 0.0
  %2360 = vmatprep.subr.mxu0 0.0
  %2361 = vmatpush1.msra.mxu0 0.0
  %2362 = vmatprep.subr.mxu0 0.0
  %2363 = vmatpush1.msra.mxu0 0.0
  %2364 = vmatprep.subr.mxu0 0.0
  %2365 = vmatpush1.msra.mxu0 0.0
  %2366 = vmatprep.subr.mxu0 0.0
  %2367 = vmatpush1.msra.mxu0 0.0
  %2368 = vmatprep.subr.mxu0 0.0
  %2369 = vmatpush1.msra.mxu0 0.0
  %2370 = vmatprep.subr.mxu0 0.0
  %2371 = vmatpush1.msra.mxu0 0.0
  %2372 = vmatprep.subr.mxu0 0.0
  %2373 = vmatpush1.msra.mxu0 0.0
  %2374 = vmatprep.subr.mxu0 0.0
  %2375 = vmatpush1.msra.mxu0 0.0
  %2376 = vmatprep.subr.mxu0 0.0
  %2377 = vmatpush1.msra.mxu0 0.0
  %2378 = vmatprep.subr.mxu0 0.0
  %2379 = vmatpush1.msra.mxu0 0.0
  %2380 = vmatprep.subr.mxu0 0.0
  %2381 = vmatpush1.msra.mxu0 0.0
  %2382 = vmatprep.subr.mxu0 0.0
  %2383 = vmatpush1.msra.mxu0 0.0
  %2384 = vmatprep.subr.mxu0 0.0
  %2385 = vmatpush1.msra.mxu0 0.0
  %2386 = vmatprep.subr.mxu0 0.0
  %2387 = vmatpush1.msra.mxu0 0.0
  %2388 = vmatprep.subr.mxu0 0.0
  %2389 = vmatpush1.msra.mxu0 0.0
  %2390 = vmatprep.subr.mxu0 0.0
  %2391 = vmatpush1.msra.mxu0 0.0
  %2392 = vmatprep.subr.mxu0 0.0
  %2393 = vmatpush1.msra.mxu0 0.0
  %2394 = vmatprep.subr.mxu0 0.0
  %2395 = vmatpush1.msra.mxu0 0.0
  %2396 = vmatprep.subr.mxu0 0.0
  %2397 = vmatpush1.msra.mxu0 0.0
  %2398 = vmatprep.subr.mxu0 0.0
  %2399 = vmatpush1.msra.mxu0 0.0
  %2400 = vmatprep.subr.mxu0 0.0
  %2401 = vmatpush1.msra.mxu0 0.0
  %2402 = vmatprep.subr.mxu0 0.0
  %2403 = vmatpush1.msra.mxu0 0.0
  %2404 = vmatprep.subr.mxu0 0.0
  %2405 = vmatpush1.msra.mxu0 0.0
  %2406 = vmatprep.subr.mxu0 0.0
  %2407 = vmatpush1.msra.mxu0 0.0
  %2408 = vmatprep.subr.mxu0 0.0
  %2409 = vmatpush1.msra.mxu0 0.0
  %2410 = vmatprep.mubr.f32.mxu0 0.0
  %2411 = vmatmul.mubr.f32.gmra.mrb[0].mxu0 %v2344
  %v2412 = vpop.f32.mrb[0].mxu0
  %v2413 = vadd.f32 0.0, %v2412
  %v2414 = vpop.f32.mrb[0].mxu0
  %2415 = vdwg.mxu0
  %v2417 = vsel %vm1217, %v1392, 0
  %2419 = vmatprep.subr.mxu0 0.0
  %2420 = vmatpush1.msra.mxu0 %v60
  %2421 = vmatprep.subr.mxu0 0.0
  %2422 = vmatpush1.msra.mxu0 0.0
  %2423 = vmatprep.subr.mxu0 0.0
  %2424 = vmatpush1.msra.mxu0 0.0
  %2425 = vmatprep.subr.mxu0 0.0
  %2426 = vmatpush1.msra.mxu0 0.0
  %2427 = vmatprep.subr.mxu0 0.0
  %2428 = vmatpush1.msra.mxu0 0.0
  %2429 = vmatprep.subr.mxu0 0.0
  %2430 = vmatpush1.msra.mxu0 0.0
  %2431 = vmatprep.subr.mxu0 0.0
  %2432 = vmatpush1.msra.mxu0 0.0
  %2433 = vmatprep.subr.mxu0 0.0
  %2434 = vmatpush1.msra.mxu0 0.0
  %2435 = vmatprep.subr.mxu0 0.0
  %2436 = vmatpush1.msra.mxu0 0.0
  %2437 = vmatprep.subr.mxu0 0.0
  %2438 = vmatpush1.msra.mxu0 0.0
  %2439 = vmatprep.subr.mxu0 0.0
  %2440 = vmatpush1.msra.mxu0 0.0
  %2441 = vmatprep.subr.mxu0 0.0
  %2442 = vmatpush1.msra.mxu0 0.0
  %2443 = vmatprep.subr.mxu0 0.0
  %2444 = vmatpush1.msra.mxu0 0.0
  %2445 = vmatprep.subr.mxu0 0.0
  %2446 = vmatpush1.msra.mxu0 0.0
  %2447 = vmatprep.subr.mxu0 0.0
  %2448 = vmatpush1.msra.mxu0 0.0
  %2449 = vmatprep.subr.mxu0 0.0
  %2450 = vmatpush1.msra.mxu0 0.0
  %2451 = vmatprep.subr.mxu0 0.0
  %2452 = vmatpush1.msra.mxu0 0.0
  %2453 = vmatprep.subr.mxu0 0.0
  %2454 = vmatpush1.msra.mxu0 0.0
  %2455 = vmatprep.subr.mxu0 0.0
  %2456 = vmatpush1.msra.mxu0 0.0
  %2457 = vmatprep.subr.mxu0 0.0
  %2458 = vmatpush1.msra.mxu0 0.0
  %2459 = vmatprep.subr.mxu0 0.0
  %2460 = vmatpush1.msra.mxu0 0.0
  %2461 = vmatprep.subr.mxu0 0.0
  %2462 = vmatpush1.msra.mxu0 0.0
  %2463 = vmatprep.subr.mxu0 0.0
  %2464 = vmatpush1.msra.mxu0 0.0
  %2465 = vmatprep.subr.mxu0 0.0
  %2466 = vmatpush1.msra.mxu0 0.0
  %2467 = vmatprep.subr.mxu0 0.0
  %2468 = vmatpush1.msra.mxu0 0.0
  %2469 = vmatprep.subr.mxu0 0.0
  %2470 = vmatpush1.msra.mxu0 0.0
  %2471 = vmatprep.subr.mxu0 0.0
  %2472 = vmatpush1.msra.mxu0 0.0
  %2473 = vmatprep.subr.mxu0 0.0
  %2474 = vmatpush1.msra.mxu0 0.0
  %2475 = vmatprep.subr.mxu0 0.0
  %2476 = vmatpush1.msra.mxu0 0.0
  %2477 = vmatprep.subr.mxu0 0.0
  %2478 = vmatpush1.msra.mxu0 0.0
  %2479 = vmatprep.subr.mxu0 0.0
  %2480 = vmatpush1.msra.mxu0 0.0
  %2481 = vmatprep.subr.mxu0 0.0
  %2482 = vmatpush1.msra.mxu0 0.0
  %2483 = vmatprep.mubr.f32.mxu0 0.0
  %2484 = vmatmul.mubr.f32.gmra.mrb[0].mxu0 %v2417
  %v2485 = vpop.f32.mrb[0].mxu0
  %v2486 = vadd.f32 0.0, %v2485
  %v2487 = vpop.f32.mrb[0].mxu0
  %2488 = vdwg.mxu0
  %v2490 = vsel %vm1217, %v1393, 0
  %2492 = vmatprep.subr.mxu0 0.0
  %2493 = vmatpush1.msra.mxu0 %v61
  %2494 = vmatprep.subr.mxu0 0.0
  %2495 = vmatpush1.msra.mxu0 0.0
  %2496 = vmatprep.subr.mxu0 0.0
  %2497 = vmatpush1.msra.mxu0 0.0
  %2498 = vmatprep.subr.mxu0 0.0
  %2499 = vmatpush1.msra.mxu0 0.0
  %2500 = vmatprep.subr.mxu0 0.0
  %2501 = vmatpush1.msra.mxu0 0.0
  %2502 = vmatprep.subr.mxu0 0.0
  %2503 = vmatpush1.msra.mxu0 0.0
  %2504 = vmatprep.subr.mxu0 0.0
  %2505 = vmatpush1.msra.mxu0 0.0
  %2506 = vmatprep.subr.mxu0 0.0
  %2507 = vmatpush1.msra.mxu0 0.0
  %2508 = vmatprep.subr.mxu0 0.0
  %2509 = vmatpush1.msra.mxu0 0.0
  %2510 = vmatprep.subr.mxu0 0.0
  %2511 = vmatpush1.msra.mxu0 0.0
  %2512 = vmatprep.subr.mxu0 0.0
  %2513 = vmatpush1.msra.mxu0 0.0
  %2514 = vmatprep.subr.mxu0 0.0
  %2515 = vmatpush1.msra.mxu0 0.0
  %2516 = vmatprep.subr.mxu0 0.0
  %2517 = vmatpush1.msra.mxu0 0.0
  %2518 = vmatprep.subr.mxu0 0.0
  %2519 = vmatpush1.msra.mxu0 0.0
  %2520 = vmatprep.subr.mxu0 0.0
  %2521 = vmatpush1.msra.mxu0 0.0
  %2522 = vmatprep.subr.mxu0 0.0
  %2523 = vmatpush1.msra.mxu0 0.0
  %2524 = vmatprep.subr.mxu0 0.0
  %2525 = vmatpush1.msra.mxu0 0.0
  %2526 = vmatprep.subr.mxu0 0.0
  %2527 = vmatpush1.msra.mxu0 0.0
  %2528 = vmatprep.subr.mxu0 0.0
  %2529 = vmatpush1.msra.mxu0 0.0
  %2530 = vmatprep.subr.mxu0 0.0
  %2531 = vmatpush1.msra.mxu0 0.0
  %2532 = vmatprep.subr.mxu0 0.0
  %2533 = vmatpush1.msra.mxu0 0.0
  %2534 = vmatprep.subr.mxu0 0.0
  %2535 = vmatpush1.msra.mxu0 0.0
  %2536 = vmatprep.subr.mxu0 0.0
  %2537 = vmatpush1.msra.mxu0 0.0
  %2538 = vmatprep.subr.mxu0 0.0
  %2539 = vmatpush1.msra.mxu0 0.0
  %2540 = vmatprep.subr.mxu0 0.0
  %2541 = vmatpush1.msra.mxu0 0.0
  %2542 = vmatprep.subr.mxu0 0.0
  %2543 = vmatpush1.msra.mxu0 0.0
  %2544 = vmatprep.subr.mxu0 0.0
  %2545 = vmatpush1.msra.mxu0 0.0
  %2546 = vmatprep.subr.mxu0 0.0
  %2547 = vmatpush1.msra.mxu0 0.0
  %2548 = vmatprep.subr.mxu0 0.0
  %2549 = vmatpush1.msra.mxu0 0.0
  %2550 = vmatprep.subr.mxu0 0.0
  %2551 = vmatpush1.msra.mxu0 0.0
  %2552 = vmatprep.subr.mxu0 0.0
  %2553 = vmatpush1.msra.mxu0 0.0
  %2554 = vmatprep.subr.mxu0 0.0
  %2555 = vmatpush1.msra.mxu0 0.0
  %2556 = vmatprep.mubr.f32.mxu0 0.0
  %2557 = vmatmul.mubr.f32.gmra.mrb[0].mxu0 %v2490
  %v2558 = vpop.f32.mrb[0].mxu0
  %v2559 = vadd.f32 0.0, %v2558
  %v2560 = vpop.f32.mrb[0].mxu0
  %2561 = vdwg.mxu0
  %2562 = vst [vmem:[%s3] sm:$0xff] %v1464
  %2563 = vst [vmem:[%s3 + $0x8] sm:$0xff] %v1537
  %2564 = vst [vmem:[%s3 + $0x10] sm:$0xff] %v1610
  %2565 = vst [vmem:[%s3 + $0x18] sm:$0xff] %v1683
  %2566 = vst [vmem:[%s3 + $0x20] sm:$0xff] %v1756
  %2567 = vst [vmem:[%s3 + $0x28] sm:$0xff] %v1829
  %2568 = vst [vmem:[%s3 + $0x30] sm:$0xff] %v1902
  %2569 = vst [vmem:[%s3 + $0x38] sm:$0xff] %v1975
  %2570 = vst [vmem:[%s3 + $0x40] sm:$0xff] %v2048
  %2571 = vst [vmem:[%s3 + $0x48] sm:$0xff] %v2121
  %2572 = vst [vmem:[%s3 + $0x50] sm:$0xff] %v2194
  %2573 = vst [vmem:[%s3 + $0x58] sm:$0xff] %v2267
  %2574 = vst [vmem:[%s3 + $0x60] sm:$0xff] %v2340
  %2575 = vst [vmem:[%s3 + $0x68] sm:$0xff] %v2413
  %2576 = vst [vmem:[%s3 + $0x70] sm:$0xff] %v2486
  %2577 = vst [vmem:[%s3 + $0x78] sm:$0xff] %v2559
  // Predicated region
  $region14: #{_lambda_.11} parent=0 // pred_check
    _
  $region15: #{_lambda_.11} parent=0 // pred_check_branch
    %2579 = sbr.rel (0) target = $region17
  $region16: #{_lambda_.11} parent=0 // pred_region
    _
  $region17: #{_lambda_.11} parent=0 // pred_fallthru
    _
  // Predicated region
  $region18: #{_lambda_.11} parent=0 // pred_check
    _
  $region19: #{_lambda_.11} parent=0 // pred_check_branch
    %2581 = sbr.rel (0) target = $region21
  $region20: #{_lambda_.11} parent=0 // pred_region
    _
  $region21: #{_lambda_.11} parent=0 // pred_fallthru
    _

</llo_original>
